<compile_context>
chip_gen: v6e
topology: v6e:2x2x1
jax: 0.10.0
libtpu: 0.0.40
codegen_flags: <defaults>
</compile_context>

<pallas_src>
import functools

import jax
import jax.numpy as jnp
from jax.experimental import pallas as pl
from jax.experimental.pallas import tpu as pltpu


def _cbam_kernel(x_ref, wfct_ref, bfc_ref, wsa_ref, o_ref,
                 pad0_ref, pad1_ref, sa_ref, *, B, C, H, W, K, P):
    """Fused CBAM forward for a block of B samples; x_ref block = (B, C, H*W)."""
    HW = H * W
    KK = K * K

    # ---------------- Channel attention ----------------
    # Global average pool over H*W (cross-lane reduce on dense vregs).
    pooled = jnp.sum(x_ref[...].astype(jnp.float32), axis=2) * (1.0 / HW)     # (B, C)

    wfct = wfct_ref[...].astype(jnp.float32)                                  # (C_in, C_out)
    if C <= 32:
        # Tiny FC: keep it off the MXU (broadcast-mul + reduce on the VPU).
        logits = jnp.sum(pooled[:, :, None] * wfct[None, :, :], axis=1)       # (B, C)
    else:
        # Batched over B samples -> one MXU matmul per grid step.
        logits = jnp.dot(pooled, wfct, preferred_element_type=jnp.float32)    # (B, C)
    ca = jax.nn.sigmoid(logits + bfc_ref[...].astype(jnp.float32))            # (B, C)

    # ------- Channel-wise mean / max of x*ca (x1 never materialized) -------
    if C <= 64:
        t = x_ref[:, 0, :].astype(jnp.float32) * ca[:, 0:1]                   # (B, HW)
        mean_acc = t
        max_acc = t
        for c in range(1, C):
            t = x_ref[:, c, :].astype(jnp.float32) * ca[:, c:c + 1]
            mean_acc = mean_acc + t
            max_acc = jnp.maximum(max_acc, t)
    else:
        # Large-C fallback: vectorized reduction (trace-size friendly).
        x1 = x_ref[...].astype(jnp.float32) * ca[:, :, None]
        mean_acc = jnp.sum(x1, axis=1)
        max_acc = jnp.max(x1, axis=1)
    mean_acc = mean_acc * (1.0 / C)                                           # (B, HW)

    # ---------------- Spatial attention ----------------
    # Zero-padded 2-channel (H, W) maps in VMEM scratch (zero pad == PyTorch Conv2d
    # default).  Re-zeroed every step: only a few lane-padded vregs, and zero-once
    # would leave the border uninitialized on the second TensorCore (per-core scratch).
    pad0_ref[...] = jnp.zeros_like(pad0_ref)
    pad1_ref[...] = jnp.zeros_like(pad1_ref)
    # Relayout the lane-dense (B, H*W) maps into (H, W) interior rows of the scratch.
    for h in range(H):
        lo = h * W
        pad0_ref[:, P + h, P:P + W] = mean_acc[:, lo:lo + W]
        pad1_ref[:, P + h, P:P + W] = max_acc[:, lo:lo + W]

    # KxK conv over the 2-channel map, tap-accumulated on the VPU; taps are SMEM scalars.
    # TODO(synk): for large H*W on v6e/v7x, stack the 2*K*K shifted slabs and issue one
    # (1, 2*K*K)@(2*K*K, H*W) MXU matmul instead (not worth it at 16x16).
    acc = jnp.zeros((B, H, W), jnp.float32)
    for kh in range(K):
        for kw in range(K):
            w0 = wsa_ref[kh * K + kw]          # tap applied to the mean channel
            w1 = wsa_ref[KK + kh * K + kw]     # tap applied to the max channel
            acc = acc + w0 * pad0_ref[:, kh:kh + H, kw:kw + W]
            acc = acc + w1 * pad1_ref[:, kh:kh + H, kw:kw + W]

    # Back to the lane-dense (B, H*W) layout through VMEM scratch (row stores), then a
    # single dense sigmoid on full vregs.
    for h in range(H):
        sa_ref[:, h * W:(h + 1) * W] = acc[:, h, :]
    sa = jax.nn.sigmoid(sa_ref[...])                                          # (B, HW)

    # ------------- Final scale: recompute x*ca fused into the dense store -------------
    o_ref[...] = (x_ref[...].astype(jnp.float32) * ca[:, :, None]
                  * sa[:, None, :]).astype(o_ref.dtype)


def _pick_batch(N, C, HW, itemsize):
    """Samples per grid step: amortize per-step overhead, stay inside a conservative
    VMEM budget, and keep >= 2 grid steps (both v7x TensorCores fed) when N >= 2."""
    per_sample = 4 * C * max(HW, 128) * itemsize    # in+out blocks, double-buffered
    budget = 8 * 1024 * 1024
    b = max(1, min(N, budget // max(per_sample, 1)))
    while b > 1 and (N + b - 1) // b < 2:
        b -= 1
    while N % b != 0:                               # exact tiling keeps index maps trivial
        b -= 1
    return b


def cbam(x, fc_weight, fc_bias, sa_weight, kernel_size=7):
    """CBAM forward. x: (N, C, H, W); fc_weight: (C, C, 1, 1); fc_bias: (C,);
    sa_weight: (1, 2, K, K) with channel 0 = mean map, channel 1 = max map."""
    N, C, H, W = x.shape
    assert kernel_size in (3, 7), "kernel size must be 3 or 7"
    K = kernel_size
    P = K // 2
    HW = H * W
    assert fc_weight.shape == (C, C, 1, 1)
    assert fc_bias.shape == (C,)
    assert sa_weight.shape == (1, 2, K, K)

    x2 = x.reshape(N, C, HW)                    # free view of contiguous NCHW in HBM
    wfct = fc_weight.reshape(C, C).T            # (C_in, C_out): logits = pooled @ wfct
    bfc = fc_bias.reshape(1, C)
    wsa = sa_weight.reshape(2 * K * K)          # [mean-channel taps..., max-channel taps...]

    B = _pick_batch(N, C, HW, x.dtype.itemsize)
    grid = (N // B,)

    kernel = functools.partial(_cbam_kernel, B=B, C=C, H=H, W=W, K=K, P=P)

    # Explicit VMEM budget: in/out blocks (double-buffered) + lane-padded conv scratch +
    # sa scratch + headroom for elementwise intermediates.
    lane = lambda n: -(-n // 128) * 128
    sub = lambda n: -(-n // 8) * 8
    block_bytes = B * C * lane(HW) * x.dtype.itemsize
    scratch_bytes = 2 * B * sub(H + 2 * P) * lane(W + 2 * P) * 4 + B * lane(HW) * 4
    footprint = 4 * block_bytes + scratch_bytes + 6 * B * lane(HW) * 4 + 4 * (C * C + 2 * C)
    vmem_limit = int(min(110 * 2 ** 20, max(32 * 2 ** 20, 8 * footprint)))

    flops = int(N * HW * (5 * C + 4 * K * K) + 2 * N * C * C)
    transcendentals = int(N * (C + HW))
    bytes_accessed = int(2 * N * C * HW * x.dtype.itemsize
                         + (C * C + C + 2 * K * K) * 4)

    out = pl.pallas_call(
        kernel,
        out_shape=jax.ShapeDtypeStruct((N, C, HW), x.dtype),
        grid=grid,
        in_specs=[
            pl.BlockSpec((B, C, HW), lambda n: (n, 0, 0)),
            pl.BlockSpec((C, C), lambda n: (0, 0)),
            pl.BlockSpec((1, C), lambda n: (0, 0)),
            pl.BlockSpec(memory_space=pltpu.MemorySpace.SMEM),   # (2*K*K,) filter taps
        ],
        out_specs=pl.BlockSpec((B, C, HW), lambda n: (n, 0, 0)),
        scratch_shapes=[
            pltpu.VMEM((B, H + 2 * P, W + 2 * P), jnp.float32),  # padded mean map
            pltpu.VMEM((B, H + 2 * P, W + 2 * P), jnp.float32),  # padded max map
            pltpu.VMEM((B, HW), jnp.float32),                    # lane-dense sa relayout
        ],
        compiler_params=pltpu.CompilerParams(
            dimension_semantics=("parallel",),
            vmem_limit_bytes=vmem_limit),
        cost_estimate=pl.CostEstimate(flops=flops,
                                      transcendentals=transcendentals,
                                      bytes_accessed=bytes_accessed),
    )(x2, wfct, bfc, wsa)
    return out.reshape(N, C, H, W)


def _reference(x, fc_weight, fc_bias, sa_weight):
    """Pure-JAX reference matching PyTorch CBAM forward."""
    xf = x.astype(jnp.float32)
    # Channel attention.
    pooled = jnp.mean(xf, axis=(2, 3), keepdims=True)            # (N, C, 1, 1)
    logits = jax.lax.conv_general_dilated(
        pooled, fc_weight.astype(jnp.float32), (1, 1), 'VALID',
        dimension_numbers=('NCHW', 'OIHW', 'NCHW'))
    logits = logits + fc_bias.reshape(1, -1, 1, 1)
    x1 = xf * jax.nn.sigmoid(logits)
    # Spatial attention.
    m = jnp.mean(x1, axis=1, keepdims=True)
    mx = jnp.max(x1, axis=1, keepdims=True)
    s = jnp.concatenate([m, mx], axis=1)                          # (N, 2, H, W)
    K = sa_weight.shape[-1]
    P = K // 2
    conv = jax.lax.conv_general_dilated(
        s, sa_weight.astype(jnp.float32), (1, 1), [(P, P), (P, P)],
        dimension_numbers=('NCHW', 'OIHW', 'NCHW'))
    return (x1 * jax.nn.sigmoid(conv)).astype(x.dtype)


if __name__ == "__main__":
    # CBAM(c1=4, kernel_size=7) on a (2, 4, 16, 16) input.
    N, C, H, W = 2, 4, 16, 16
    K = 7

    key = jax.random.PRNGKey(0)
    kx, k1, k2, k3 = jax.random.split(key, 4)
    x = jax.random.normal(kx, (N, C, H, W), dtype=jnp.float32)
    # Deterministic synthetic weights (stand in for PyTorch's default init).
    fc_weight = jax.random.normal(k1, (C, C, 1, 1), dtype=jnp.float32) * (1.0 / C ** 0.5)
    fc_bias = jax.random.normal(k2, (C,), dtype=jnp.float32) * 0.1
    sa_weight = jax.random.normal(k3, (1, 2, K, K), dtype=jnp.float32) * (1.0 / (2 * K * K) ** 0.5)

    out = cbam(x, fc_weight, fc_bias, sa_weight, kernel_size=K)
    out = jax.block_until_ready(out)

    ref = _reference(x, fc_weight, fc_bias, sa_weight)
    assert out.shape == (N, C, H, W)
    assert jnp.allclose(out, ref, atol=1e-4, rtol=1e-4), float(jnp.max(jnp.abs(out - ref)))

    print("KERNEL_OK")
</pallas_src>

<mosaic_0001>
module attributes {stable_mosaic.version = 11 : i64} {
  func.func @_cbam_kernel(%arg0: i32, %arg1: memref<1x4x256xf32, #tpu.memory_space<vmem>>, %arg2: memref<4x4xf32, #tpu.memory_space<vmem>>, %arg3: memref<1x4xf32, #tpu.memory_space<vmem>>, %arg4: memref<98xf32, #tpu.memory_space<smem>>, %arg5: memref<1x4x256xf32, #tpu.memory_space<vmem>>, %arg6: memref<1x22x22xf32, #tpu.memory_space<vmem>>, %arg7: memref<1x22x22xf32, #tpu.memory_space<vmem>>, %arg8: memref<1x256xf32, #tpu.memory_space<vmem>>) attributes {dimension_semantics = [#tpu.dimension_semantics<parallel>], iteration_bounds = array<i64: 2>, scalar_prefetch = 0 : i64, scratch_operands = 3 : i64, tpu.core_type = #tpu.core_type<tc>, window_params = [{transform_indices = @transform_0, window_bounds = array<i64: 1, 4, 256>}, {pipeline_mode = #tpu.pipeline_mode<synchronous>, transform_indices = @transform_1, window_bounds = array<i64: 4, 4>}, {pipeline_mode = #tpu.pipeline_mode<synchronous>, transform_indices = @transform_2, window_bounds = array<i64: 1, 4>}, {transform_indices = @transform_3, window_bounds = array<i64: 98>}, {transform_indices = @transform_4, window_bounds = array<i64: 1, 4, 256>}]} {
    %c0 = arith.constant 0 : index
    %c0_0 = arith.constant 0 : index
    %c0_1 = arith.constant 0 : index
    %0 = vector.load %arg1[%c0, %c0_0, %c0_1] : memref<1x4x256xf32, #tpu.memory_space<vmem>>, vector<1x4x256xf32>
    %cst = arith.constant dense<0.000000e+00> : vector<1x4xf32>
    %1 = vector.multi_reduction <add>, %0, %cst [2] : vector<1x4x256xf32> to vector<1x4xf32>
    %cst_2 = arith.constant 3.906250e-03 : f32
    %2 = vector.broadcast %cst_2 : f32 to vector<1x4xf32>
    %3 = arith.mulf %1, %2 : vector<1x4xf32>
    %c0_3 = arith.constant 0 : index
    %c0_4 = arith.constant 0 : index
    %4 = vector.load %arg2[%c0_3, %c0_4] : memref<4x4xf32, #tpu.memory_space<vmem>>, vector<4x4xf32>
    %5 = vector.shape_cast %3 : vector<1x4xf32> to vector<1x4x1xf32>
    %6 = vector.shape_cast %4 : vector<4x4xf32> to vector<1x4x4xf32>
    %7 = vector.broadcast %5 : vector<1x4x1xf32> to vector<1x4x4xf32>
    %8 = arith.mulf %7, %6 : vector<1x4x4xf32>
    %cst_5 = arith.constant dense<0.000000e+00> : vector<1x4xf32>
    %9 = vector.multi_reduction <add>, %8, %cst_5 [1] : vector<1x4x4xf32> to vector<1x4xf32>
    %c0_6 = arith.constant 0 : index
    %c0_7 = arith.constant 0 : index
    %10 = vector.load %arg3[%c0_6, %c0_7] : memref<1x4xf32, #tpu.memory_space<vmem>>, vector<1x4xf32>
    %11 = arith.addf %9, %10 : vector<1x4xf32>
    %12 = arith.negf %11 : vector<1x4xf32>
    %13 = math.exp %12 : vector<1x4xf32>
    %cst_8 = arith.constant 1.000000e+00 : f32
    %14 = vector.broadcast %cst_8 : f32 to vector<1x4xf32>
    %15 = arith.addf %14, %13 : vector<1x4xf32>
    %16 = arith.divf %14, %15 : vector<1x4xf32>
    %c0_9 = arith.constant 0 : index
    %c0_10 = arith.constant 0 : index
    %c0_11 = arith.constant 0 : index
    %17 = vector.load %arg1[%c0_9, %c0_10, %c0_11] : memref<1x4x256xf32, #tpu.memory_space<vmem>>, vector<1x1x256xf32>
    %18 = vector.shape_cast %17 : vector<1x1x256xf32> to vector<1x256xf32>
    %19 = vector.extract_strided_slice %16 {offsets = [0, 0], sizes = [1, 1], strides = [1, 1]} : vector<1x4xf32> to vector<1x1xf32>
    %20 = vector.broadcast %19 : vector<1x1xf32> to vector<1x256xf32>
    %21 = arith.mulf %18, %20 : vector<1x256xf32>
    %c0_12 = arith.constant 0 : index
    %c1 = arith.constant 1 : index
    %c0_13 = arith.constant 0 : index
    %22 = vector.load %arg1[%c0_12, %c1, %c0_13] : memref<1x4x256xf32, #tpu.memory_space<vmem>>, vector<1x1x256xf32>
    %23 = vector.shape_cast %22 : vector<1x1x256xf32> to vector<1x256xf32>
    %24 = vector.extract_strided_slice %16 {offsets = [0, 1], sizes = [1, 1], strides = [1, 1]} : vector<1x4xf32> to vector<1x1xf32>
    %25 = vector.broadcast %24 : vector<1x1xf32> to vector<1x256xf32>
    %26 = arith.mulf %23, %25 : vector<1x256xf32>
    %27 = arith.addf %21, %26 : vector<1x256xf32>
    %28 = arith.maximumf %21, %26 : vector<1x256xf32>
    %c0_14 = arith.constant 0 : index
    %c2 = arith.constant 2 : index
    %c0_15 = arith.constant 0 : index
    %29 = vector.load %arg1[%c0_14, %c2, %c0_15] : memref<1x4x256xf32, #tpu.memory_space<vmem>>, vector<1x1x256xf32>
    %30 = vector.shape_cast %29 : vector<1x1x256xf32> to vector<1x256xf32>
    %31 = vector.extract_strided_slice %16 {offsets = [0, 2], sizes = [1, 1], strides = [1, 1]} : vector<1x4xf32> to vector<1x1xf32>
    %32 = vector.broadcast %31 : vector<1x1xf32> to vector<1x256xf32>
    %33 = arith.mulf %30, %32 : vector<1x256xf32>
    %34 = arith.addf %27, %33 : vector<1x256xf32>
    %35 = arith.maximumf %28, %33 : vector<1x256xf32>
    %c0_16 = arith.constant 0 : index
    %c3 = arith.constant 3 : index
    %c0_17 = arith.constant 0 : index
    %36 = vector.load %arg1[%c0_16, %c3, %c0_17] : memref<1x4x256xf32, #tpu.memory_space<vmem>>, vector<1x1x256xf32>
    %37 = vector.shape_cast %36 : vector<1x1x256xf32> to vector<1x256xf32>
    %38 = vector.extract_strided_slice %16 {offsets = [0, 3], sizes = [1, 1], strides = [1, 1]} : vector<1x4xf32> to vector<1x1xf32>
    %39 = vector.broadcast %38 : vector<1x1xf32> to vector<1x256xf32>
    %40 = arith.mulf %37, %39 : vector<1x256xf32>
    %41 = arith.addf %34, %40 : vector<1x256xf32>
    %42 = arith.maximumf %35, %40 : vector<1x256xf32>
    %cst_18 = arith.constant 2.500000e-01 : f32
    %43 = vector.broadcast %cst_18 : f32 to vector<1x256xf32>
    %44 = arith.mulf %41, %43 : vector<1x256xf32>
    %cst_19 = arith.constant 0.000000e+00 : f32
    %45 = vector.broadcast %cst_19 : f32 to vector<1x22x22xf32>
    %c0_20 = arith.constant 0 : index
    %c0_21 = arith.constant 0 : index
    %c0_22 = arith.constant 0 : index
    %46 = vector.load %arg6[%c0_20, %c0_21, %c0_22] : memref<1x22x22xf32, #tpu.memory_space<vmem>>, vector<1x22x22xf32>
    tpu.vector_store %arg6[%c0_20, %c0_21, %c0_22], %45 {strides = array<i32>} : memref<1x22x22xf32, #tpu.memory_space<vmem>>, vector<1x22x22xf32>,
    %cst_23 = arith.constant 0.000000e+00 : f32
    %47 = vector.broadcast %cst_23 : f32 to vector<1x22x22xf32>
    %c0_24 = arith.constant 0 : index
    %c0_25 = arith.constant 0 : index
    %c0_26 = arith.constant 0 : index
    %48 = vector.load %arg7[%c0_24, %c0_25, %c0_26] : memref<1x22x22xf32, #tpu.memory_space<vmem>>, vector<1x22x22xf32>
    tpu.vector_store %arg7[%c0_24, %c0_25, %c0_26], %47 {strides = array<i32>} : memref<1x22x22xf32, #tpu.memory_space<vmem>>, vector<1x22x22xf32>,
    %49 = vector.extract_strided_slice %44 {offsets = [0, 0], sizes = [1, 16], strides = [1, 1]} : vector<1x256xf32> to vector<1x16xf32>
    %c0_27 = arith.constant 0 : index
    %c3_28 = arith.constant 3 : index
    %c3_29 = arith.constant 3 : index
    %50 = vector.load %arg6[%c0_27, %c3_28, %c3_29] : memref<1x22x22xf32, #tpu.memory_space<vmem>>, vector<1x1x16xf32>
    %51 = vector.shape_cast %50 : vector<1x1x16xf32> to vector<1x16xf32>
    %52 = vector.shape_cast %49 : vector<1x16xf32> to vector<1x1x16xf32>
    tpu.vector_store %arg6[%c0_27, %c3_28, %c3_29], %52 {strides = array<i32>} : memref<1x22x22xf32, #tpu.memory_space<vmem>>, vector<1x1x16xf32>,
    %53 = vector.extract_strided_slice %42 {offsets = [0, 0], sizes = [1, 16], strides = [1, 1]} : vector<1x256xf32> to vector<1x16xf32>
    %c0_30 = arith.constant 0 : index
    %c3_31 = arith.constant 3 : index
    %c3_32 = arith.constant 3 : index
    %54 = vector.load %arg7[%c0_30, %c3_31, %c3_32] : memref<1x22x22xf32, #tpu.memory_space<vmem>>, vector<1x1x16xf32>
    %55 = vector.shape_cast %54 : vector<1x1x16xf32> to vector<1x16xf32>
    %56 = vector.shape_cast %53 : vector<1x16xf32> to vector<1x1x16xf32>
    tpu.vector_store %arg7[%c0_30, %c3_31, %c3_32], %56 {strides = array<i32>} : memref<1x22x22xf32, #tpu.memory_space<vmem>>, vector<1x1x16xf32>,
    %57 = vector.extract_strided_slice %44 {offsets = [0, 16], sizes = [1, 16], strides = [1, 1]} : vector<1x256xf32> to vector<1x16xf32>
    %c0_33 = arith.constant 0 : index
    %c4 = arith.constant 4 : index
    %c3_34 = arith.constant 3 : index
    %58 = vector.load %arg6[%c0_33, %c4, %c3_34] : memref<1x22x22xf32, #tpu.memory_space<vmem>>, vector<1x1x16xf32>
    %59 = vector.shape_cast %58 : vector<1x1x16xf32> to vector<1x16xf32>
    %60 = vector.shape_cast %57 : vector<1x16xf32> to vector<1x1x16xf32>
    tpu.vector_store %arg6[%c0_33, %c4, %c3_34], %60 {strides = array<i32>} : memref<1x22x22xf32, #tpu.memory_space<vmem>>, vector<1x1x16xf32>,
    %61 = vector.extract_strided_slice %42 {offsets = [0, 16], sizes = [1, 16], strides = [1, 1]} : vector<1x256xf32> to vector<1x16xf32>
    %c0_35 = arith.constant 0 : index
    %c4_36 = arith.constant 4 : index
    %c3_37 = arith.constant 3 : index
    %62 = vector.load %arg7[%c0_35, %c4_36, %c3_37] : memref<1x22x22xf32, #tpu.memory_space<vmem>>, vector<1x1x16xf32>
    %63 = vector.shape_cast %62 : vector<1x1x16xf32> to vector<1x16xf32>
    %64 = vector.shape_cast %61 : vector<1x16xf32> to vector<1x1x16xf32>
    tpu.vector_store %arg7[%c0_35, %c4_36, %c3_37], %64 {strides = array<i32>} : memref<1x22x22xf32, #tpu.memory_space<vmem>>, vector<1x1x16xf32>,
    %65 = vector.extract_strided_slice %44 {offsets = [0, 32], sizes = [1, 16], strides = [1, 1]} : vector<1x256xf32> to vector<1x16xf32>
    %c0_38 = arith.constant 0 : index
    %c5 = arith.constant 5 : index
    %c3_39 = arith.constant 3 : index
    %66 = vector.load %arg6[%c0_38, %c5, %c3_39] : memref<1x22x22xf32, #tpu.memory_space<vmem>>, vector<1x1x16xf32>
    %67 = vector.shape_cast %66 : vector<1x1x16xf32> to vector<1x16xf32>
    %68 = vector.shape_cast %65 : vector<1x16xf32> to vector<1x1x16xf32>
    tpu.vector_store %arg6[%c0_38, %c5, %c3_39], %68 {strides = array<i32>} : memref<1x22x22xf32, #tpu.memory_space<vmem>>, vector<1x1x16xf32>,
    %69 = vector.extract_strided_slice %42 {offsets = [0, 32], sizes = [1, 16], strides = [1, 1]} : vector<1x256xf32> to vector<1x16xf32>
    %c0_40 = arith.constant 0 : index
    %c5_41 = arith.constant 5 : index
    %c3_42 = arith.constant 3 : index
    %70 = vector.load %arg7[%c0_40, %c5_41, %c3_42] : memref<1x22x22xf32, #tpu.memory_space<vmem>>, vector<1x1x16xf32>
    %71 = vector.shape_cast %70 : vector<1x1x16xf32> to vector<1x16xf32>
    %72 = vector.shape_cast %69 : vector<1x16xf32> to vector<1x1x16xf32>
    tpu.vector_store %arg7[%c0_40, %c5_41, %c3_42], %72 {strides = array<i32>} : memref<1x22x22xf32, #tpu.memory_space<vmem>>, vector<1x1x16xf32>,
    %73 = vector.extract_strided_slice %44 {offsets = [0, 48], sizes = [1, 16], strides = [1, 1]} : vector<1x256xf32> to vector<1x16xf32>
    %c0_43 = arith.constant 0 : index
    %c6 = arith.constant 6 : index
    %c3_44 = arith.constant 3 : index
    %74 = vector.load %arg6[%c0_43, %c6, %c3_44] : memref<1x22x22xf32, #tpu.memory_space<vmem>>, vector<1x1x16xf32>
    %75 = vector.shape_cast %74 : vector<1x1x16xf32> to vector<1x16xf32>
    %76 = vector.shape_cast %73 : vector<1x16xf32> to vector<1x1x16xf32>
    tpu.vector_store %arg6[%c0_43, %c6, %c3_44], %76 {strides = array<i32>} : memref<1x22x22xf32, #tpu.memory_space<vmem>>, vector<1x1x16xf32>,
    %77 = vector.extract_strided_slice %42 {offsets = [0, 48], sizes = [1, 16], strides = [1, 1]} : vector<1x256xf32> to vector<1x16xf32>
    %c0_45 = arith.constant 0 : index
    %c6_46 = arith.constant 6 : index
    %c3_47 = arith.constant 3 : index
    %78 = vector.load %arg7[%c0_45, %c6_46, %c3_47] : memref<1x22x22xf32, #tpu.memory_space<vmem>>, vector<1x1x16xf32>
    %79 = vector.shape_cast %78 : vector<1x1x16xf32> to vector<1x16xf32>
    %80 = vector.shape_cast %77 : vector<1x16xf32> to vector<1x1x16xf32>
    tpu.vector_store %arg7[%c0_45, %c6_46, %c3_47], %80 {strides = array<i32>} : memref<1x22x22xf32, #tpu.memory_space<vmem>>, vector<1x1x16xf32>,
    %81 = vector.extract_strided_slice %44 {offsets = [0, 64], sizes = [1, 16], strides = [1, 1]} : vector<1x256xf32> to vector<1x16xf32>
    %c0_48 = arith.constant 0 : index
    %c7 = arith.constant 7 : index
    %c3_49 = arith.constant 3 : index
    %82 = vector.load %arg6[%c0_48, %c7, %c3_49] : memref<1x22x22xf32, #tpu.memory_space<vmem>>, vector<1x1x16xf32>
    %83 = vector.shape_cast %82 : vector<1x1x16xf32> to vector<1x16xf32>
    %84 = vector.shape_cast %81 : vector<1x16xf32> to vector<1x1x16xf32>
    tpu.vector_store %arg6[%c0_48, %c7, %c3_49], %84 {strides = array<i32>} : memref<1x22x22xf32, #tpu.memory_space<vmem>>, vector<1x1x16xf32>,
    %85 = vector.extract_strided_slice %42 {offsets = [0, 64], sizes = [1, 16], strides = [1, 1]} : vector<1x256xf32> to vector<1x16xf32>
    %c0_50 = arith.constant 0 : index
    %c7_51 = arith.constant 7 : index
    %c3_52 = arith.constant 3 : index
    %86 = vector.load %arg7[%c0_50, %c7_51, %c3_52] : memref<1x22x22xf32, #tpu.memory_space<vmem>>, vector<1x1x16xf32>
    %87 = vector.shape_cast %86 : vector<1x1x16xf32> to vector<1x16xf32>
    %88 = vector.shape_cast %85 : vector<1x16xf32> to vector<1x1x16xf32>
    tpu.vector_store %arg7[%c0_50, %c7_51, %c3_52], %88 {strides = array<i32>} : memref<1x22x22xf32, #tpu.memory_space<vmem>>, vector<1x1x16xf32>,
    %89 = vector.extract_strided_slice %44 {offsets = [0, 80], sizes = [1, 16], strides = [1, 1]} : vector<1x256xf32> to vector<1x16xf32>
    %c0_53 = arith.constant 0 : index
    %c8 = arith.constant 8 : index
    %c3_54 = arith.constant 3 : index
    %90 = vector.load %arg6[%c0_53, %c8, %c3_54] : memref<1x22x22xf32, #tpu.memory_space<vmem>>, vector<1x1x16xf32>
    %91 = vector.shape_cast %90 : vector<1x1x16xf32> to vector<1x16xf32>
    %92 = vector.shape_cast %89 : vector<1x16xf32> to vector<1x1x16xf32>
    tpu.vector_store %arg6[%c0_53, %c8, %c3_54], %92 {strides = array<i32>} : memref<1x22x22xf32, #tpu.memory_space<vmem>>, vector<1x1x16xf32>,
    %93 = vector.extract_strided_slice %42 {offsets = [0, 80], sizes = [1, 16], strides = [1, 1]} : vector<1x256xf32> to vector<1x16xf32>
    %c0_55 = arith.constant 0 : index
    %c8_56 = arith.constant 8 : index
    %c3_57 = arith.constant 3 : index
    %94 = vector.load %arg7[%c0_55, %c8_56, %c3_57] : memref<1x22x22xf32, #tpu.memory_space<vmem>>, vector<1x1x16xf32>
    %95 = vector.shape_cast %94 : vector<1x1x16xf32> to vector<1x16xf32>
    %96 = vector.shape_cast %93 : vector<1x16xf32> to vector<1x1x16xf32>
    tpu.vector_store %arg7[%c0_55, %c8_56, %c3_57], %96 {strides = array<i32>} : memref<1x22x22xf32, #tpu.memory_space<vmem>>, vector<1x1x16xf32>,
    %97 = vector.extract_strided_slice %44 {offsets = [0, 96], sizes = [1, 16], strides = [1, 1]} : vector<1x256xf32> to vector<1x16xf32>
    %c0_58 = arith.constant 0 : index
    %c9 = arith.constant 9 : index
    %c3_59 = arith.constant 3 : index
    %98 = vector.load %arg6[%c0_58, %c9, %c3_59] : memref<1x22x22xf32, #tpu.memory_space<vmem>>, vector<1x1x16xf32>
    %99 = vector.shape_cast %98 : vector<1x1x16xf32> to vector<1x16xf32>
    %100 = vector.shape_cast %97 : vector<1x16xf32> to vector<1x1x16xf32>
    tpu.vector_store %arg6[%c0_58, %c9, %c3_59], %100 {strides = array<i32>} : memref<1x22x22xf32, #tpu.memory_space<vmem>>, vector<1x1x16xf32>,
    %101 = vector.extract_strided_slice %42 {offsets = [0, 96], sizes = [1, 16], strides = [1, 1]} : vector<1x256xf32> to vector<1x16xf32>
    %c0_60 = arith.constant 0 : index
    %c9_61 = arith.constant 9 : index
    %c3_62 = arith.constant 3 : index
    %102 = vector.load %arg7[%c0_60, %c9_61, %c3_62] : memref<1x22x22xf32, #tpu.memory_space<vmem>>, vector<1x1x16xf32>
    %103 = vector.shape_cast %102 : vector<1x1x16xf32> to vector<1x16xf32>
    %104 = vector.shape_cast %101 : vector<1x16xf32> to vector<1x1x16xf32>
    tpu.vector_store %arg7[%c0_60, %c9_61, %c3_62], %104 {strides = array<i32>} : memref<1x22x22xf32, #tpu.memory_space<vmem>>, vector<1x1x16xf32>,
    %105 = vector.extract_strided_slice %44 {offsets = [0, 112], sizes = [1, 16], strides = [1, 1]} : vector<1x256xf32> to vector<1x16xf32>
    %c0_63 = arith.constant 0 : index
    %c10 = arith.constant 10 : index
    %c3_64 = arith.constant 3 : index
    %106 = vector.load %arg6[%c0_63, %c10, %c3_64] : memref<1x22x22xf32, #tpu.memory_space<vmem>>, vector<1x1x16xf32>
    %107 = vector.shape_cast %106 : vector<1x1x16xf32> to vector<1x16xf32>
    %108 = vector.shape_cast %105 : vector<1x16xf32> to vector<1x1x16xf32>
    tpu.vector_store %arg6[%c0_63, %c10, %c3_64], %108 {strides = array<i32>} : memref<1x22x22xf32, #tpu.memory_space<vmem>>, vector<1x1x16xf32>,
    %109 = vector.extract_strided_slice %42 {offsets = [0, 112], sizes = [1, 16], strides = [1, 1]} : vector<1x256xf32> to vector<1x16xf32>
    %c0_65 = arith.constant 0 : index
    %c10_66 = arith.constant 10 : index
    %c3_67 = arith.constant 3 : index
    %110 = vector.load %arg7[%c0_65, %c10_66, %c3_67] : memref<1x22x22xf32, #tpu.memory_space<vmem>>, vector<1x1x16xf32>
    %111 = vector.shape_cast %110 : vector<1x1x16xf32> to vector<1x16xf32>
    %112 = vector.shape_cast %109 : vector<1x16xf32> to vector<1x1x16xf32>
    tpu.vector_store %arg7[%c0_65, %c10_66, %c3_67], %112 {strides = array<i32>} : memref<1x22x22xf32, #tpu.memory_space<vmem>>, vector<1x1x16xf32>,
    %113 = vector.extract_strided_slice %44 {offsets = [0, 128], sizes = [1, 16], strides = [1, 1]} : vector<1x256xf32> to vector<1x16xf32>
    %c0_68 = arith.constant 0 : index
    %c11 = arith.constant 11 : index
    %c3_69 = arith.constant 3 : index
    %114 = vector.load %arg6[%c0_68, %c11, %c3_69] : memref<1x22x22xf32, #tpu.memory_space<vmem>>, vector<1x1x16xf32>
    %115 = vector.shape_cast %114 : vector<1x1x16xf32> to vector<1x16xf32>
    %116 = vector.shape_cast %113 : vector<1x16xf32> to vector<1x1x16xf32>
    tpu.vector_store %arg6[%c0_68, %c11, %c3_69], %116 {strides = array<i32>} : memref<1x22x22xf32, #tpu.memory_space<vmem>>, vector<1x1x16xf32>,
    %117 = vector.extract_strided_slice %42 {offsets = [0, 128], sizes = [1, 16], strides = [1, 1]} : vector<1x256xf32> to vector<1x16xf32>
    %c0_70 = arith.constant 0 : index
    %c11_71 = arith.constant 11 : index
    %c3_72 = arith.constant 3 : index
    %118 = vector.load %arg7[%c0_70, %c11_71, %c3_72] : memref<1x22x22xf32, #tpu.memory_space<vmem>>, vector<1x1x16xf32>
    %119 = vector.shape_cast %118 : vector<1x1x16xf32> to vector<1x16xf32>
    %120 = vector.shape_cast %117 : vector<1x16xf32> to vector<1x1x16xf32>
    tpu.vector_store %arg7[%c0_70, %c11_71, %c3_72], %120 {strides = array<i32>} : memref<1x22x22xf32, #tpu.memory_space<vmem>>, vector<1x1x16xf32>,
    %121 = vector.extract_strided_slice %44 {offsets = [0, 144], sizes = [1, 16], strides = [1, 1]} : vector<1x256xf32> to vector<1x16xf32>
    %c0_73 = arith.constant 0 : index
    %c12 = arith.constant 12 : index
    %c3_74 = arith.constant 3 : index
    %122 = vector.load %arg6[%c0_73, %c12, %c3_74] : memref<1x22x22xf32, #tpu.memory_space<vmem>>, vector<1x1x16xf32>
    %123 = vector.shape_cast %122 : vector<1x1x16xf32> to vector<1x16xf32>
    %124 = vector.shape_cast %121 : vector<1x16xf32> to vector<1x1x16xf32>
    tpu.vector_store %arg6[%c0_73, %c12, %c3_74], %124 {strides = array<i32>} : memref<1x22x22xf32, #tpu.memory_space<vmem>>, vector<1x1x16xf32>,
    %125 = vector.extract_strided_slice %42 {offsets = [0, 144], sizes = [1, 16], strides = [1, 1]} : vector<1x256xf32> to vector<1x16xf32>
    %c0_75 = arith.constant 0 : index
    %c12_76 = arith.constant 12 : index
    %c3_77 = arith.constant 3 : index
    %126 = vector.load %arg7[%c0_75, %c12_76, %c3_77] : memref<1x22x22xf32, #tpu.memory_space<vmem>>, vector<1x1x16xf32>
    %127 = vector.shape_cast %126 : vector<1x1x16xf32> to vector<1x16xf32>
    %128 = vector.shape_cast %125 : vector<1x16xf32> to vector<1x1x16xf32>
    tpu.vector_store %arg7[%c0_75, %c12_76, %c3_77], %128 {strides = array<i32>} : memref<1x22x22xf32, #tpu.memory_space<vmem>>, vector<1x1x16xf32>,
    %129 = vector.extract_strided_slice %44 {offsets = [0, 160], sizes = [1, 16], strides = [1, 1]} : vector<1x256xf32> to vector<1x16xf32>
    %c0_78 = arith.constant 0 : index
    %c13 = arith.constant 13 : index
    %c3_79 = arith.constant 3 : index
    %130 = vector.load %arg6[%c0_78, %c13, %c3_79] : memref<1x22x22xf32, #tpu.memory_space<vmem>>, vector<1x1x16xf32>
    %131 = vector.shape_cast %130 : vector<1x1x16xf32> to vector<1x16xf32>
    %132 = vector.shape_cast %129 : vector<1x16xf32> to vector<1x1x16xf32>
    tpu.vector_store %arg6[%c0_78, %c13, %c3_79], %132 {strides = array<i32>} : memref<1x22x22xf32, #tpu.memory_space<vmem>>, vector<1x1x16xf32>,
    %133 = vector.extract_strided_slice %42 {offsets = [0, 160], sizes = [1, 16], strides = [1, 1]} : vector<1x256xf32> to vector<1x16xf32>
    %c0_80 = arith.constant 0 : index
    %c13_81 = arith.constant 13 : index
    %c3_82 = arith.constant 3 : index
    %134 = vector.load %arg7[%c0_80, %c13_81, %c3_82] : memref<1x22x22xf32, #tpu.memory_space<vmem>>, vector<1x1x16xf32>
    %135 = vector.shape_cast %134 : vector<1x1x16xf32> to vector<1x16xf32>
    %136 = vector.shape_cast %133 : vector<1x16xf32> to vector<1x1x16xf32>
    tpu.vector_store %arg7[%c0_80, %c13_81, %c3_82], %136 {strides = array<i32>} : memref<1x22x22xf32, #tpu.memory_space<vmem>>, vector<1x1x16xf32>,
    %137 = vector.extract_strided_slice %44 {offsets = [0, 176], sizes = [1, 16], strides = [1, 1]} : vector<1x256xf32> to vector<1x16xf32>
    %c0_83 = arith.constant 0 : index
    %c14 = arith.constant 14 : index
    %c3_84 = arith.constant 3 : index
    %138 = vector.load %arg6[%c0_83, %c14, %c3_84] : memref<1x22x22xf32, #tpu.memory_space<vmem>>, vector<1x1x16xf32>
    %139 = vector.shape_cast %138 : vector<1x1x16xf32> to vector<1x16xf32>
    %140 = vector.shape_cast %137 : vector<1x16xf32> to vector<1x1x16xf32>
    tpu.vector_store %arg6[%c0_83, %c14, %c3_84], %140 {strides = array<i32>} : memref<1x22x22xf32, #tpu.memory_space<vmem>>, vector<1x1x16xf32>,
    %141 = vector.extract_strided_slice %42 {offsets = [0, 176], sizes = [1, 16], strides = [1, 1]} : vector<1x256xf32> to vector<1x16xf32>
    %c0_85 = arith.constant 0 : index
    %c14_86 = arith.constant 14 : index
    %c3_87 = arith.constant 3 : index
    %142 = vector.load %arg7[%c0_85, %c14_86, %c3_87] : memref<1x22x22xf32, #tpu.memory_space<vmem>>, vector<1x1x16xf32>
    %143 = vector.shape_cast %142 : vector<1x1x16xf32> to vector<1x16xf32>
    %144 = vector.shape_cast %141 : vector<1x16xf32> to vector<1x1x16xf32>
    tpu.vector_store %arg7[%c0_85, %c14_86, %c3_87], %144 {strides = array<i32>} : memref<1x22x22xf32, #tpu.memory_space<vmem>>, vector<1x1x16xf32>,
    %145 = vector.extract_strided_slice %44 {offsets = [0, 192], sizes = [1, 16], strides = [1, 1]} : vector<1x256xf32> to vector<1x16xf32>
    %c0_88 = arith.constant 0 : index
    %c15 = arith.constant 15 : index
    %c3_89 = arith.constant 3 : index
    %146 = vector.load %arg6[%c0_88, %c15, %c3_89] : memref<1x22x22xf32, #tpu.memory_space<vmem>>, vector<1x1x16xf32>
    %147 = vector.shape_cast %146 : vector<1x1x16xf32> to vector<1x16xf32>
    %148 = vector.shape_cast %145 : vector<1x16xf32> to vector<1x1x16xf32>
    tpu.vector_store %arg6[%c0_88, %c15, %c3_89], %148 {strides = array<i32>} : memref<1x22x22xf32, #tpu.memory_space<vmem>>, vector<1x1x16xf32>,
    %149 = vector.extract_strided_slice %42 {offsets = [0, 192], sizes = [1, 16], strides = [1, 1]} : vector<1x256xf32> to vector<1x16xf32>
    %c0_90 = arith.constant 0 : index
    %c15_91 = arith.constant 15 : index
    %c3_92 = arith.constant 3 : index
    %150 = vector.load %arg7[%c0_90, %c15_91, %c3_92] : memref<1x22x22xf32, #tpu.memory_space<vmem>>, vector<1x1x16xf32>
    %151 = vector.shape_cast %150 : vector<1x1x16xf32> to vector<1x16xf32>
    %152 = vector.shape_cast %149 : vector<1x16xf32> to vector<1x1x16xf32>
    tpu.vector_store %arg7[%c0_90, %c15_91, %c3_92], %152 {strides = array<i32>} : memref<1x22x22xf32, #tpu.memory_space<vmem>>, vector<1x1x16xf32>,
    %153 = vector.extract_strided_slice %44 {offsets = [0, 208], sizes = [1, 16], strides = [1, 1]} : vector<1x256xf32> to vector<1x16xf32>
    %c0_93 = arith.constant 0 : index
    %c16 = arith.constant 16 : index
    %c3_94 = arith.constant 3 : index
    %154 = vector.load %arg6[%c0_93, %c16, %c3_94] : memref<1x22x22xf32, #tpu.memory_space<vmem>>, vector<1x1x16xf32>
    %155 = vector.shape_cast %154 : vector<1x1x16xf32> to vector<1x16xf32>
    %156 = vector.shape_cast %153 : vector<1x16xf32> to vector<1x1x16xf32>
    tpu.vector_store %arg6[%c0_93, %c16, %c3_94], %156 {strides = array<i32>} : memref<1x22x22xf32, #tpu.memory_space<vmem>>, vector<1x1x16xf32>,
    %157 = vector.extract_strided_slice %42 {offsets = [0, 208], sizes = [1, 16], strides = [1, 1]} : vector<1x256xf32> to vector<1x16xf32>
    %c0_95 = arith.constant 0 : index
    %c16_96 = arith.constant 16 : index
    %c3_97 = arith.constant 3 : index
    %158 = vector.load %arg7[%c0_95, %c16_96, %c3_97] : memref<1x22x22xf32, #tpu.memory_space<vmem>>, vector<1x1x16xf32>
    %159 = vector.shape_cast %158 : vector<1x1x16xf32> to vector<1x16xf32>
    %160 = vector.shape_cast %157 : vector<1x16xf32> to vector<1x1x16xf32>
    tpu.vector_store %arg7[%c0_95, %c16_96, %c3_97], %160 {strides = array<i32>} : memref<1x22x22xf32, #tpu.memory_space<vmem>>, vector<1x1x16xf32>,
    %161 = vector.extract_strided_slice %44 {offsets = [0, 224], sizes = [1, 16], strides = [1, 1]} : vector<1x256xf32> to vector<1x16xf32>
    %c0_98 = arith.constant 0 : index
    %c17 = arith.constant 17 : index
    %c3_99 = arith.constant 3 : index
    %162 = vector.load %arg6[%c0_98, %c17, %c3_99] : memref<1x22x22xf32, #tpu.memory_space<vmem>>, vector<1x1x16xf32>
    %163 = vector.shape_cast %162 : vector<1x1x16xf32> to vector<1x16xf32>
    %164 = vector.shape_cast %161 : vector<1x16xf32> to vector<1x1x16xf32>
    tpu.vector_store %arg6[%c0_98, %c17, %c3_99], %164 {strides = array<i32>} : memref<1x22x22xf32, #tpu.memory_space<vmem>>, vector<1x1x16xf32>,
    %165 = vector.extract_strided_slice %42 {offsets = [0, 224], sizes = [1, 16], strides = [1, 1]} : vector<1x256xf32> to vector<1x16xf32>
    %c0_100 = arith.constant 0 : index
    %c17_101 = arith.constant 17 : index
    %c3_102 = arith.constant 3 : index
    %166 = vector.load %arg7[%c0_100, %c17_101, %c3_102] : memref<1x22x22xf32, #tpu.memory_space<vmem>>, vector<1x1x16xf32>
    %167 = vector.shape_cast %166 : vector<1x1x16xf32> to vector<1x16xf32>
    %168 = vector.shape_cast %165 : vector<1x16xf32> to vector<1x1x16xf32>
    tpu.vector_store %arg7[%c0_100, %c17_101, %c3_102], %168 {strides = array<i32>} : memref<1x22x22xf32, #tpu.memory_space<vmem>>, vector<1x1x16xf32>,
    %169 = vector.extract_strided_slice %44 {offsets = [0, 240], sizes = [1, 16], strides = [1, 1]} : vector<1x256xf32> to vector<1x16xf32>
    %c0_103 = arith.constant 0 : index
    %c18 = arith.constant 18 : index
    %c3_104 = arith.constant 3 : index
    %170 = vector.load %arg6[%c0_103, %c18, %c3_104] : memref<1x22x22xf32, #tpu.memory_space<vmem>>, vector<1x1x16xf32>
    %171 = vector.shape_cast %170 : vector<1x1x16xf32> to vector<1x16xf32>
    %172 = vector.shape_cast %169 : vector<1x16xf32> to vector<1x1x16xf32>
    tpu.vector_store %arg6[%c0_103, %c18, %c3_104], %172 {strides = array<i32>} : memref<1x22x22xf32, #tpu.memory_space<vmem>>, vector<1x1x16xf32>,
    %173 = vector.extract_strided_slice %42 {offsets = [0, 240], sizes = [1, 16], strides = [1, 1]} : vector<1x256xf32> to vector<1x16xf32>
    %c0_105 = arith.constant 0 : index
    %c18_106 = arith.constant 18 : index
    %c3_107 = arith.constant 3 : index
    %174 = vector.load %arg7[%c0_105, %c18_106, %c3_107] : memref<1x22x22xf32, #tpu.memory_space<vmem>>, vector<1x1x16xf32>
    %175 = vector.shape_cast %174 : vector<1x1x16xf32> to vector<1x16xf32>
    %176 = vector.shape_cast %173 : vector<1x16xf32> to vector<1x1x16xf32>
    tpu.vector_store %arg7[%c0_105, %c18_106, %c3_107], %176 {strides = array<i32>} : memref<1x22x22xf32, #tpu.memory_space<vmem>>, vector<1x1x16xf32>,
    %cst_108 = arith.constant 0.000000e+00 : f32
    %177 = vector.broadcast %cst_108 : f32 to vector<1x16x16xf32>
    %c0_109 = arith.constant 0 : index
    %178 = memref.load %arg4[%c0_109] : memref<98xf32, #tpu.memory_space<smem>>
    %c49 = arith.constant 49 : index
    %179 = memref.load %arg4[%c49] : memref<98xf32, #tpu.memory_space<smem>>
    %c0_110 = arith.constant 0 : index
    %c0_111 = arith.constant 0 : index
    %c0_112 = arith.constant 0 : index
    %180 = vector.load %arg6[%c0_110, %c0_111, %c0_112] : memref<1x22x22xf32, #tpu.memory_space<vmem>>, vector<1x16x16xf32>
    %181 = vector.broadcast %178 : f32 to vector<1x16x16xf32>
    %182 = arith.mulf %181, %180 : vector<1x16x16xf32>
    %183 = arith.addf %177, %182 : vector<1x16x16xf32>
    %c0_113 = arith.constant 0 : index
    %c0_114 = arith.constant 0 : index
    %c0_115 = arith.constant 0 : index
    %184 = vector.load %arg7[%c0_113, %c0_114, %c0_115] : memref<1x22x22xf32, #tpu.memory_space<vmem>>, vector<1x16x16xf32>
    %185 = vector.broadcast %179 : f32 to vector<1x16x16xf32>
    %186 = arith.mulf %185, %184 : vector<1x16x16xf32>
    %187 = arith.addf %183, %186 : vector<1x16x16xf32>
    %c1_116 = arith.constant 1 : index
    %188 = memref.load %arg4[%c1_116] : memref<98xf32, #tpu.memory_space<smem>>
    %c50 = arith.constant 50 : index
    %189 = memref.load %arg4[%c50] : memref<98xf32, #tpu.memory_space<smem>>
    %c0_117 = arith.constant 0 : index
    %c0_118 = arith.constant 0 : index
    %c1_119 = arith.constant 1 : index
    %190 = vector.load %arg6[%c0_117, %c0_118, %c1_119] : memref<1x22x22xf32, #tpu.memory_space<vmem>>, vector<1x16x16xf32>
    %191 = vector.broadcast %188 : f32 to vector<1x16x16xf32>
    %192 = arith.mulf %191, %190 : vector<1x16x16xf32>
    %193 = arith.addf %187, %192 : vector<1x16x16xf32>
    %c0_120 = arith.constant 0 : index
    %c0_121 = arith.constant 0 : index
    %c1_122 = arith.constant 1 : index
    %194 = vector.load %arg7[%c0_120, %c0_121, %c1_122] : memref<1x22x22xf32, #tpu.memory_space<vmem>>, vector<1x16x16xf32>
    %195 = vector.broadcast %189 : f32 to vector<1x16x16xf32>
    %196 = arith.mulf %195, %194 : vector<1x16x16xf32>
    %197 = arith.addf %193, %196 : vector<1x16x16xf32>
    %c2_123 = arith.constant 2 : index
    %198 = memref.load %arg4[%c2_123] : memref<98xf32, #tpu.memory_space<smem>>
    %c51 = arith.constant 51 : index
    %199 = memref.load %arg4[%c51] : memref<98xf32, #tpu.memory_space<smem>>
    %c0_124 = arith.constant 0 : index
    %c0_125 = arith.constant 0 : index
    %c2_126 = arith.constant 2 : index
    %200 = vector.load %arg6[%c0_124, %c0_125, %c2_126] : memref<1x22x22xf32, #tpu.memory_space<vmem>>, vector<1x16x16xf32>
    %201 = vector.broadcast %198 : f32 to vector<1x16x16xf32>
    %202 = arith.mulf %201, %200 : vector<1x16x16xf32>
    %203 = arith.addf %197, %202 : vector<1x16x16xf32>
    %c0_127 = arith.constant 0 : index
    %c0_128 = arith.constant 0 : index
    %c2_129 = arith.constant 2 : index
    %204 = vector.load %arg7[%c0_127, %c0_128, %c2_129] : memref<1x22x22xf32, #tpu.memory_space<vmem>>, vector<1x16x16xf32>
    %205 = vector.broadcast %199 : f32 to vector<1x16x16xf32>
    %206 = arith.mulf %205, %204 : vector<1x16x16xf32>
    %207 = arith.addf %203, %206 : vector<1x16x16xf32>
    %c3_130 = arith.constant 3 : index
    %208 = memref.load %arg4[%c3_130] : memref<98xf32, #tpu.memory_space<smem>>
    %c52 = arith.constant 52 : index
    %209 = memref.load %arg4[%c52] : memref<98xf32, #tpu.memory_space<smem>>
    %c0_131 = arith.constant 0 : index
    %c0_132 = arith.constant 0 : index
    %c3_133 = arith.constant 3 : index
    %210 = vector.load %arg6[%c0_131, %c0_132, %c3_133] : memref<1x22x22xf32, #tpu.memory_space<vmem>>, vector<1x16x16xf32>
    %211 = vector.broadcast %208 : f32 to vector<1x16x16xf32>
    %212 = arith.mulf %211, %210 : vector<1x16x16xf32>
    %213 = arith.addf %207, %212 : vector<1x16x16xf32>
    %c0_134 = arith.constant 0 : index
    %c0_135 = arith.constant 0 : index
    %c3_136 = arith.constant 3 : index
    %214 = vector.load %arg7[%c0_134, %c0_135, %c3_136] : memref<1x22x22xf32, #tpu.memory_space<vmem>>, vector<1x16x16xf32>
    %215 = vector.broadcast %209 : f32 to vector<1x16x16xf32>
    %216 = arith.mulf %215, %214 : vector<1x16x16xf32>
    %217 = arith.addf %213, %216 : vector<1x16x16xf32>
    %c4_137 = arith.constant 4 : index
    %218 = memref.load %arg4[%c4_137] : memref<98xf32, #tpu.memory_space<smem>>
    %c53 = arith.constant 53 : index
    %219 = memref.load %arg4[%c53] : memref<98xf32, #tpu.memory_space<smem>>
    %c0_138 = arith.constant 0 : index
    %c0_139 = arith.constant 0 : index
    %c4_140 = arith.constant 4 : index
    %220 = vector.load %arg6[%c0_138, %c0_139, %c4_140] : memref<1x22x22xf32, #tpu.memory_space<vmem>>, vector<1x16x16xf32>
    %221 = vector.broadcast %218 : f32 to vector<1x16x16xf32>
    %222 = arith.mulf %221, %220 : vector<1x16x16xf32>
    %223 = arith.addf %217, %222 : vector<1x16x16xf32>
    %c0_141 = arith.constant 0 : index
    %c0_142 = arith.constant 0 : index
    %c4_143 = arith.constant 4 : index
    %224 = vector.load %arg7[%c0_141, %c0_142, %c4_143] : memref<1x22x22xf32, #tpu.memory_space<vmem>>, vector<1x16x16xf32>
    %225 = vector.broadcast %219 : f32 to vector<1x16x16xf32>
    %226 = arith.mulf %225, %224 : vector<1x16x16xf32>
    %227 = arith.addf %223, %226 : vector<1x16x16xf32>
    %c5_144 = arith.constant 5 : index
    %228 = memref.load %arg4[%c5_144] : memref<98xf32, #tpu.memory_space<smem>>
    %c54 = arith.constant 54 : index
    %229 = memref.load %arg4[%c54] : memref<98xf32, #tpu.memory_space<smem>>
    %c0_145 = arith.constant 0 : index
    %c0_146 = arith.constant 0 : index
    %c5_147 = arith.constant 5 : index
    %230 = vector.load %arg6[%c0_145, %c0_146, %c5_147] : memref<1x22x22xf32, #tpu.memory_space<vmem>>, vector<1x16x16xf32>
    %231 = vector.broadcast %228 : f32 to vector<1x16x16xf32>
    %232 = arith.mulf %231, %230 : vector<1x16x16xf32>
    %233 = arith.addf %227, %232 : vector<1x16x16xf32>
    %c0_148 = arith.constant 0 : index
    %c0_149 = arith.constant 0 : index
    %c5_150 = arith.constant 5 : index
    %234 = vector.load %arg7[%c0_148, %c0_149, %c5_150] : memref<1x22x22xf32, #tpu.memory_space<vmem>>, vector<1x16x16xf32>
    %235 = vector.broadcast %229 : f32 to vector<1x16x16xf32>
    %236 = arith.mulf %235, %234 : vector<1x16x16xf32>
    %237 = arith.addf %233, %236 : vector<1x16x16xf32>
    %c6_151 = arith.constant 6 : index
    %238 = memref.load %arg4[%c6_151] : memref<98xf32, #tpu.memory_space<smem>>
    %c55 = arith.constant 55 : index
    %239 = memref.load %arg4[%c55] : memref<98xf32, #tpu.memory_space<smem>>
    %c0_152 = arith.constant 0 : index
    %c0_153 = arith.constant 0 : index
    %c6_154 = arith.constant 6 : index
    %240 = vector.load %arg6[%c0_152, %c0_153, %c6_154] : memref<1x22x22xf32, #tpu.memory_space<vmem>>, vector<1x16x16xf32>
    %241 = vector.broadcast %238 : f32 to vector<1x16x16xf32>
    %242 = arith.mulf %241, %240 : vector<1x16x16xf32>
    %243 = arith.addf %237, %242 : vector<1x16x16xf32>
    %c0_155 = arith.constant 0 : index
    %c0_156 = arith.constant 0 : index
    %c6_157 = arith.constant 6 : index
    %244 = vector.load %arg7[%c0_155, %c0_156, %c6_157] : memref<1x22x22xf32, #tpu.memory_space<vmem>>, vector<1x16x16xf32>
    %245 = vector.broadcast %239 : f32 to vector<1x16x16xf32>
    %246 = arith.mulf %245, %244 : vector<1x16x16xf32>
    %247 = arith.addf %243, %246 : vector<1x16x16xf32>
    %c7_158 = arith.constant 7 : index
    %248 = memref.load %arg4[%c7_158] : memref<98xf32, #tpu.memory_space<smem>>
    %c56 = arith.constant 56 : index
    %249 = memref.load %arg4[%c56] : memref<98xf32, #tpu.memory_space<smem>>
    %c0_159 = arith.constant 0 : index
    %c1_160 = arith.constant 1 : index
    %c0_161 = arith.constant 0 : index
    %250 = vector.load %arg6[%c0_159, %c1_160, %c0_161] : memref<1x22x22xf32, #tpu.memory_space<vmem>>, vector<1x16x16xf32>
    %251 = vector.broadcast %248 : f32 to vector<1x16x16xf32>
    %252 = arith.mulf %251, %250 : vector<1x16x16xf32>
    %253 = arith.addf %247, %252 : vector<1x16x16xf32>
    %c0_162 = arith.constant 0 : index
    %c1_163 = arith.constant 1 : index
    %c0_164 = arith.constant 0 : index
    %254 = vector.load %arg7[%c0_162, %c1_163, %c0_164] : memref<1x22x22xf32, #tpu.memory_space<vmem>>, vector<1x16x16xf32>
    %255 = vector.broadcast %249 : f32 to vector<1x16x16xf32>
    %256 = arith.mulf %255, %254 : vector<1x16x16xf32>
    %257 = arith.addf %253, %256 : vector<1x16x16xf32>
    %c8_165 = arith.constant 8 : index
    %258 = memref.load %arg4[%c8_165] : memref<98xf32, #tpu.memory_space<smem>>
    %c57 = arith.constant 57 : index
    %259 = memref.load %arg4[%c57] : memref<98xf32, #tpu.memory_space<smem>>
    %c0_166 = arith.constant 0 : index
    %c1_167 = arith.constant 1 : index
    %c1_168 = arith.constant 1 : index
    %260 = vector.load %arg6[%c0_166, %c1_167, %c1_168] : memref<1x22x22xf32, #tpu.memory_space<vmem>>, vector<1x16x16xf32>
    %261 = vector.broadcast %258 : f32 to vector<1x16x16xf32>
    %262 = arith.mulf %261, %260 : vector<1x16x16xf32>
    %263 = arith.addf %257, %262 : vector<1x16x16xf32>
    %c0_169 = arith.constant 0 : index
    %c1_170 = arith.constant 1 : index
    %c1_171 = arith.constant 1 : index
    %264 = vector.load %arg7[%c0_169, %c1_170, %c1_171] : memref<1x22x22xf32, #tpu.memory_space<vmem>>, vector<1x16x16xf32>
    %265 = vector.broadcast %259 : f32 to vector<1x16x16xf32>
    %266 = arith.mulf %265, %264 : vector<1x16x16xf32>
    %267 = arith.addf %263, %266 : vector<1x16x16xf32>
    %c9_172 = arith.constant 9 : index
    %268 = memref.load %arg4[%c9_172] : memref<98xf32, #tpu.memory_space<smem>>
    %c58 = arith.constant 58 : index
    %269 = memref.load %arg4[%c58] : memref<98xf32, #tpu.memory_space<smem>>
    %c0_173 = arith.constant 0 : index
    %c1_174 = arith.constant 1 : index
    %c2_175 = arith.constant 2 : index
    %270 = vector.load %arg6[%c0_173, %c1_174, %c2_175] : memref<1x22x22xf32, #tpu.memory_space<vmem>>, vector<1x16x16xf32>
    %271 = vector.broadcast %268 : f32 to vector<1x16x16xf32>
    %272 = arith.mulf %271, %270 : vector<1x16x16xf32>
    %273 = arith.addf %267, %272 : vector<1x16x16xf32>
    %c0_176 = arith.constant 0 : index
    %c1_177 = arith.constant 1 : index
    %c2_178 = arith.constant 2 : index
    %274 = vector.load %arg7[%c0_176, %c1_177, %c2_178] : memref<1x22x22xf32, #tpu.memory_space<vmem>>, vector<1x16x16xf32>
    %275 = vector.broadcast %269 : f32 to vector<1x16x16xf32>
    %276 = arith.mulf %275, %274 : vector<1x16x16xf32>
    %277 = arith.addf %273, %276 : vector<1x16x16xf32>
    %c10_179 = arith.constant 10 : index
    %278 = memref.load %arg4[%c10_179] : memref<98xf32, #tpu.memory_space<smem>>
    %c59 = arith.constant 59 : index
    %279 = memref.load %arg4[%c59] : memref<98xf32, #tpu.memory_space<smem>>
    %c0_180 = arith.constant 0 : index
    %c1_181 = arith.constant 1 : index
    %c3_182 = arith.constant 3 : index
    %280 = vector.load %arg6[%c0_180, %c1_181, %c3_182] : memref<1x22x22xf32, #tpu.memory_space<vmem>>, vector<1x16x16xf32>
    %281 = vector.broadcast %278 : f32 to vector<1x16x16xf32>
    %282 = arith.mulf %281, %280 : vector<1x16x16xf32>
    %283 = arith.addf %277, %282 : vector<1x16x16xf32>
    %c0_183 = arith.constant 0 : index
    %c1_184 = arith.constant 1 : index
    %c3_185 = arith.constant 3 : index
    %284 = vector.load %arg7[%c0_183, %c1_184, %c3_185] : memref<1x22x22xf32, #tpu.memory_space<vmem>>, vector<1x16x16xf32>
    %285 = vector.broadcast %279 : f32 to vector<1x16x16xf32>
    %286 = arith.mulf %285, %284 : vector<1x16x16xf32>
    %287 = arith.addf %283, %286 : vector<1x16x16xf32>
    %c11_186 = arith.constant 11 : index
    %288 = memref.load %arg4[%c11_186] : memref<98xf32, #tpu.memory_space<smem>>
    %c60 = arith.constant 60 : index
    %289 = memref.load %arg4[%c60] : memref<98xf32, #tpu.memory_space<smem>>
    %c0_187 = arith.constant 0 : index
    %c1_188 = arith.constant 1 : index
    %c4_189 = arith.constant 4 : index
    %290 = vector.load %arg6[%c0_187, %c1_188, %c4_189] : memref<1x22x22xf32, #tpu.memory_space<vmem>>, vector<1x16x16xf32>
    %291 = vector.broadcast %288 : f32 to vector<1x16x16xf32>
    %292 = arith.mulf %291, %290 : vector<1x16x16xf32>
    %293 = arith.addf %287, %292 : vector<1x16x16xf32>
    %c0_190 = arith.constant 0 : index
    %c1_191 = arith.constant 1 : index
    %c4_192 = arith.constant 4 : index
    %294 = vector.load %arg7[%c0_190, %c1_191, %c4_192] : memref<1x22x22xf32, #tpu.memory_space<vmem>>, vector<1x16x16xf32>
    %295 = vector.broadcast %289 : f32 to vector<1x16x16xf32>
    %296 = arith.mulf %295, %294 : vector<1x16x16xf32>
    %297 = arith.addf %293, %296 : vector<1x16x16xf32>
    %c12_193 = arith.constant 12 : index
    %298 = memref.load %arg4[%c12_193] : memref<98xf32, #tpu.memory_space<smem>>
    %c61 = arith.constant 61 : index
    %299 = memref.load %arg4[%c61] : memref<98xf32, #tpu.memory_space<smem>>
    %c0_194 = arith.constant 0 : index
    %c1_195 = arith.constant 1 : index
    %c5_196 = arith.constant 5 : index
    %300 = vector.load %arg6[%c0_194, %c1_195, %c5_196] : memref<1x22x22xf32, #tpu.memory_space<vmem>>, vector<1x16x16xf32>
    %301 = vector.broadcast %298 : f32 to vector<1x16x16xf32>
    %302 = arith.mulf %301, %300 : vector<1x16x16xf32>
    %303 = arith.addf %297, %302 : vector<1x16x16xf32>
    %c0_197 = arith.constant 0 : index
    %c1_198 = arith.constant 1 : index
    %c5_199 = arith.constant 5 : index
    %304 = vector.load %arg7[%c0_197, %c1_198, %c5_199] : memref<1x22x22xf32, #tpu.memory_space<vmem>>, vector<1x16x16xf32>
    %305 = vector.broadcast %299 : f32 to vector<1x16x16xf32>
    %306 = arith.mulf %305, %304 : vector<1x16x16xf32>
    %307 = arith.addf %303, %306 : vector<1x16x16xf32>
    %c13_200 = arith.constant 13 : index
    %308 = memref.load %arg4[%c13_200] : memref<98xf32, #tpu.memory_space<smem>>
    %c62 = arith.constant 62 : index
    %309 = memref.load %arg4[%c62] : memref<98xf32, #tpu.memory_space<smem>>
    %c0_201 = arith.constant 0 : index
    %c1_202 = arith.constant 1 : index
    %c6_203 = arith.constant 6 : index
    %310 = vector.load %arg6[%c0_201, %c1_202, %c6_203] : memref<1x22x22xf32, #tpu.memory_space<vmem>>, vector<1x16x16xf32>
    %311 = vector.broadcast %308 : f32 to vector<1x16x16xf32>
    %312 = arith.mulf %311, %310 : vector<1x16x16xf32>
    %313 = arith.addf %307, %312 : vector<1x16x16xf32>
    %c0_204 = arith.constant 0 : index
    %c1_205 = arith.constant 1 : index
    %c6_206 = arith.constant 6 : index
    %314 = vector.load %arg7[%c0_204, %c1_205, %c6_206] : memref<1x22x22xf32, #tpu.memory_space<vmem>>, vector<1x16x16xf32>
    %315 = vector.broadcast %309 : f32 to vector<1x16x16xf32>
    %316 = arith.mulf %315, %314 : vector<1x16x16xf32>
    %317 = arith.addf %313, %316 : vector<1x16x16xf32>
    %c14_207 = arith.constant 14 : index
    %318 = memref.load %arg4[%c14_207] : memref<98xf32, #tpu.memory_space<smem>>
    %c63 = arith.constant 63 : index
    %319 = memref.load %arg4[%c63] : memref<98xf32, #tpu.memory_space<smem>>
    %c0_208 = arith.constant 0 : index
    %c2_209 = arith.constant 2 : index
    %c0_210 = arith.constant 0 : index
    %320 = vector.load %arg6[%c0_208, %c2_209, %c0_210] : memref<1x22x22xf32, #tpu.memory_space<vmem>>, vector<1x16x16xf32>
    %321 = vector.broadcast %318 : f32 to vector<1x16x16xf32>
    %322 = arith.mulf %321, %320 : vector<1x16x16xf32>
    %323 = arith.addf %317, %322 : vector<1x16x16xf32>
    %c0_211 = arith.constant 0 : index
    %c2_212 = arith.constant 2 : index
    %c0_213 = arith.constant 0 : index
    %324 = vector.load %arg7[%c0_211, %c2_212, %c0_213] : memref<1x22x22xf32, #tpu.memory_space<vmem>>, vector<1x16x16xf32>
    %325 = vector.broadcast %319 : f32 to vector<1x16x16xf32>
    %326 = arith.mulf %325, %324 : vector<1x16x16xf32>
    %327 = arith.addf %323, %326 : vector<1x16x16xf32>
    %c15_214 = arith.constant 15 : index
    %328 = memref.load %arg4[%c15_214] : memref<98xf32, #tpu.memory_space<smem>>
    %c64 = arith.constant 64 : index
    %329 = memref.load %arg4[%c64] : memref<98xf32, #tpu.memory_space<smem>>
    %c0_215 = arith.constant 0 : index
    %c2_216 = arith.constant 2 : index
    %c1_217 = arith.constant 1 : index
    %330 = vector.load %arg6[%c0_215, %c2_216, %c1_217] : memref<1x22x22xf32, #tpu.memory_space<vmem>>, vector<1x16x16xf32>
    %331 = vector.broadcast %328 : f32 to vector<1x16x16xf32>
    %332 = arith.mulf %331, %330 : vector<1x16x16xf32>
    %333 = arith.addf %327, %332 : vector<1x16x16xf32>
    %c0_218 = arith.constant 0 : index
    %c2_219 = arith.constant 2 : index
    %c1_220 = arith.constant 1 : index
    %334 = vector.load %arg7[%c0_218, %c2_219, %c1_220] : memref<1x22x22xf32, #tpu.memory_space<vmem>>, vector<1x16x16xf32>
    %335 = vector.broadcast %329 : f32 to vector<1x16x16xf32>
    %336 = arith.mulf %335, %334 : vector<1x16x16xf32>
    %337 = arith.addf %333, %336 : vector<1x16x16xf32>
    %c16_221 = arith.constant 16 : index
    %338 = memref.load %arg4[%c16_221] : memref<98xf32, #tpu.memory_space<smem>>
    %c65 = arith.constant 65 : index
    %339 = memref.load %arg4[%c65] : memref<98xf32, #tpu.memory_space<smem>>
    %c0_222 = arith.constant 0 : index
    %c2_223 = arith.constant 2 : index
    %c2_224 = arith.constant 2 : index
    %340 = vector.load %arg6[%c0_222, %c2_223, %c2_224] : memref<1x22x22xf32, #tpu.memory_space<vmem>>, vector<1x16x16xf32>
    %341 = vector.broadcast %338 : f32 to vector<1x16x16xf32>
    %342 = arith.mulf %341, %340 : vector<1x16x16xf32>
    %343 = arith.addf %337, %342 : vector<1x16x16xf32>
    %c0_225 = arith.constant 0 : index
    %c2_226 = arith.constant 2 : index
    %c2_227 = arith.constant 2 : index
    %344 = vector.load %arg7[%c0_225, %c2_226, %c2_227] : memref<1x22x22xf32, #tpu.memory_space<vmem>>, vector<1x16x16xf32>
    %345 = vector.broadcast %339 : f32 to vector<1x16x16xf32>
    %346 = arith.mulf %345, %344 : vector<1x16x16xf32>
    %347 = arith.addf %343, %346 : vector<1x16x16xf32>
    %c17_228 = arith.constant 17 : index
    %348 = memref.load %arg4[%c17_228] : memref<98xf32, #tpu.memory_space<smem>>
    %c66 = arith.constant 66 : index
    %349 = memref.load %arg4[%c66] : memref<98xf32, #tpu.memory_space<smem>>
    %c0_229 = arith.constant 0 : index
    %c2_230 = arith.constant 2 : index
    %c3_231 = arith.constant 3 : index
    %350 = vector.load %arg6[%c0_229, %c2_230, %c3_231] : memref<1x22x22xf32, #tpu.memory_space<vmem>>, vector<1x16x16xf32>
    %351 = vector.broadcast %348 : f32 to vector<1x16x16xf32>
    %352 = arith.mulf %351, %350 : vector<1x16x16xf32>
    %353 = arith.addf %347, %352 : vector<1x16x16xf32>
    %c0_232 = arith.constant 0 : index
    %c2_233 = arith.constant 2 : index
    %c3_234 = arith.constant 3 : index
    %354 = vector.load %arg7[%c0_232, %c2_233, %c3_234] : memref<1x22x22xf32, #tpu.memory_space<vmem>>, vector<1x16x16xf32>
    %355 = vector.broadcast %349 : f32 to vector<1x16x16xf32>
    %356 = arith.mulf %355, %354 : vector<1x16x16xf32>
    %357 = arith.addf %353, %356 : vector<1x16x16xf32>
    %c18_235 = arith.constant 18 : index
    %358 = memref.load %arg4[%c18_235] : memref<98xf32, #tpu.memory_space<smem>>
    %c67 = arith.constant 67 : index
    %359 = memref.load %arg4[%c67] : memref<98xf32, #tpu.memory_space<smem>>
    %c0_236 = arith.constant 0 : index
    %c2_237 = arith.constant 2 : index
    %c4_238 = arith.constant 4 : index
    %360 = vector.load %arg6[%c0_236, %c2_237, %c4_238] : memref<1x22x22xf32, #tpu.memory_space<vmem>>, vector<1x16x16xf32>
    %361 = vector.broadcast %358 : f32 to vector<1x16x16xf32>
    %362 = arith.mulf %361, %360 : vector<1x16x16xf32>
    %363 = arith.addf %357, %362 : vector<1x16x16xf32>
    %c0_239 = arith.constant 0 : index
    %c2_240 = arith.constant 2 : index
    %c4_241 = arith.constant 4 : index
    %364 = vector.load %arg7[%c0_239, %c2_240, %c4_241] : memref<1x22x22xf32, #tpu.memory_space<vmem>>, vector<1x16x16xf32>
    %365 = vector.broadcast %359 : f32 to vector<1x16x16xf32>
    %366 = arith.mulf %365, %364 : vector<1x16x16xf32>
    %367 = arith.addf %363, %366 : vector<1x16x16xf32>
    %c19 = arith.constant 19 : index
    %368 = memref.load %arg4[%c19] : memref<98xf32, #tpu.memory_space<smem>>
    %c68 = arith.constant 68 : index
    %369 = memref.load %arg4[%c68] : memref<98xf32, #tpu.memory_space<smem>>
    %c0_242 = arith.constant 0 : index
    %c2_243 = arith.constant 2 : index
    %c5_244 = arith.constant 5 : index
    %370 = vector.load %arg6[%c0_242, %c2_243, %c5_244] : memref<1x22x22xf32, #tpu.memory_space<vmem>>, vector<1x16x16xf32>
    %371 = vector.broadcast %368 : f32 to vector<1x16x16xf32>
    %372 = arith.mulf %371, %370 : vector<1x16x16xf32>
    %373 = arith.addf %367, %372 : vector<1x16x16xf32>
    %c0_245 = arith.constant 0 : index
    %c2_246 = arith.constant 2 : index
    %c5_247 = arith.constant 5 : index
    %374 = vector.load %arg7[%c0_245, %c2_246, %c5_247] : memref<1x22x22xf32, #tpu.memory_space<vmem>>, vector<1x16x16xf32>
    %375 = vector.broadcast %369 : f32 to vector<1x16x16xf32>
    %376 = arith.mulf %375, %374 : vector<1x16x16xf32>
    %377 = arith.addf %373, %376 : vector<1x16x16xf32>
    %c20 = arith.constant 20 : index
    %378 = memref.load %arg4[%c20] : memref<98xf32, #tpu.memory_space<smem>>
    %c69 = arith.constant 69 : index
    %379 = memref.load %arg4[%c69] : memref<98xf32, #tpu.memory_space<smem>>
    %c0_248 = arith.constant 0 : index
    %c2_249 = arith.constant 2 : index
    %c6_250 = arith.constant 6 : index
    %380 = vector.load %arg6[%c0_248, %c2_249, %c6_250] : memref<1x22x22xf32, #tpu.memory_space<vmem>>, vector<1x16x16xf32>
    %381 = vector.broadcast %378 : f32 to vector<1x16x16xf32>
    %382 = arith.mulf %381, %380 : vector<1x16x16xf32>
    %383 = arith.addf %377, %382 : vector<1x16x16xf32>
    %c0_251 = arith.constant 0 : index
    %c2_252 = arith.constant 2 : index
    %c6_253 = arith.constant 6 : index
    %384 = vector.load %arg7[%c0_251, %c2_252, %c6_253] : memref<1x22x22xf32, #tpu.memory_space<vmem>>, vector<1x16x16xf32>
    %385 = vector.broadcast %379 : f32 to vector<1x16x16xf32>
    %386 = arith.mulf %385, %384 : vector<1x16x16xf32>
    %387 = arith.addf %383, %386 : vector<1x16x16xf32>
    %c21 = arith.constant 21 : index
    %388 = memref.load %arg4[%c21] : memref<98xf32, #tpu.memory_space<smem>>
    %c70 = arith.constant 70 : index
    %389 = memref.load %arg4[%c70] : memref<98xf32, #tpu.memory_space<smem>>
    %c0_254 = arith.constant 0 : index
    %c3_255 = arith.constant 3 : index
    %c0_256 = arith.constant 0 : index
    %390 = vector.load %arg6[%c0_254, %c3_255, %c0_256] : memref<1x22x22xf32, #tpu.memory_space<vmem>>, vector<1x16x16xf32>
    %391 = vector.broadcast %388 : f32 to vector<1x16x16xf32>
    %392 = arith.mulf %391, %390 : vector<1x16x16xf32>
    %393 = arith.addf %387, %392 : vector<1x16x16xf32>
    %c0_257 = arith.constant 0 : index
    %c3_258 = arith.constant 3 : index
    %c0_259 = arith.constant 0 : index
    %394 = vector.load %arg7[%c0_257, %c3_258, %c0_259] : memref<1x22x22xf32, #tpu.memory_space<vmem>>, vector<1x16x16xf32>
    %395 = vector.broadcast %389 : f32 to vector<1x16x16xf32>
    %396 = arith.mulf %395, %394 : vector<1x16x16xf32>
    %397 = arith.addf %393, %396 : vector<1x16x16xf32>
    %c22 = arith.constant 22 : index
    %398 = memref.load %arg4[%c22] : memref<98xf32, #tpu.memory_space<smem>>
    %c71 = arith.constant 71 : index
    %399 = memref.load %arg4[%c71] : memref<98xf32, #tpu.memory_space<smem>>
    %c0_260 = arith.constant 0 : index
    %c3_261 = arith.constant 3 : index
    %c1_262 = arith.constant 1 : index
    %400 = vector.load %arg6[%c0_260, %c3_261, %c1_262] : memref<1x22x22xf32, #tpu.memory_space<vmem>>, vector<1x16x16xf32>
    %401 = vector.broadcast %398 : f32 to vector<1x16x16xf32>
    %402 = arith.mulf %401, %400 : vector<1x16x16xf32>
    %403 = arith.addf %397, %402 : vector<1x16x16xf32>
    %c0_263 = arith.constant 0 : index
    %c3_264 = arith.constant 3 : index
    %c1_265 = arith.constant 1 : index
    %404 = vector.load %arg7[%c0_263, %c3_264, %c1_265] : memref<1x22x22xf32, #tpu.memory_space<vmem>>, vector<1x16x16xf32>
    %405 = vector.broadcast %399 : f32 to vector<1x16x16xf32>
    %406 = arith.mulf %405, %404 : vector<1x16x16xf32>
    %407 = arith.addf %403, %406 : vector<1x16x16xf32>
    %c23 = arith.constant 23 : index
    %408 = memref.load %arg4[%c23] : memref<98xf32, #tpu.memory_space<smem>>
    %c72 = arith.constant 72 : index
    %409 = memref.load %arg4[%c72] : memref<98xf32, #tpu.memory_space<smem>>
    %c0_266 = arith.constant 0 : index
    %c3_267 = arith.constant 3 : index
    %c2_268 = arith.constant 2 : index
    %410 = vector.load %arg6[%c0_266, %c3_267, %c2_268] : memref<1x22x22xf32, #tpu.memory_space<vmem>>, vector<1x16x16xf32>
    %411 = vector.broadcast %408 : f32 to vector<1x16x16xf32>
    %412 = arith.mulf %411, %410 : vector<1x16x16xf32>
    %413 = arith.addf %407, %412 : vector<1x16x16xf32>
    %c0_269 = arith.constant 0 : index
    %c3_270 = arith.constant 3 : index
    %c2_271 = arith.constant 2 : index
    %414 = vector.load %arg7[%c0_269, %c3_270, %c2_271] : memref<1x22x22xf32, #tpu.memory_space<vmem>>, vector<1x16x16xf32>
    %415 = vector.broadcast %409 : f32 to vector<1x16x16xf32>
    %416 = arith.mulf %415, %414 : vector<1x16x16xf32>
    %417 = arith.addf %413, %416 : vector<1x16x16xf32>
    %c24 = arith.constant 24 : index
    %418 = memref.load %arg4[%c24] : memref<98xf32, #tpu.memory_space<smem>>
    %c73 = arith.constant 73 : index
    %419 = memref.load %arg4[%c73] : memref<98xf32, #tpu.memory_space<smem>>
    %c0_272 = arith.constant 0 : index
    %c3_273 = arith.constant 3 : index
    %c3_274 = arith.constant 3 : index
    %420 = vector.load %arg6[%c0_272, %c3_273, %c3_274] : memref<1x22x22xf32, #tpu.memory_space<vmem>>, vector<1x16x16xf32>
    %421 = vector.broadcast %418 : f32 to vector<1x16x16xf32>
    %422 = arith.mulf %421, %420 : vector<1x16x16xf32>
    %423 = arith.addf %417, %422 : vector<1x16x16xf32>
    %c0_275 = arith.constant 0 : index
    %c3_276 = arith.constant 3 : index
    %c3_277 = arith.constant 3 : index
    %424 = vector.load %arg7[%c0_275, %c3_276, %c3_277] : memref<1x22x22xf32, #tpu.memory_space<vmem>>, vector<1x16x16xf32>
    %425 = vector.broadcast %419 : f32 to vector<1x16x16xf32>
    %426 = arith.mulf %425, %424 : vector<1x16x16xf32>
    %427 = arith.addf %423, %426 : vector<1x16x16xf32>
    %c25 = arith.constant 25 : index
    %428 = memref.load %arg4[%c25] : memref<98xf32, #tpu.memory_space<smem>>
    %c74 = arith.constant 74 : index
    %429 = memref.load %arg4[%c74] : memref<98xf32, #tpu.memory_space<smem>>
    %c0_278 = arith.constant 0 : index
    %c3_279 = arith.constant 3 : index
    %c4_280 = arith.constant 4 : index
    %430 = vector.load %arg6[%c0_278, %c3_279, %c4_280] : memref<1x22x22xf32, #tpu.memory_space<vmem>>, vector<1x16x16xf32>
    %431 = vector.broadcast %428 : f32 to vector<1x16x16xf32>
    %432 = arith.mulf %431, %430 : vector<1x16x16xf32>
    %433 = arith.addf %427, %432 : vector<1x16x16xf32>
    %c0_281 = arith.constant 0 : index
    %c3_282 = arith.constant 3 : index
    %c4_283 = arith.constant 4 : index
    %434 = vector.load %arg7[%c0_281, %c3_282, %c4_283] : memref<1x22x22xf32, #tpu.memory_space<vmem>>, vector<1x16x16xf32>
    %435 = vector.broadcast %429 : f32 to vector<1x16x16xf32>
    %436 = arith.mulf %435, %434 : vector<1x16x16xf32>
    %437 = arith.addf %433, %436 : vector<1x16x16xf32>
    %c26 = arith.constant 26 : index
    %438 = memref.load %arg4[%c26] : memref<98xf32, #tpu.memory_space<smem>>
    %c75 = arith.constant 75 : index
    %439 = memref.load %arg4[%c75] : memref<98xf32, #tpu.memory_space<smem>>
    %c0_284 = arith.constant 0 : index
    %c3_285 = arith.constant 3 : index
    %c5_286 = arith.constant 5 : index
    %440 = vector.load %arg6[%c0_284, %c3_285, %c5_286] : memref<1x22x22xf32, #tpu.memory_space<vmem>>, vector<1x16x16xf32>
    %441 = vector.broadcast %438 : f32 to vector<1x16x16xf32>
    %442 = arith.mulf %441, %440 : vector<1x16x16xf32>
    %443 = arith.addf %437, %442 : vector<1x16x16xf32>
    %c0_287 = arith.constant 0 : index
    %c3_288 = arith.constant 3 : index
    %c5_289 = arith.constant 5 : index
    %444 = vector.load %arg7[%c0_287, %c3_288, %c5_289] : memref<1x22x22xf32, #tpu.memory_space<vmem>>, vector<1x16x16xf32>
    %445 = vector.broadcast %439 : f32 to vector<1x16x16xf32>
    %446 = arith.mulf %445, %444 : vector<1x16x16xf32>
    %447 = arith.addf %443, %446 : vector<1x16x16xf32>
    %c27 = arith.constant 27 : index
    %448 = memref.load %arg4[%c27] : memref<98xf32, #tpu.memory_space<smem>>
    %c76 = arith.constant 76 : index
    %449 = memref.load %arg4[%c76] : memref<98xf32, #tpu.memory_space<smem>>
    %c0_290 = arith.constant 0 : index
    %c3_291 = arith.constant 3 : index
    %c6_292 = arith.constant 6 : index
    %450 = vector.load %arg6[%c0_290, %c3_291, %c6_292] : memref<1x22x22xf32, #tpu.memory_space<vmem>>, vector<1x16x16xf32>
    %451 = vector.broadcast %448 : f32 to vector<1x16x16xf32>
    %452 = arith.mulf %451, %450 : vector<1x16x16xf32>
    %453 = arith.addf %447, %452 : vector<1x16x16xf32>
    %c0_293 = arith.constant 0 : index
    %c3_294 = arith.constant 3 : index
    %c6_295 = arith.constant 6 : index
    %454 = vector.load %arg7[%c0_293, %c3_294, %c6_295] : memref<1x22x22xf32, #tpu.memory_space<vmem>>, vector<1x16x16xf32>
    %455 = vector.broadcast %449 : f32 to vector<1x16x16xf32>
    %456 = arith.mulf %455, %454 : vector<1x16x16xf32>
    %457 = arith.addf %453, %456 : vector<1x16x16xf32>
    %c28 = arith.constant 28 : index
    %458 = memref.load %arg4[%c28] : memref<98xf32, #tpu.memory_space<smem>>
    %c77 = arith.constant 77 : index
    %459 = memref.load %arg4[%c77] : memref<98xf32, #tpu.memory_space<smem>>
    %c0_296 = arith.constant 0 : index
    %c4_297 = arith.constant 4 : index
    %c0_298 = arith.constant 0 : index
    %460 = vector.load %arg6[%c0_296, %c4_297, %c0_298] : memref<1x22x22xf32, #tpu.memory_space<vmem>>, vector<1x16x16xf32>
    %461 = vector.broadcast %458 : f32 to vector<1x16x16xf32>
    %462 = arith.mulf %461, %460 : vector<1x16x16xf32>
    %463 = arith.addf %457, %462 : vector<1x16x16xf32>
    %c0_299 = arith.constant 0 : index
    %c4_300 = arith.constant 4 : index
    %c0_301 = arith.constant 0 : index
    %464 = vector.load %arg7[%c0_299, %c4_300, %c0_301] : memref<1x22x22xf32, #tpu.memory_space<vmem>>, vector<1x16x16xf32>
    %465 = vector.broadcast %459 : f32 to vector<1x16x16xf32>
    %466 = arith.mulf %465, %464 : vector<1x16x16xf32>
    %467 = arith.addf %463, %466 : vector<1x16x16xf32>
    %c29 = arith.constant 29 : index
    %468 = memref.load %arg4[%c29] : memref<98xf32, #tpu.memory_space<smem>>
    %c78 = arith.constant 78 : index
    %469 = memref.load %arg4[%c78] : memref<98xf32, #tpu.memory_space<smem>>
    %c0_302 = arith.constant 0 : index
    %c4_303 = arith.constant 4 : index
    %c1_304 = arith.constant 1 : index
    %470 = vector.load %arg6[%c0_302, %c4_303, %c1_304] : memref<1x22x22xf32, #tpu.memory_space<vmem>>, vector<1x16x16xf32>
    %471 = vector.broadcast %468 : f32 to vector<1x16x16xf32>
    %472 = arith.mulf %471, %470 : vector<1x16x16xf32>
    %473 = arith.addf %467, %472 : vector<1x16x16xf32>
    %c0_305 = arith.constant 0 : index
    %c4_306 = arith.constant 4 : index
    %c1_307 = arith.constant 1 : index
    %474 = vector.load %arg7[%c0_305, %c4_306, %c1_307] : memref<1x22x22xf32, #tpu.memory_space<vmem>>, vector<1x16x16xf32>
    %475 = vector.broadcast %469 : f32 to vector<1x16x16xf32>
    %476 = arith.mulf %475, %474 : vector<1x16x16xf32>
    %477 = arith.addf %473, %476 : vector<1x16x16xf32>
    %c30 = arith.constant 30 : index
    %478 = memref.load %arg4[%c30] : memref<98xf32, #tpu.memory_space<smem>>
    %c79 = arith.constant 79 : index
    %479 = memref.load %arg4[%c79] : memref<98xf32, #tpu.memory_space<smem>>
    %c0_308 = arith.constant 0 : index
    %c4_309 = arith.constant 4 : index
    %c2_310 = arith.constant 2 : index
    %480 = vector.load %arg6[%c0_308, %c4_309, %c2_310] : memref<1x22x22xf32, #tpu.memory_space<vmem>>, vector<1x16x16xf32>
    %481 = vector.broadcast %478 : f32 to vector<1x16x16xf32>
    %482 = arith.mulf %481, %480 : vector<1x16x16xf32>
    %483 = arith.addf %477, %482 : vector<1x16x16xf32>
    %c0_311 = arith.constant 0 : index
    %c4_312 = arith.constant 4 : index
    %c2_313 = arith.constant 2 : index
    %484 = vector.load %arg7[%c0_311, %c4_312, %c2_313] : memref<1x22x22xf32, #tpu.memory_space<vmem>>, vector<1x16x16xf32>
    %485 = vector.broadcast %479 : f32 to vector<1x16x16xf32>
    %486 = arith.mulf %485, %484 : vector<1x16x16xf32>
    %487 = arith.addf %483, %486 : vector<1x16x16xf32>
    %c31 = arith.constant 31 : index
    %488 = memref.load %arg4[%c31] : memref<98xf32, #tpu.memory_space<smem>>
    %c80 = arith.constant 80 : index
    %489 = memref.load %arg4[%c80] : memref<98xf32, #tpu.memory_space<smem>>
    %c0_314 = arith.constant 0 : index
    %c4_315 = arith.constant 4 : index
    %c3_316 = arith.constant 3 : index
    %490 = vector.load %arg6[%c0_314, %c4_315, %c3_316] : memref<1x22x22xf32, #tpu.memory_space<vmem>>, vector<1x16x16xf32>
    %491 = vector.broadcast %488 : f32 to vector<1x16x16xf32>
    %492 = arith.mulf %491, %490 : vector<1x16x16xf32>
    %493 = arith.addf %487, %492 : vector<1x16x16xf32>
    %c0_317 = arith.constant 0 : index
    %c4_318 = arith.constant 4 : index
    %c3_319 = arith.constant 3 : index
    %494 = vector.load %arg7[%c0_317, %c4_318, %c3_319] : memref<1x22x22xf32, #tpu.memory_space<vmem>>, vector<1x16x16xf32>
    %495 = vector.broadcast %489 : f32 to vector<1x16x16xf32>
    %496 = arith.mulf %495, %494 : vector<1x16x16xf32>
    %497 = arith.addf %493, %496 : vector<1x16x16xf32>
    %c32 = arith.constant 32 : index
    %498 = memref.load %arg4[%c32] : memref<98xf32, #tpu.memory_space<smem>>
    %c81 = arith.constant 81 : index
    %499 = memref.load %arg4[%c81] : memref<98xf32, #tpu.memory_space<smem>>
    %c0_320 = arith.constant 0 : index
    %c4_321 = arith.constant 4 : index
    %c4_322 = arith.constant 4 : index
    %500 = vector.load %arg6[%c0_320, %c4_321, %c4_322] : memref<1x22x22xf32, #tpu.memory_space<vmem>>, vector<1x16x16xf32>
    %501 = vector.broadcast %498 : f32 to vector<1x16x16xf32>
    %502 = arith.mulf %501, %500 : vector<1x16x16xf32>
    %503 = arith.addf %497, %502 : vector<1x16x16xf32>
    %c0_323 = arith.constant 0 : index
    %c4_324 = arith.constant 4 : index
    %c4_325 = arith.constant 4 : index
    %504 = vector.load %arg7[%c0_323, %c4_324, %c4_325] : memref<1x22x22xf32, #tpu.memory_space<vmem>>, vector<1x16x16xf32>
    %505 = vector.broadcast %499 : f32 to vector<1x16x16xf32>
    %506 = arith.mulf %505, %504 : vector<1x16x16xf32>
    %507 = arith.addf %503, %506 : vector<1x16x16xf32>
    %c33 = arith.constant 33 : index
    %508 = memref.load %arg4[%c33] : memref<98xf32, #tpu.memory_space<smem>>
    %c82 = arith.constant 82 : index
    %509 = memref.load %arg4[%c82] : memref<98xf32, #tpu.memory_space<smem>>
    %c0_326 = arith.constant 0 : index
    %c4_327 = arith.constant 4 : index
    %c5_328 = arith.constant 5 : index
    %510 = vector.load %arg6[%c0_326, %c4_327, %c5_328] : memref<1x22x22xf32, #tpu.memory_space<vmem>>, vector<1x16x16xf32>
    %511 = vector.broadcast %508 : f32 to vector<1x16x16xf32>
    %512 = arith.mulf %511, %510 : vector<1x16x16xf32>
    %513 = arith.addf %507, %512 : vector<1x16x16xf32>
    %c0_329 = arith.constant 0 : index
    %c4_330 = arith.constant 4 : index
    %c5_331 = arith.constant 5 : index
    %514 = vector.load %arg7[%c0_329, %c4_330, %c5_331] : memref<1x22x22xf32, #tpu.memory_space<vmem>>, vector<1x16x16xf32>
    %515 = vector.broadcast %509 : f32 to vector<1x16x16xf32>
    %516 = arith.mulf %515, %514 : vector<1x16x16xf32>
    %517 = arith.addf %513, %516 : vector<1x16x16xf32>
    %c34 = arith.constant 34 : index
    %518 = memref.load %arg4[%c34] : memref<98xf32, #tpu.memory_space<smem>>
    %c83 = arith.constant 83 : index
    %519 = memref.load %arg4[%c83] : memref<98xf32, #tpu.memory_space<smem>>
    %c0_332 = arith.constant 0 : index
    %c4_333 = arith.constant 4 : index
    %c6_334 = arith.constant 6 : index
    %520 = vector.load %arg6[%c0_332, %c4_333, %c6_334] : memref<1x22x22xf32, #tpu.memory_space<vmem>>, vector<1x16x16xf32>
    %521 = vector.broadcast %518 : f32 to vector<1x16x16xf32>
    %522 = arith.mulf %521, %520 : vector<1x16x16xf32>
    %523 = arith.addf %517, %522 : vector<1x16x16xf32>
    %c0_335 = arith.constant 0 : index
    %c4_336 = arith.constant 4 : index
    %c6_337 = arith.constant 6 : index
    %524 = vector.load %arg7[%c0_335, %c4_336, %c6_337] : memref<1x22x22xf32, #tpu.memory_space<vmem>>, vector<1x16x16xf32>
    %525 = vector.broadcast %519 : f32 to vector<1x16x16xf32>
    %526 = arith.mulf %525, %524 : vector<1x16x16xf32>
    %527 = arith.addf %523, %526 : vector<1x16x16xf32>
    %c35 = arith.constant 35 : index
    %528 = memref.load %arg4[%c35] : memref<98xf32, #tpu.memory_space<smem>>
    %c84 = arith.constant 84 : index
    %529 = memref.load %arg4[%c84] : memref<98xf32, #tpu.memory_space<smem>>
    %c0_338 = arith.constant 0 : index
    %c5_339 = arith.constant 5 : index
    %c0_340 = arith.constant 0 : index
    %530 = vector.load %arg6[%c0_338, %c5_339, %c0_340] : memref<1x22x22xf32, #tpu.memory_space<vmem>>, vector<1x16x16xf32>
    %531 = vector.broadcast %528 : f32 to vector<1x16x16xf32>
    %532 = arith.mulf %531, %530 : vector<1x16x16xf32>
    %533 = arith.addf %527, %532 : vector<1x16x16xf32>
    %c0_341 = arith.constant 0 : index
    %c5_342 = arith.constant 5 : index
    %c0_343 = arith.constant 0 : index
    %534 = vector.load %arg7[%c0_341, %c5_342, %c0_343] : memref<1x22x22xf32, #tpu.memory_space<vmem>>, vector<1x16x16xf32>
    %535 = vector.broadcast %529 : f32 to vector<1x16x16xf32>
    %536 = arith.mulf %535, %534 : vector<1x16x16xf32>
    %537 = arith.addf %533, %536 : vector<1x16x16xf32>
    %c36 = arith.constant 36 : index
    %538 = memref.load %arg4[%c36] : memref<98xf32, #tpu.memory_space<smem>>
    %c85 = arith.constant 85 : index
    %539 = memref.load %arg4[%c85] : memref<98xf32, #tpu.memory_space<smem>>
    %c0_344 = arith.constant 0 : index
    %c5_345 = arith.constant 5 : index
    %c1_346 = arith.constant 1 : index
    %540 = vector.load %arg6[%c0_344, %c5_345, %c1_346] : memref<1x22x22xf32, #tpu.memory_space<vmem>>, vector<1x16x16xf32>
    %541 = vector.broadcast %538 : f32 to vector<1x16x16xf32>
    %542 = arith.mulf %541, %540 : vector<1x16x16xf32>
    %543 = arith.addf %537, %542 : vector<1x16x16xf32>
    %c0_347 = arith.constant 0 : index
    %c5_348 = arith.constant 5 : index
    %c1_349 = arith.constant 1 : index
    %544 = vector.load %arg7[%c0_347, %c5_348, %c1_349] : memref<1x22x22xf32, #tpu.memory_space<vmem>>, vector<1x16x16xf32>
    %545 = vector.broadcast %539 : f32 to vector<1x16x16xf32>
    %546 = arith.mulf %545, %544 : vector<1x16x16xf32>
    %547 = arith.addf %543, %546 : vector<1x16x16xf32>
    %c37 = arith.constant 37 : index
    %548 = memref.load %arg4[%c37] : memref<98xf32, #tpu.memory_space<smem>>
    %c86 = arith.constant 86 : index
    %549 = memref.load %arg4[%c86] : memref<98xf32, #tpu.memory_space<smem>>
    %c0_350 = arith.constant 0 : index
    %c5_351 = arith.constant 5 : index
    %c2_352 = arith.constant 2 : index
    %550 = vector.load %arg6[%c0_350, %c5_351, %c2_352] : memref<1x22x22xf32, #tpu.memory_space<vmem>>, vector<1x16x16xf32>
    %551 = vector.broadcast %548 : f32 to vector<1x16x16xf32>
    %552 = arith.mulf %551, %550 : vector<1x16x16xf32>
    %553 = arith.addf %547, %552 : vector<1x16x16xf32>
    %c0_353 = arith.constant 0 : index
    %c5_354 = arith.constant 5 : index
    %c2_355 = arith.constant 2 : index
    %554 = vector.load %arg7[%c0_353, %c5_354, %c2_355] : memref<1x22x22xf32, #tpu.memory_space<vmem>>, vector<1x16x16xf32>
    %555 = vector.broadcast %549 : f32 to vector<1x16x16xf32>
    %556 = arith.mulf %555, %554 : vector<1x16x16xf32>
    %557 = arith.addf %553, %556 : vector<1x16x16xf32>
    %c38 = arith.constant 38 : index
    %558 = memref.load %arg4[%c38] : memref<98xf32, #tpu.memory_space<smem>>
    %c87 = arith.constant 87 : index
    %559 = memref.load %arg4[%c87] : memref<98xf32, #tpu.memory_space<smem>>
    %c0_356 = arith.constant 0 : index
    %c5_357 = arith.constant 5 : index
    %c3_358 = arith.constant 3 : index
    %560 = vector.load %arg6[%c0_356, %c5_357, %c3_358] : memref<1x22x22xf32, #tpu.memory_space<vmem>>, vector<1x16x16xf32>
    %561 = vector.broadcast %558 : f32 to vector<1x16x16xf32>
    %562 = arith.mulf %561, %560 : vector<1x16x16xf32>
    %563 = arith.addf %557, %562 : vector<1x16x16xf32>
    %c0_359 = arith.constant 0 : index
    %c5_360 = arith.constant 5 : index
    %c3_361 = arith.constant 3 : index
    %564 = vector.load %arg7[%c0_359, %c5_360, %c3_361] : memref<1x22x22xf32, #tpu.memory_space<vmem>>, vector<1x16x16xf32>
    %565 = vector.broadcast %559 : f32 to vector<1x16x16xf32>
    %566 = arith.mulf %565, %564 : vector<1x16x16xf32>
    %567 = arith.addf %563, %566 : vector<1x16x16xf32>
    %c39 = arith.constant 39 : index
    %568 = memref.load %arg4[%c39] : memref<98xf32, #tpu.memory_space<smem>>
    %c88 = arith.constant 88 : index
    %569 = memref.load %arg4[%c88] : memref<98xf32, #tpu.memory_space<smem>>
    %c0_362 = arith.constant 0 : index
    %c5_363 = arith.constant 5 : index
    %c4_364 = arith.constant 4 : index
    %570 = vector.load %arg6[%c0_362, %c5_363, %c4_364] : memref<1x22x22xf32, #tpu.memory_space<vmem>>, vector<1x16x16xf32>
    %571 = vector.broadcast %568 : f32 to vector<1x16x16xf32>
    %572 = arith.mulf %571, %570 : vector<1x16x16xf32>
    %573 = arith.addf %567, %572 : vector<1x16x16xf32>
    %c0_365 = arith.constant 0 : index
    %c5_366 = arith.constant 5 : index
    %c4_367 = arith.constant 4 : index
    %574 = vector.load %arg7[%c0_365, %c5_366, %c4_367] : memref<1x22x22xf32, #tpu.memory_space<vmem>>, vector<1x16x16xf32>
    %575 = vector.broadcast %569 : f32 to vector<1x16x16xf32>
    %576 = arith.mulf %575, %574 : vector<1x16x16xf32>
    %577 = arith.addf %573, %576 : vector<1x16x16xf32>
    %c40 = arith.constant 40 : index
    %578 = memref.load %arg4[%c40] : memref<98xf32, #tpu.memory_space<smem>>
    %c89 = arith.constant 89 : index
    %579 = memref.load %arg4[%c89] : memref<98xf32, #tpu.memory_space<smem>>
    %c0_368 = arith.constant 0 : index
    %c5_369 = arith.constant 5 : index
    %c5_370 = arith.constant 5 : index
    %580 = vector.load %arg6[%c0_368, %c5_369, %c5_370] : memref<1x22x22xf32, #tpu.memory_space<vmem>>, vector<1x16x16xf32>
    %581 = vector.broadcast %578 : f32 to vector<1x16x16xf32>
    %582 = arith.mulf %581, %580 : vector<1x16x16xf32>
    %583 = arith.addf %577, %582 : vector<1x16x16xf32>
    %c0_371 = arith.constant 0 : index
    %c5_372 = arith.constant 5 : index
    %c5_373 = arith.constant 5 : index
    %584 = vector.load %arg7[%c0_371, %c5_372, %c5_373] : memref<1x22x22xf32, #tpu.memory_space<vmem>>, vector<1x16x16xf32>
    %585 = vector.broadcast %579 : f32 to vector<1x16x16xf32>
    %586 = arith.mulf %585, %584 : vector<1x16x16xf32>
    %587 = arith.addf %583, %586 : vector<1x16x16xf32>
    %c41 = arith.constant 41 : index
    %588 = memref.load %arg4[%c41] : memref<98xf32, #tpu.memory_space<smem>>
    %c90 = arith.constant 90 : index
    %589 = memref.load %arg4[%c90] : memref<98xf32, #tpu.memory_space<smem>>
    %c0_374 = arith.constant 0 : index
    %c5_375 = arith.constant 5 : index
    %c6_376 = arith.constant 6 : index
    %590 = vector.load %arg6[%c0_374, %c5_375, %c6_376] : memref<1x22x22xf32, #tpu.memory_space<vmem>>, vector<1x16x16xf32>
    %591 = vector.broadcast %588 : f32 to vector<1x16x16xf32>
    %592 = arith.mulf %591, %590 : vector<1x16x16xf32>
    %593 = arith.addf %587, %592 : vector<1x16x16xf32>
    %c0_377 = arith.constant 0 : index
    %c5_378 = arith.constant 5 : index
    %c6_379 = arith.constant 6 : index
    %594 = vector.load %arg7[%c0_377, %c5_378, %c6_379] : memref<1x22x22xf32, #tpu.memory_space<vmem>>, vector<1x16x16xf32>
    %595 = vector.broadcast %589 : f32 to vector<1x16x16xf32>
    %596 = arith.mulf %595, %594 : vector<1x16x16xf32>
    %597 = arith.addf %593, %596 : vector<1x16x16xf32>
    %c42 = arith.constant 42 : index
    %598 = memref.load %arg4[%c42] : memref<98xf32, #tpu.memory_space<smem>>
    %c91 = arith.constant 91 : index
    %599 = memref.load %arg4[%c91] : memref<98xf32, #tpu.memory_space<smem>>
    %c0_380 = arith.constant 0 : index
    %c6_381 = arith.constant 6 : index
    %c0_382 = arith.constant 0 : index
    %600 = vector.load %arg6[%c0_380, %c6_381, %c0_382] : memref<1x22x22xf32, #tpu.memory_space<vmem>>, vector<1x16x16xf32>
    %601 = vector.broadcast %598 : f32 to vector<1x16x16xf32>
    %602 = arith.mulf %601, %600 : vector<1x16x16xf32>
    %603 = arith.addf %597, %602 : vector<1x16x16xf32>
    %c0_383 = arith.constant 0 : index
    %c6_384 = arith.constant 6 : index
    %c0_385 = arith.constant 0 : index
    %604 = vector.load %arg7[%c0_383, %c6_384, %c0_385] : memref<1x22x22xf32, #tpu.memory_space<vmem>>, vector<1x16x16xf32>
    %605 = vector.broadcast %599 : f32 to vector<1x16x16xf32>
    %606 = arith.mulf %605, %604 : vector<1x16x16xf32>
    %607 = arith.addf %603, %606 : vector<1x16x16xf32>
    %c43 = arith.constant 43 : index
    %608 = memref.load %arg4[%c43] : memref<98xf32, #tpu.memory_space<smem>>
    %c92 = arith.constant 92 : index
    %609 = memref.load %arg4[%c92] : memref<98xf32, #tpu.memory_space<smem>>
    %c0_386 = arith.constant 0 : index
    %c6_387 = arith.constant 6 : index
    %c1_388 = arith.constant 1 : index
    %610 = vector.load %arg6[%c0_386, %c6_387, %c1_388] : memref<1x22x22xf32, #tpu.memory_space<vmem>>, vector<1x16x16xf32>
    %611 = vector.broadcast %608 : f32 to vector<1x16x16xf32>
    %612 = arith.mulf %611, %610 : vector<1x16x16xf32>
    %613 = arith.addf %607, %612 : vector<1x16x16xf32>
    %c0_389 = arith.constant 0 : index
    %c6_390 = arith.constant 6 : index
    %c1_391 = arith.constant 1 : index
    %614 = vector.load %arg7[%c0_389, %c6_390, %c1_391] : memref<1x22x22xf32, #tpu.memory_space<vmem>>, vector<1x16x16xf32>
    %615 = vector.broadcast %609 : f32 to vector<1x16x16xf32>
    %616 = arith.mulf %615, %614 : vector<1x16x16xf32>
    %617 = arith.addf %613, %616 : vector<1x16x16xf32>
    %c44 = arith.constant 44 : index
    %618 = memref.load %arg4[%c44] : memref<98xf32, #tpu.memory_space<smem>>
    %c93 = arith.constant 93 : index
    %619 = memref.load %arg4[%c93] : memref<98xf32, #tpu.memory_space<smem>>
    %c0_392 = arith.constant 0 : index
    %c6_393 = arith.constant 6 : index
    %c2_394 = arith.constant 2 : index
    %620 = vector.load %arg6[%c0_392, %c6_393, %c2_394] : memref<1x22x22xf32, #tpu.memory_space<vmem>>, vector<1x16x16xf32>
    %621 = vector.broadcast %618 : f32 to vector<1x16x16xf32>
    %622 = arith.mulf %621, %620 : vector<1x16x16xf32>
    %623 = arith.addf %617, %622 : vector<1x16x16xf32>
    %c0_395 = arith.constant 0 : index
    %c6_396 = arith.constant 6 : index
    %c2_397 = arith.constant 2 : index
    %624 = vector.load %arg7[%c0_395, %c6_396, %c2_397] : memref<1x22x22xf32, #tpu.memory_space<vmem>>, vector<1x16x16xf32>
    %625 = vector.broadcast %619 : f32 to vector<1x16x16xf32>
    %626 = arith.mulf %625, %624 : vector<1x16x16xf32>
    %627 = arith.addf %623, %626 : vector<1x16x16xf32>
    %c45 = arith.constant 45 : index
    %628 = memref.load %arg4[%c45] : memref<98xf32, #tpu.memory_space<smem>>
    %c94 = arith.constant 94 : index
    %629 = memref.load %arg4[%c94] : memref<98xf32, #tpu.memory_space<smem>>
    %c0_398 = arith.constant 0 : index
    %c6_399 = arith.constant 6 : index
    %c3_400 = arith.constant 3 : index
    %630 = vector.load %arg6[%c0_398, %c6_399, %c3_400] : memref<1x22x22xf32, #tpu.memory_space<vmem>>, vector<1x16x16xf32>
    %631 = vector.broadcast %628 : f32 to vector<1x16x16xf32>
    %632 = arith.mulf %631, %630 : vector<1x16x16xf32>
    %633 = arith.addf %627, %632 : vector<1x16x16xf32>
    %c0_401 = arith.constant 0 : index
    %c6_402 = arith.constant 6 : index
    %c3_403 = arith.constant 3 : index
    %634 = vector.load %arg7[%c0_401, %c6_402, %c3_403] : memref<1x22x22xf32, #tpu.memory_space<vmem>>, vector<1x16x16xf32>
    %635 = vector.broadcast %629 : f32 to vector<1x16x16xf32>
    %636 = arith.mulf %635, %634 : vector<1x16x16xf32>
    %637 = arith.addf %633, %636 : vector<1x16x16xf32>
    %c46 = arith.constant 46 : index
    %638 = memref.load %arg4[%c46] : memref<98xf32, #tpu.memory_space<smem>>
    %c95 = arith.constant 95 : index
    %639 = memref.load %arg4[%c95] : memref<98xf32, #tpu.memory_space<smem>>
    %c0_404 = arith.constant 0 : index
    %c6_405 = arith.constant 6 : index
    %c4_406 = arith.constant 4 : index
    %640 = vector.load %arg6[%c0_404, %c6_405, %c4_406] : memref<1x22x22xf32, #tpu.memory_space<vmem>>, vector<1x16x16xf32>
    %641 = vector.broadcast %638 : f32 to vector<1x16x16xf32>
    %642 = arith.mulf %641, %640 : vector<1x16x16xf32>
    %643 = arith.addf %637, %642 : vector<1x16x16xf32>
    %c0_407 = arith.constant 0 : index
    %c6_408 = arith.constant 6 : index
    %c4_409 = arith.constant 4 : index
    %644 = vector.load %arg7[%c0_407, %c6_408, %c4_409] : memref<1x22x22xf32, #tpu.memory_space<vmem>>, vector<1x16x16xf32>
    %645 = vector.broadcast %639 : f32 to vector<1x16x16xf32>
    %646 = arith.mulf %645, %644 : vector<1x16x16xf32>
    %647 = arith.addf %643, %646 : vector<1x16x16xf32>
    %c47 = arith.constant 47 : index
    %648 = memref.load %arg4[%c47] : memref<98xf32, #tpu.memory_space<smem>>
    %c96 = arith.constant 96 : index
    %649 = memref.load %arg4[%c96] : memref<98xf32, #tpu.memory_space<smem>>
    %c0_410 = arith.constant 0 : index
    %c6_411 = arith.constant 6 : index
    %c5_412 = arith.constant 5 : index
    %650 = vector.load %arg6[%c0_410, %c6_411, %c5_412] : memref<1x22x22xf32, #tpu.memory_space<vmem>>, vector<1x16x16xf32>
    %651 = vector.broadcast %648 : f32 to vector<1x16x16xf32>
    %652 = arith.mulf %651, %650 : vector<1x16x16xf32>
    %653 = arith.addf %647, %652 : vector<1x16x16xf32>
    %c0_413 = arith.constant 0 : index
    %c6_414 = arith.constant 6 : index
    %c5_415 = arith.constant 5 : index
    %654 = vector.load %arg7[%c0_413, %c6_414, %c5_415] : memref<1x22x22xf32, #tpu.memory_space<vmem>>, vector<1x16x16xf32>
    %655 = vector.broadcast %649 : f32 to vector<1x16x16xf32>
    %656 = arith.mulf %655, %654 : vector<1x16x16xf32>
    %657 = arith.addf %653, %656 : vector<1x16x16xf32>
    %c48 = arith.constant 48 : index
    %658 = memref.load %arg4[%c48] : memref<98xf32, #tpu.memory_space<smem>>
    %c97 = arith.constant 97 : index
    %659 = memref.load %arg4[%c97] : memref<98xf32, #tpu.memory_space<smem>>
    %c0_416 = arith.constant 0 : index
    %c6_417 = arith.constant 6 : index
    %c6_418 = arith.constant 6 : index
    %660 = vector.load %arg6[%c0_416, %c6_417, %c6_418] : memref<1x22x22xf32, #tpu.memory_space<vmem>>, vector<1x16x16xf32>
    %661 = vector.broadcast %658 : f32 to vector<1x16x16xf32>
    %662 = arith.mulf %661, %660 : vector<1x16x16xf32>
    %663 = arith.addf %657, %662 : vector<1x16x16xf32>
    %c0_419 = arith.constant 0 : index
    %c6_420 = arith.constant 6 : index
    %c6_421 = arith.constant 6 : index
    %664 = vector.load %arg7[%c0_419, %c6_420, %c6_421] : memref<1x22x22xf32, #tpu.memory_space<vmem>>, vector<1x16x16xf32>
    %665 = vector.broadcast %659 : f32 to vector<1x16x16xf32>
    %666 = arith.mulf %665, %664 : vector<1x16x16xf32>
    %667 = arith.addf %663, %666 : vector<1x16x16xf32>
    %668 = vector.extract_strided_slice %667 {offsets = [0, 0, 0], sizes = [1, 1, 16], strides = [1, 1, 1]} : vector<1x16x16xf32> to vector<1x1x16xf32>
    %669 = vector.shape_cast %668 : vector<1x1x16xf32> to vector<1x16xf32>
    %c0_422 = arith.constant 0 : index
    %c0_423 = arith.constant 0 : index
    %670 = vector.load %arg8[%c0_422, %c0_423] : memref<1x256xf32, #tpu.memory_space<vmem>>, vector<1x16xf32>
    tpu.vector_store %arg8[%c0_422, %c0_423], %669 {strides = array<i32>} : memref<1x256xf32, #tpu.memory_space<vmem>>, vector<1x16xf32>,
    %671 = vector.extract_strided_slice %667 {offsets = [0, 1, 0], sizes = [1, 1, 16], strides = [1, 1, 1]} : vector<1x16x16xf32> to vector<1x1x16xf32>
    %672 = vector.shape_cast %671 : vector<1x1x16xf32> to vector<1x16xf32>
    %c0_424 = arith.constant 0 : index
    %c16_425 = arith.constant 16 : index
    %673 = vector.load %arg8[%c0_424, %c16_425] : memref<1x256xf32, #tpu.memory_space<vmem>>, vector<1x16xf32>
    tpu.vector_store %arg8[%c0_424, %c16_425], %672 {strides = array<i32>} : memref<1x256xf32, #tpu.memory_space<vmem>>, vector<1x16xf32>,
    %674 = vector.extract_strided_slice %667 {offsets = [0, 2, 0], sizes = [1, 1, 16], strides = [1, 1, 1]} : vector<1x16x16xf32> to vector<1x1x16xf32>
    %675 = vector.shape_cast %674 : vector<1x1x16xf32> to vector<1x16xf32>
    %c0_426 = arith.constant 0 : index
    %c32_427 = arith.constant 32 : index
    %676 = vector.load %arg8[%c0_426, %c32_427] : memref<1x256xf32, #tpu.memory_space<vmem>>, vector<1x16xf32>
    tpu.vector_store %arg8[%c0_426, %c32_427], %675 {strides = array<i32>} : memref<1x256xf32, #tpu.memory_space<vmem>>, vector<1x16xf32>,
    %677 = vector.extract_strided_slice %667 {offsets = [0, 3, 0], sizes = [1, 1, 16], strides = [1, 1, 1]} : vector<1x16x16xf32> to vector<1x1x16xf32>
    %678 = vector.shape_cast %677 : vector<1x1x16xf32> to vector<1x16xf32>
    %c0_428 = arith.constant 0 : index
    %c48_429 = arith.constant 48 : index
    %679 = vector.load %arg8[%c0_428, %c48_429] : memref<1x256xf32, #tpu.memory_space<vmem>>, vector<1x16xf32>
    tpu.vector_store %arg8[%c0_428, %c48_429], %678 {strides = array<i32>} : memref<1x256xf32, #tpu.memory_space<vmem>>, vector<1x16xf32>,
    %680 = vector.extract_strided_slice %667 {offsets = [0, 4, 0], sizes = [1, 1, 16], strides = [1, 1, 1]} : vector<1x16x16xf32> to vector<1x1x16xf32>
    %681 = vector.shape_cast %680 : vector<1x1x16xf32> to vector<1x16xf32>
    %c0_430 = arith.constant 0 : index
    %c64_431 = arith.constant 64 : index
    %682 = vector.load %arg8[%c0_430, %c64_431] : memref<1x256xf32, #tpu.memory_space<vmem>>, vector<1x16xf32>
    tpu.vector_store %arg8[%c0_430, %c64_431], %681 {strides = array<i32>} : memref<1x256xf32, #tpu.memory_space<vmem>>, vector<1x16xf32>,
    %683 = vector.extract_strided_slice %667 {offsets = [0, 5, 0], sizes = [1, 1, 16], strides = [1, 1, 1]} : vector<1x16x16xf32> to vector<1x1x16xf32>
    %684 = vector.shape_cast %683 : vector<1x1x16xf32> to vector<1x16xf32>
    %c0_432 = arith.constant 0 : index
    %c80_433 = arith.constant 80 : index
    %685 = vector.load %arg8[%c0_432, %c80_433] : memref<1x256xf32, #tpu.memory_space<vmem>>, vector<1x16xf32>
    tpu.vector_store %arg8[%c0_432, %c80_433], %684 {strides = array<i32>} : memref<1x256xf32, #tpu.memory_space<vmem>>, vector<1x16xf32>,
    %686 = vector.extract_strided_slice %667 {offsets = [0, 6, 0], sizes = [1, 1, 16], strides = [1, 1, 1]} : vector<1x16x16xf32> to vector<1x1x16xf32>
    %687 = vector.shape_cast %686 : vector<1x1x16xf32> to vector<1x16xf32>
    %c0_434 = arith.constant 0 : index
    %c96_435 = arith.constant 96 : index
    %688 = vector.load %arg8[%c0_434, %c96_435] : memref<1x256xf32, #tpu.memory_space<vmem>>, vector<1x16xf32>
    tpu.vector_store %arg8[%c0_434, %c96_435], %687 {strides = array<i32>} : memref<1x256xf32, #tpu.memory_space<vmem>>, vector<1x16xf32>,
    %689 = vector.extract_strided_slice %667 {offsets = [0, 7, 0], sizes = [1, 1, 16], strides = [1, 1, 1]} : vector<1x16x16xf32> to vector<1x1x16xf32>
    %690 = vector.shape_cast %689 : vector<1x1x16xf32> to vector<1x16xf32>
    %c0_436 = arith.constant 0 : index
    %c112 = arith.constant 112 : index
    %691 = vector.load %arg8[%c0_436, %c112] : memref<1x256xf32, #tpu.memory_space<vmem>>, vector<1x16xf32>
    tpu.vector_store %arg8[%c0_436, %c112], %690 {strides = array<i32>} : memref<1x256xf32, #tpu.memory_space<vmem>>, vector<1x16xf32>,
    %692 = vector.extract_strided_slice %667 {offsets = [0, 8, 0], sizes = [1, 1, 16], strides = [1, 1, 1]} : vector<1x16x16xf32> to vector<1x1x16xf32>
    %693 = vector.shape_cast %692 : vector<1x1x16xf32> to vector<1x16xf32>
    %c0_437 = arith.constant 0 : index
    %c128 = arith.constant 128 : index
    %694 = vector.load %arg8[%c0_437, %c128] : memref<1x256xf32, #tpu.memory_space<vmem>>, vector<1x16xf32>
    tpu.vector_store %arg8[%c0_437, %c128], %693 {strides = array<i32>} : memref<1x256xf32, #tpu.memory_space<vmem>>, vector<1x16xf32>,
    %695 = vector.extract_strided_slice %667 {offsets = [0, 9, 0], sizes = [1, 1, 16], strides = [1, 1, 1]} : vector<1x16x16xf32> to vector<1x1x16xf32>
    %696 = vector.shape_cast %695 : vector<1x1x16xf32> to vector<1x16xf32>
    %c0_438 = arith.constant 0 : index
    %c144 = arith.constant 144 : index
    %697 = vector.load %arg8[%c0_438, %c144] : memref<1x256xf32, #tpu.memory_space<vmem>>, vector<1x16xf32>
    tpu.vector_store %arg8[%c0_438, %c144], %696 {strides = array<i32>} : memref<1x256xf32, #tpu.memory_space<vmem>>, vector<1x16xf32>,
    %698 = vector.extract_strided_slice %667 {offsets = [0, 10, 0], sizes = [1, 1, 16], strides = [1, 1, 1]} : vector<1x16x16xf32> to vector<1x1x16xf32>
    %699 = vector.shape_cast %698 : vector<1x1x16xf32> to vector<1x16xf32>
    %c0_439 = arith.constant 0 : index
    %c160 = arith.constant 160 : index
    %700 = vector.load %arg8[%c0_439, %c160] : memref<1x256xf32, #tpu.memory_space<vmem>>, vector<1x16xf32>
    tpu.vector_store %arg8[%c0_439, %c160], %699 {strides = array<i32>} : memref<1x256xf32, #tpu.memory_space<vmem>>, vector<1x16xf32>,
    %701 = vector.extract_strided_slice %667 {offsets = [0, 11, 0], sizes = [1, 1, 16], strides = [1, 1, 1]} : vector<1x16x16xf32> to vector<1x1x16xf32>
    %702 = vector.shape_cast %701 : vector<1x1x16xf32> to vector<1x16xf32>
    %c0_440 = arith.constant 0 : index
    %c176 = arith.constant 176 : index
    %703 = vector.load %arg8[%c0_440, %c176] : memref<1x256xf32, #tpu.memory_space<vmem>>, vector<1x16xf32>
    tpu.vector_store %arg8[%c0_440, %c176], %702 {strides = array<i32>} : memref<1x256xf32, #tpu.memory_space<vmem>>, vector<1x16xf32>,
    %704 = vector.extract_strided_slice %667 {offsets = [0, 12, 0], sizes = [1, 1, 16], strides = [1, 1, 1]} : vector<1x16x16xf32> to vector<1x1x16xf32>
    %705 = vector.shape_cast %704 : vector<1x1x16xf32> to vector<1x16xf32>
    %c0_441 = arith.constant 0 : index
    %c192 = arith.constant 192 : index
    %706 = vector.load %arg8[%c0_441, %c192] : memref<1x256xf32, #tpu.memory_space<vmem>>, vector<1x16xf32>
    tpu.vector_store %arg8[%c0_441, %c192], %705 {strides = array<i32>} : memref<1x256xf32, #tpu.memory_space<vmem>>, vector<1x16xf32>,
    %707 = vector.extract_strided_slice %667 {offsets = [0, 13, 0], sizes = [1, 1, 16], strides = [1, 1, 1]} : vector<1x16x16xf32> to vector<1x1x16xf32>
    %708 = vector.shape_cast %707 : vector<1x1x16xf32> to vector<1x16xf32>
    %c0_442 = arith.constant 0 : index
    %c208 = arith.constant 208 : index
    %709 = vector.load %arg8[%c0_442, %c208] : memref<1x256xf32, #tpu.memory_space<vmem>>, vector<1x16xf32>
    tpu.vector_store %arg8[%c0_442, %c208], %708 {strides = array<i32>} : memref<1x256xf32, #tpu.memory_space<vmem>>, vector<1x16xf32>,
    %710 = vector.extract_strided_slice %667 {offsets = [0, 14, 0], sizes = [1, 1, 16], strides = [1, 1, 1]} : vector<1x16x16xf32> to vector<1x1x16xf32>
    %711 = vector.shape_cast %710 : vector<1x1x16xf32> to vector<1x16xf32>
    %c0_443 = arith.constant 0 : index
    %c224 = arith.constant 224 : index
    %712 = vector.load %arg8[%c0_443, %c224] : memref<1x256xf32, #tpu.memory_space<vmem>>, vector<1x16xf32>
    tpu.vector_store %arg8[%c0_443, %c224], %711 {strides = array<i32>} : memref<1x256xf32, #tpu.memory_space<vmem>>, vector<1x16xf32>,
    %713 = vector.extract_strided_slice %667 {offsets = [0, 15, 0], sizes = [1, 1, 16], strides = [1, 1, 1]} : vector<1x16x16xf32> to vector<1x1x16xf32>
    %714 = vector.shape_cast %713 : vector<1x1x16xf32> to vector<1x16xf32>
    %c0_444 = arith.constant 0 : index
    %c240 = arith.constant 240 : index
    %715 = vector.load %arg8[%c0_444, %c240] : memref<1x256xf32, #tpu.memory_space<vmem>>, vector<1x16xf32>
    tpu.vector_store %arg8[%c0_444, %c240], %714 {strides = array<i32>} : memref<1x256xf32, #tpu.memory_space<vmem>>, vector<1x16xf32>,
    %c0_445 = arith.constant 0 : index
    %c0_446 = arith.constant 0 : index
    %716 = vector.load %arg8[%c0_445, %c0_446] : memref<1x256xf32, #tpu.memory_space<vmem>>, vector<1x256xf32>
    %717 = arith.negf %716 : vector<1x256xf32>
    %718 = math.exp %717 : vector<1x256xf32>
    %cst_447 = arith.constant 1.000000e+00 : f32
    %719 = vector.broadcast %cst_447 : f32 to vector<1x256xf32>
    %720 = arith.addf %719, %718 : vector<1x256xf32>
    %721 = arith.divf %719, %720 : vector<1x256xf32>
    %c0_448 = arith.constant 0 : index
    %c0_449 = arith.constant 0 : index
    %c0_450 = arith.constant 0 : index
    %722 = vector.load %arg1[%c0_448, %c0_449, %c0_450] : memref<1x4x256xf32, #tpu.memory_space<vmem>>, vector<1x4x256xf32>
    %723 = vector.shape_cast %16 : vector<1x4xf32> to vector<1x4x1xf32>
    %724 = vector.broadcast %723 : vector<1x4x1xf32> to vector<1x4x256xf32>
    %725 = arith.mulf %722, %724 : vector<1x4x256xf32>
    %726 = vector.shape_cast %721 : vector<1x256xf32> to vector<1x1x256xf32>
    %727 = vector.broadcast %726 : vector<1x1x256xf32> to vector<1x4x256xf32>
    %728 = arith.mulf %725, %727 : vector<1x4x256xf32>
    %c0_451 = arith.constant 0 : index
    %c0_452 = arith.constant 0 : index
    %c0_453 = arith.constant 0 : index
    %729 = vector.load %arg5[%c0_451, %c0_452, %c0_453] : memref<1x4x256xf32, #tpu.memory_space<vmem>>, vector<1x4x256xf32>
    tpu.vector_store %arg5[%c0_451, %c0_452, %c0_453], %728 {strides = array<i32>} : memref<1x4x256xf32, #tpu.memory_space<vmem>>, vector<1x4x256xf32>,
    return
  }
  func.func @transform_0(%arg0: i32) -> (i32, i32, i32) {
    %c0_i32 = arith.constant 0 : i32
    %c0_i32_0 = arith.constant 0 : i32
    %c0_i32_1 = arith.constant 0 : i32
    return %arg0, %c0_i32, %c0_i32_0 : i32, i32, i32
  }
  func.func @transform_1(%arg0: i32) -> (i32, i32) {
    %c0_i32 = arith.constant 0 : i32
    %c0_i32_0 = arith.constant 0 : i32
    %c0_i32_1 = arith.constant 0 : i32
    return %c0_i32, %c0_i32_0 : i32, i32
  }
  func.func @transform_2(%arg0: i32) -> (i32, i32) {
    %c0_i32 = arith.constant 0 : i32
    %c0_i32_0 = arith.constant 0 : i32
    %c0_i32_1 = arith.constant 0 : i32
    return %c0_i32, %c0_i32_0 : i32, i32
  }
  func.func @transform_3(%arg0: i32) -> i32 {
    %c0_i32 = arith.constant 0 : i32
    %c0_i32_0 = arith.constant 0 : i32
    return %c0_i32 : i32
  }
  func.func @transform_4(%arg0: i32) -> (i32, i32, i32) {
    %c0_i32 = arith.constant 0 : i32
    %c0_i32_0 = arith.constant 0 : i32
    %c0_i32_1 = arith.constant 0 : i32
    return %arg0, %c0_i32, %c0_i32_0 : i32, i32, i32
  }
}

</mosaic_0001>

<llo_original>
// kernel: tpu_custom_call.1
$region0: #{tpu_custom_call.1}
  #allocation0 [shape = 'u32[]', space=smem, size = 0x4, offset = 0x4, fixed_abs, tag = 'smem constant byte address 0x4 - core index']
  #allocation1 [shape = 'u32[144,128]{1,0:T(1,128)}', space=vmem, size = 0x12000, scoped, tag = 'internal scratch']
  #allocation2 [shape = 'f32[1,22,22]{2,1,0:T(8,128)}', space=vmem, size = 0x3000, scoped, tag = 'scratch operand']
  #allocation3 [shape = 'f32[1,22,22]{2,1,0:T(8,128)}', space=vmem, size = 0x3000, scoped, tag = 'scratch operand']
  #allocation4 [shape = 'f32[1,256]{1,0:T(1,128)}', space=vmem, size = 0x400, scoped, tag = 'scratch operand']
  %s0 = inlined_call_operand.hbm [shape: f32[2,4,256], index: 0, kind: input, shape index: {}]
  %s1 = inlined_call_operand.hbm [shape: f32[4,4], index: 1, kind: input, shape index: {}]
  %s2 = inlined_call_operand.vmem [shape: f32[1,4], index: 2, kind: input, shape index: {}]
  %s3 = inlined_call_operand.vmem [shape: f32[98], index: 3, kind: input, shape index: {}]
  %s4 = inlined_call_operand.hbm [shape: f32[2,4,256], index: 4, kind: output, shape index: {}]
  %s5 = sld [smem:[#allocation0]]
  $region61: #{tpu_custom_call.1} parent=0
    _
  %s7 = ssub.s32 1, %s5
  %s8 = scalar_select 0, %s7, %s5
  $region1: #{tpu_custom_call.1} parent=0
    #allocation5 [shape = 'u8[8192]{0}', space=vmem, size = 0x2000, scoped, tag = 'input window, operand 0']
    #allocation6 [shape = 's32[2]{0}', space=sflag, size = 0x8, scoped, tag = 'scoped memory for tpu_custom_call.1']
    #allocation7 [shape = 's32[2]{0}', space=sflag, size = 0x8, scoped, tag = 'scoped memory for tpu_custom_call.1']
    #allocation8 [shape = 's32[2]{0}', space=sflag, size = 0x8, scoped, tag = 'scoped memory for tpu_custom_call.1']
    #allocation9 [shape = 'u8[2048]{0}', space=vmem, size = 0x800, scoped, tag = 'input window, operand 1, single buffered']
    #allocation10 [shape = 's32[1]{0}', space=sflag, size = 0x4, scoped, tag = 'scoped memory for tpu_custom_call.1']
    #allocation11 [shape = 'u8[512]{0}', space=smem, size = 0x200, scoped, tag = 'input window, operand 3, single buffered']
    #allocation12 [shape = 'u8[8192]{0}', space=vmem, size = 0x2000, scoped, tag = 'output window, operand 0']
    %9 = vsyncpa [#allocation6], 0
    %s10 = scalar_lea.sflag [#allocation6], 1
    %11 = vsyncpa %s10, 0
    %12 = vsyncpa [#allocation10], 0
    %13 = vsyncpa [#allocation8], 0
    %14 = vsyncpa [#allocation7], 0
    %s15 = scalar_lea.sflag [#allocation7], 1
    %16 = vsyncpa %s15, 0
    loop: start=0, step=1, limit=4
    $region2: #{tpu_custom_call.1} parent=1 // loop_pre_header
      _
    $region3: #{tpu_custom_call.1} parent=1 // loop_header
      %s18 = sphi 0, %s22
      %p19 = scmp.ge.s32.totalorder %s18, 4
      %s28 = sphi 0, %s30
      %s31 = sphi 0, %s28
      %s32 = sphi 0, %s31
      %s48 = sphi 0, %s32
      %s52 = sphi 0, %s52
      %s54 = sphi 0, %s52
      %s55 = sphi 0, %s54
      %s69 = sphi 0, %s55
      %s73 = sphi 0, %s73
      %s75 = sphi 0, %s73
      %s76 = sphi 0, %s75
      %s90 = sphi 0, %s76
      %s94 = sphi 0, %s94
      %s96 = sphi 0, %s94
      %s97 = sphi 0, %s96
      %s111 = sphi 0, %s97
      %s117 = sphi 0, %s119
      %s120 = sphi 0, %s117
      %s121 = sphi 0, %s120
      %s137 = sphi 0, %s121
    $region4: #{tpu_custom_call.1} parent=1 // loop_header_branch
      %21 = sbr.rel (%p19) target = $region8
    $region5: #{tpu_custom_call.1} parent=1 // loop_body
      %s23 = ssub.s32 %s18, 1
      %s24 = ssub.s32 %s18, 2
      %s25 = sadd.s32 %s18, 1
      %s26 = ssub.s32 %s18, %s25
      %p27 = scmp.eq.s32.totalorder %s26, 0
      %s29 = sadd.s32 %s28, 1
      %s30 = scalar_select %p27, %s28, %s29
      %p33 = pneg %p27
      %p34 = scmp.eq.s32.totalorder %s18, 1
      %p35 = por %p33, %p34
      %p36 = scmp.ne.s32.totalorder %s28, %s31
      %p37 = scmp.eq.s32.totalorder %s18, 0
      %p38 = por %p36, %p37
      %p39 = scmp.ne.s32.totalorder %s28, %s31
      %p40 = scmp.eq.s32.totalorder %s23, 1
      %p41 = por %p39, %p40
      %p42 = scmp.ne.s32.totalorder %s31, %s32
      %p43 = scmp.eq.s32.totalorder %s23, 0
      %p44 = por %p42, %p43
      %p45 = scmp.ne.s32.totalorder %s31, %s32
      %p46 = scmp.eq.s32.totalorder %s24, 1
      %p47 = por %p45, %p46
      %p49 = scmp.ne.s32.totalorder %s32, %s48
      %p50 = scmp.eq.s32.totalorder %s24, 0
      %p51 = por %p49, %p50
      %s53 = sadd.s32 %s52, 1
      %p56 = scmp.eq.s32.totalorder %s18, 1
      %p57 = scmp.ne.s32.totalorder %s52, %s54
      %p58 = scmp.eq.s32.totalorder %s18, 0
      %p59 = por %p57, %p58
      %p60 = scmp.ne.s32.totalorder %s52, %s54
      %p61 = scmp.eq.s32.totalorder %s23, 1
      %p62 = por %p60, %p61
      %p63 = scmp.ne.s32.totalorder %s54, %s55
      %p64 = scmp.eq.s32.totalorder %s23, 0
      %p65 = por %p63, %p64
      %p66 = scmp.ne.s32.totalorder %s54, %s55
      %p67 = scmp.eq.s32.totalorder %s24, 1
      %p68 = por %p66, %p67
      %p70 = scmp.ne.s32.totalorder %s55, %s69
      %p71 = scmp.eq.s32.totalorder %s24, 0
      %p72 = por %p70, %p71
      %s74 = sadd.s32 %s73, 1
      %p77 = scmp.eq.s32.totalorder %s18, 1
      %p78 = scmp.ne.s32.totalorder %s73, %s75
      %p79 = scmp.eq.s32.totalorder %s18, 0
      %p80 = por %p78, %p79
      %p81 = scmp.ne.s32.totalorder %s73, %s75
      %p82 = scmp.eq.s32.totalorder %s23, 1
      %p83 = por %p81, %p82
      %p84 = scmp.ne.s32.totalorder %s75, %s76
      %p85 = scmp.eq.s32.totalorder %s23, 0
      %p86 = por %p84, %p85
      %p87 = scmp.ne.s32.totalorder %s75, %s76
      %p88 = scmp.eq.s32.totalorder %s24, 1
      %p89 = por %p87, %p88
      %p91 = scmp.ne.s32.totalorder %s76, %s90
      %p92 = scmp.eq.s32.totalorder %s24, 0
      %p93 = por %p91, %p92
      %s95 = sadd.s32 %s94, 1
      %p98 = scmp.eq.s32.totalorder %s18, 1
      %p99 = scmp.ne.s32.totalorder %s94, %s96
      %p100 = scmp.eq.s32.totalorder %s18, 0
      %p101 = por %p99, %p100
      %p102 = scmp.ne.s32.totalorder %s94, %s96
      %p103 = scmp.eq.s32.totalorder %s23, 1
      %p104 = por %p102, %p103
      %p105 = scmp.ne.s32.totalorder %s96, %s97
      %p106 = scmp.eq.s32.totalorder %s23, 0
      %p107 = por %p105, %p106
      %p108 = scmp.ne.s32.totalorder %s96, %s97
      %p109 = scmp.eq.s32.totalorder %s24, 1
      %p110 = por %p108, %p109
      %p112 = scmp.ne.s32.totalorder %s97, %s111
      %p113 = scmp.eq.s32.totalorder %s24, 0
      %p114 = por %p112, %p113
      %s115 = ssub.s32 %s18, %s25
      %p116 = scmp.eq.s32.totalorder %s115, 0
      %s118 = sadd.s32 %s117, 1
      %s119 = scalar_select %p116, %s117, %s118
      %p122 = pneg %p116
      %p123 = scmp.eq.s32.totalorder %s18, 1
      %p124 = por %p122, %p123
      %p125 = scmp.ne.s32.totalorder %s117, %s120
      %p126 = scmp.eq.s32.totalorder %s18, 0
      %p127 = por %p125, %p126
      %p128 = scmp.ne.s32.totalorder %s117, %s120
      %p129 = scmp.eq.s32.totalorder %s23, 1
      %p130 = por %p128, %p129
      %p131 = scmp.ne.s32.totalorder %s120, %s121
      %p132 = scmp.eq.s32.totalorder %s23, 0
      %p133 = por %p131, %p132
      %p134 = scmp.ne.s32.totalorder %s120, %s121
      %p135 = scmp.eq.s32.totalorder %s24, 1
      %p136 = por %p134, %p135
      %p138 = scmp.ne.s32.totalorder %s121, %s137
      %p139 = scmp.eq.s32.totalorder %s24, 0
      %p140 = por %p138, %p139
      %p141 = scmp.le.s32.totalorder 1, %s18
      %p142 = scmp.lt.s32.totalorder %s18, 3
      %p143 = pnand %p141, %p142
      %p144 = pneg %p143
      // Predicated region
      $region9: #{tpu_custom_call.1} parent=5 // pred_check
        _
      $region10: #{tpu_custom_call.1} parent=5 // pred_check_branch
        %146 = sbr.rel (%p143) target = $region12
      $region11: #{tpu_custom_call.1} parent=5 // pred_region
        %s147 = ssub.s32 %s18, 1
        // Predicated region
        $region13: #{tpu_custom_call.1} parent=11 // pred_check
          %p148 = pneg %p65
        $region14: #{tpu_custom_call.1} parent=11 // pred_check_branch
          %150 = sbr.rel (%p148) target = $region16
        $region15: #{tpu_custom_call.1} parent=11 // pred_region
          %s152 = ssub.s32 64, 64
          %153 = vsyncadd [#allocation10], %s152
          %s155 = sshll.u32 [#allocation9], 4
          %s156 = int_to_ptr.vmem [resolvable:$true] %s155
          %158 = dma.hbm_to_vmem [thread:$0]  %s1, 64, %s156, [#allocation10]
        $region16: #{tpu_custom_call.1} parent=11 // pred_fallthru
          _
        // Predicated region
        $region17: #{tpu_custom_call.1} parent=11 // pred_check
          %p159 = pneg %p86
        $region18: #{tpu_custom_call.1} parent=11 // pred_check_branch
          %161 = sbr.rel (%p159) target = $region20
        $region19: #{tpu_custom_call.1} parent=11 // pred_region
          _
        $region20: #{tpu_custom_call.1} parent=11 // pred_fallthru
          _
        // Predicated region
        $region21: #{tpu_custom_call.1} parent=11 // pred_check
          %p162 = pneg %p107
        $region22: #{tpu_custom_call.1} parent=11 // pred_check_branch
          %164 = sbr.rel (%p162) target = $region24
        $region23: #{tpu_custom_call.1} parent=11 // pred_region
          %s166 = ssub.s32 16, 16
          %167 = vsyncadd [#allocation8], %s166
          %s169 = sshll.u32 %s3, 4
          %s170 = int_to_ptr.vmem [resolvable:$true] %s169
          %172 = dma.vmem_to_smem %s170, 16, [#allocation11], [#allocation8]
        $region24: #{tpu_custom_call.1} parent=11 // pred_fallthru
          _
      $region12: #{tpu_custom_call.1} parent=5 // pred_fallthru
        _
      %p173 = scmp.lt.s32.totalorder %s18, 2
      // Predicated region
      $region25: #{tpu_custom_call.1} parent=5 // pred_check
        %p174 = pneg %p173
      $region26: #{tpu_custom_call.1} parent=5 // pred_check_branch
        %176 = sbr.rel (%p174) target = $region28
      $region27: #{tpu_custom_call.1} parent=5 // pred_region
        // Predicated region
        $region29: #{tpu_custom_call.1} parent=27 // pred_check
          %p177 = pneg %p38
        $region30: #{tpu_custom_call.1} parent=27 // pred_check_branch
          %179 = sbr.rel (%p177) target = $region32
        $region31: #{tpu_custom_call.1} parent=27 // pred_region
          %s180 = sand.u32 %s28, 1
          %s181 = scalar_lea.sflag [#allocation6], %s180
          %s182 = sand.u32 %s28, 1
          %s183 = smul.addr %s182, 8
          %s184 = scalar_lea.vmem [#allocation5], %s183
          %s186 = ssub.s32 128, 128
          %187 = vsyncadd %s181, %s186
          %s188 = smul.addr %s18, 2
          %s189 = smul.addr %s188, 64
          %s190 = scalar_lea.hbm %s0, %s189
          %s192 = sshll.u32 %s184, 4
          %s193 = int_to_ptr.vmem [resolvable:$true] %s192
          %195 = dma.hbm_to_vmem [thread:$0]  %s190, 128, %s193, %s181
        $region32: #{tpu_custom_call.1} parent=27 // pred_fallthru
          _
      $region28: #{tpu_custom_call.1} parent=5 // pred_fallthru
        _
      %p196 = scmp.le.s32.totalorder 1, %s18
      %p197 = scmp.lt.s32.totalorder %s18, 3
      %p198 = pnand %p196, %p197
      %p199 = pneg %p198
      // Predicated region
      $region33: #{tpu_custom_call.1} parent=5 // pred_check
        _
      $region34: #{tpu_custom_call.1} parent=5 // pred_check_branch
        %201 = sbr.rel (%p198) target = $region36
      $region35: #{tpu_custom_call.1} parent=5 // pred_region
        %s202 = ssub.s32 %s18, 1
        %s203 = sand.u32 %s31, 1
        %s204 = scalar_lea.sflag [#allocation6], %s203
        %s205 = sand.u32 %s31, 1
        %s206 = smul.addr %s205, 8
        %s207 = scalar_lea.vmem [#allocation5], %s206
        // Predicated region
        $region37: #{tpu_custom_call.1} parent=35 // pred_check
          %p208 = pneg %p44
        $region38: #{tpu_custom_call.1} parent=35 // pred_check_branch
          %210 = sbr.rel (%p208) target = $region40
        $region39: #{tpu_custom_call.1} parent=35 // pred_region
          %211 = dma.done %s204, 128
        $region40: #{tpu_custom_call.1} parent=35 // pred_fallthru
          _
        // Predicated region
        $region41: #{tpu_custom_call.1} parent=35 // pred_check
          %p212 = pneg %p65
        $region42: #{tpu_custom_call.1} parent=35 // pred_check_branch
          %214 = sbr.rel (%p212) target = $region44
        $region43: #{tpu_custom_call.1} parent=35 // pred_region
          %215 = dma.done [#allocation10], 64
        $region44: #{tpu_custom_call.1} parent=35 // pred_fallthru
          _
        // Predicated region
        $region45: #{tpu_custom_call.1} parent=35 // pred_check
          %p216 = pneg %p107
        $region46: #{tpu_custom_call.1} parent=35 // pred_check_branch
          %218 = sbr.rel (%p216) target = $region48
        $region47: #{tpu_custom_call.1} parent=35 // pred_region
          %219 = dma.done [#allocation8], 16
        $region48: #{tpu_custom_call.1} parent=35 // pred_fallthru
          _
        %220 = sfence
        %s221 = sand.u32 %s31, 1
        %s222 = scalar_lea.sflag [#allocation6], %s221
        %s223 = sand.u32 %s31, 1
        %s224 = smul.addr %s223, 8
        %s225 = scalar_lea.vmem [#allocation5], %s224
        %p226 = pneg %p44
        %p227 = pneg %p41
        %p228 = pneg %p65
        %p229 = pneg %p62
        %p230 = pneg %p86
        %p231 = pneg %p83
        %p232 = pneg %p107
        %p233 = pneg %p104
        %p234 = pneg %p133
        %p235 = pneg %p130
        %s236 = sand.u32 %s120, 1
        %s237 = scalar_lea.sflag [#allocation7], %s236
        %s238 = sand.u32 %s120, 1
        %s239 = smul.addr %s238, 8
        %s240 = scalar_lea.vmem [#allocation12], %s239
        %v241 = vld [vmem:[%s207] sm:$0xff]
        %v243 = vcombine.high %v241, %v241
        %vm245 = vcmask 1043456
        %v246 = vsel %vm245, %v241, 0.0
        %v247 = vsel %vm245, %v243, 0.0
        %v248 = vadd.f32 %v246, %v247
        %249 = vadd.xlane.f32.xlu0 %v248
        %v250 = vpop.xlane.xlu0 %249
        %v251 = vmul.f32 %v250, 0.00390625
        %v252 = vld [vmem:[#allocation9] sm:$0xf]
        %v253 = vmul.f32 %v251, %v252
        %vm254 = vcmask 27648
        %v255 = vsel %vm254, %v253, 0.0
        %v256 = vrot.slane %v255, 4
        %v257 = vadd.f32 %v255, %v256
        %v258 = vrot.slane %v257, 2
        %v259 = vadd.f32 %v257, %v258
        %v260 = vrot.slane %v259, 1
        %v261 = vadd.f32 %v259, %v260
        %v262 = vld [vmem:[%s2] sm:$0x1]
        %v263 = vadd.f32 %v261, %v262
        %v264 = vxor.u32 %v263, 2147483648
        %v265 = vmul.f32 %v264, 1.442695
        %v266 = vpow.pop %v265
        %v267 = vadd.f32 %v266, 1.0
        %v268 = vrcp.pop %v267
        %v269 = vmul.f32 1.0, %v268
        %v270 = vld [vmem:[%s207] ss:$4 sm:$0x3]
        %272 = vset.pattern.permute.xlu0 0
        %273 = vperm.xlu0 %272, %v269
        %v274 = vpop.permute.xlu0 %273
        %v275 = vlaneseq
        %v276 = vshrl.u32 %v275, 7
        %v277 = vsub.s32 0, %v276
        %v278 = vrot.slane %v274, %v277
        %v280 = vmul.f32 %v270, %v278
        %s281 = scalar_lea.vmem %s207, 1 [#allocation5]
        %v282 = vld [vmem:[%s281] ss:$4 sm:$0x3]
        %283 = vset.pattern.permute.xlu0 1
        %284 = vperm.xlu0 %283, %v269
        %v285 = vpop.permute.xlu0 %284
        %v286 = vlaneseq
        %v287 = vshrl.u32 %v286, 7
        %v288 = vsub.s32 0, %v287
        %v289 = vrot.slane %v285, %v288
        %v291 = vmul.f32 %v282, %v289
        %v292 = vadd.f32 %v280, %v291
        %v293 = vmax.f32 %v280, %v291
        %s294 = scalar_lea.vmem %s207, 2 [#allocation5]
        %v295 = vld [vmem:[%s294] ss:$4 sm:$0x3]
        %296 = vset.pattern.permute.xlu0 2
        %297 = vperm.xlu0 %296, %v269
        %v298 = vpop.permute.xlu0 %297
        %v299 = vlaneseq
        %v300 = vshrl.u32 %v299, 7
        %v301 = vsub.s32 0, %v300
        %v302 = vrot.slane %v298, %v301
        %v304 = vmul.f32 %v295, %v302
        %v305 = vadd.f32 %v292, %v304
        %v306 = vmax.f32 %v293, %v304
        %s307 = scalar_lea.vmem %s207, 3 [#allocation5]
        %v308 = vld [vmem:[%s307] ss:$4 sm:$0x3]
        %309 = vset.pattern.permute.xlu0 3
        %310 = vperm.xlu0 %309, %v269
        %v311 = vpop.permute.xlu0 %310
        %v312 = vlaneseq
        %v313 = vshrl.u32 %v312, 7
        %v314 = vsub.s32 0, %v313
        %v315 = vrot.slane %v311, %v314
        %v317 = vmul.f32 %v308, %v315
        %v318 = vadd.f32 %v305, %v317
        %v319 = vmax.f32 %v306, %v317
        %v320 = vmul.f32 %v318, 0.25
        %vm321 = vcmask 179200
        %322 = vst.msk [vmem:[#allocation2] sm:$0xff] %vm321, 0.0
        %323 = vst.msk [vmem:[#allocation2 + $0x8] sm:$0xff] %vm321, 0.0
        %vm324 = vcmask 177152
        %325 = vst.msk [vmem:[#allocation2 + $0x10] sm:$0x3f] %vm324, 0.0
        %326 = vst.msk [vmem:[#allocation3] sm:$0xff] %vm321, 0.0
        %327 = vst.msk [vmem:[#allocation3 + $0x8] sm:$0xff] %vm321, 0.0
        %328 = vst.msk [vmem:[#allocation3 + $0x10] sm:$0x3f] %vm324, 0.0
        %v330 = vlaneseq
        %v331 = vshrl.u32 %v330, 7
        %v332 = vsub.s32 0, %v331
        %v333 = vrot.slane %v320, %v332
        %334 = vrot.lane.b32.xlu0 %v333, 3
        %v335 = vpop.permute.xlu0 %334
        %vm337 = vcmask 147480
        %338 = vst.msk [vmem:[#allocation2 + $0x3] sm:$0x1] %vm337, %v335
        %v340 = vlaneseq
        %v341 = vshrl.u32 %v340, 7
        %v342 = vsub.s32 0, %v341
        %v343 = vrot.slane %v319, %v342
        %344 = vrot.lane.b32.xlu0 %v343, 3
        %v345 = vpop.permute.xlu0 %344
        %347 = vst.msk [vmem:[#allocation3 + $0x3] sm:$0x1] %vm337, %v345
        %348 = vrot.lane.b32.xlu0 %v333, 115
        %v349 = vpop.permute.xlu0 %348
        %351 = vst.msk [vmem:[#allocation2 + $0x4] sm:$0x1] %vm337, %v349
        %352 = vrot.lane.b32.xlu0 %v343, 115
        %v353 = vpop.permute.xlu0 %352
        %355 = vst.msk [vmem:[#allocation3 + $0x4] sm:$0x1] %vm337, %v353
        %356 = vrot.lane.b32.xlu0 %v333, 99
        %v357 = vpop.permute.xlu0 %356
        %359 = vst.msk [vmem:[#allocation2 + $0x5] sm:$0x1] %vm337, %v357
        %360 = vrot.lane.b32.xlu0 %v343, 99
        %v361 = vpop.permute.xlu0 %360
        %363 = vst.msk [vmem:[#allocation3 + $0x5] sm:$0x1] %vm337, %v361
        %364 = vrot.lane.b32.xlu0 %v333, 83
        %v365 = vpop.permute.xlu0 %364
        %367 = vst.msk [vmem:[#allocation2 + $0x6] sm:$0x1] %vm337, %v365
        %368 = vrot.lane.b32.xlu0 %v343, 83
        %v369 = vpop.permute.xlu0 %368
        %371 = vst.msk [vmem:[#allocation3 + $0x6] sm:$0x1] %vm337, %v369
        %372 = vrot.lane.b32.xlu0 %v333, 67
        %v373 = vpop.permute.xlu0 %372
        %375 = vst.msk [vmem:[#allocation2 + $0x7] sm:$0x1] %vm337, %v373
        %376 = vrot.lane.b32.xlu0 %v343, 67
        %v377 = vpop.permute.xlu0 %376
        %379 = vst.msk [vmem:[#allocation3 + $0x7] sm:$0x1] %vm337, %v377
        %380 = vrot.lane.b32.xlu0 %v333, 51
        %v381 = vpop.permute.xlu0 %380
        %383 = vst.msk [vmem:[#allocation2 + $0x8] sm:$0x1] %vm337, %v381
        %384 = vrot.lane.b32.xlu0 %v343, 51
        %v385 = vpop.permute.xlu0 %384
        %387 = vst.msk [vmem:[#allocation3 + $0x8] sm:$0x1] %vm337, %v385
        %388 = vrot.lane.b32.xlu0 %v333, 35
        %v389 = vpop.permute.xlu0 %388
        %391 = vst.msk [vmem:[#allocation2 + $0x9] sm:$0x1] %vm337, %v389
        %392 = vrot.lane.b32.xlu0 %v343, 35
        %v393 = vpop.permute.xlu0 %392
        %395 = vst.msk [vmem:[#allocation3 + $0x9] sm:$0x1] %vm337, %v393
        %396 = vrot.lane.b32.xlu0 %v333, 19
        %v397 = vpop.permute.xlu0 %396
        %399 = vst.msk [vmem:[#allocation2 + $0xa] sm:$0x1] %vm337, %v397
        %400 = vrot.lane.b32.xlu0 %v343, 19
        %v401 = vpop.permute.xlu0 %400
        %403 = vst.msk [vmem:[#allocation3 + $0xa] sm:$0x1] %vm337, %v401
        %v404 = vrot.slane %v320, 1
        %v405 = vlaneseq
        %v406 = vshrl.u32 %v405, 7
        %v407 = vsub.s32 0, %v406
        %v408 = vrot.slane %v404, %v407
        %409 = vrot.lane.b32.xlu0 %v408, 3
        %v410 = vpop.permute.xlu0 %409
        %412 = vst.msk [vmem:[#allocation2 + $0xb] sm:$0x1] %vm337, %v410
        %v413 = vrot.slane %v319, 1
        %v414 = vlaneseq
        %v415 = vshrl.u32 %v414, 7
        %v416 = vsub.s32 0, %v415
        %v417 = vrot.slane %v413, %v416
        %418 = vrot.lane.b32.xlu0 %v417, 3
        %v419 = vpop.permute.xlu0 %418
        %421 = vst.msk [vmem:[#allocation3 + $0xb] sm:$0x1] %vm337, %v419
        %422 = vrot.lane.b32.xlu0 %v320, 112
        %v423 = vpop.permute.xlu0 %422
        %v424 = vrot.slane %v423, 1
        %v425 = vlaneseq
        %v426 = vshrl.u32 %v425, 7
        %v427 = vsub.s32 0, %v426
        %v428 = vrot.slane %v424, %v427
        %429 = vrot.lane.b32.xlu0 %v428, 3
        %v430 = vpop.permute.xlu0 %429
        %432 = vst.msk [vmem:[#allocation2 + $0xc] sm:$0x1] %vm337, %v430
        %433 = vrot.lane.b32.xlu0 %v319, 112
        %v434 = vpop.permute.xlu0 %433
        %v435 = vrot.slane %v434, 1
        %v436 = vlaneseq
        %v437 = vshrl.u32 %v436, 7
        %v438 = vsub.s32 0, %v437
        %v439 = vrot.slane %v435, %v438
        %440 = vrot.lane.b32.xlu0 %v439, 3
        %v441 = vpop.permute.xlu0 %440
        %443 = vst.msk [vmem:[#allocation3 + $0xc] sm:$0x1] %vm337, %v441
        %444 = vrot.lane.b32.xlu0 %v320, 96
        %v445 = vpop.permute.xlu0 %444
        %v446 = vrot.slane %v445, 1
        %v447 = vlaneseq
        %v448 = vshrl.u32 %v447, 7
        %v449 = vsub.s32 0, %v448
        %v450 = vrot.slane %v446, %v449
        %451 = vrot.lane.b32.xlu0 %v450, 3
        %v452 = vpop.permute.xlu0 %451
        %454 = vst.msk [vmem:[#allocation2 + $0xd] sm:$0x1] %vm337, %v452
        %455 = vrot.lane.b32.xlu0 %v319, 96
        %v456 = vpop.permute.xlu0 %455
        %v457 = vrot.slane %v456, 1
        %v458 = vlaneseq
        %v459 = vshrl.u32 %v458, 7
        %v460 = vsub.s32 0, %v459
        %v461 = vrot.slane %v457, %v460
        %462 = vrot.lane.b32.xlu0 %v461, 3
        %v463 = vpop.permute.xlu0 %462
        %465 = vst.msk [vmem:[#allocation3 + $0xd] sm:$0x1] %vm337, %v463
        %466 = vrot.lane.b32.xlu0 %v320, 80
        %v467 = vpop.permute.xlu0 %466
        %v468 = vrot.slane %v467, 1
        %v469 = vlaneseq
        %v470 = vshrl.u32 %v469, 7
        %v471 = vsub.s32 0, %v470
        %v472 = vrot.slane %v468, %v471
        %473 = vrot.lane.b32.xlu0 %v472, 3
        %v474 = vpop.permute.xlu0 %473
        %476 = vst.msk [vmem:[#allocation2 + $0xe] sm:$0x1] %vm337, %v474
        %477 = vrot.lane.b32.xlu0 %v319, 80
        %v478 = vpop.permute.xlu0 %477
        %v479 = vrot.slane %v478, 1
        %v480 = vlaneseq
        %v481 = vshrl.u32 %v480, 7
        %v482 = vsub.s32 0, %v481
        %v483 = vrot.slane %v479, %v482
        %484 = vrot.lane.b32.xlu0 %v483, 3
        %v485 = vpop.permute.xlu0 %484
        %487 = vst.msk [vmem:[#allocation3 + $0xe] sm:$0x1] %vm337, %v485
        %488 = vrot.lane.b32.xlu0 %v320, 64
        %v489 = vpop.permute.xlu0 %488
        %v490 = vrot.slane %v489, 1
        %v491 = vlaneseq
        %v492 = vshrl.u32 %v491, 7
        %v493 = vsub.s32 0, %v492
        %v494 = vrot.slane %v490, %v493
        %495 = vrot.lane.b32.xlu0 %v494, 3
        %v496 = vpop.permute.xlu0 %495
        %498 = vst.msk [vmem:[#allocation2 + $0xf] sm:$0x1] %vm337, %v496
        %499 = vrot.lane.b32.xlu0 %v319, 64
        %v500 = vpop.permute.xlu0 %499
        %v501 = vrot.slane %v500, 1
        %v502 = vlaneseq
        %v503 = vshrl.u32 %v502, 7
        %v504 = vsub.s32 0, %v503
        %v505 = vrot.slane %v501, %v504
        %506 = vrot.lane.b32.xlu0 %v505, 3
        %v507 = vpop.permute.xlu0 %506
        %509 = vst.msk [vmem:[#allocation3 + $0xf] sm:$0x1] %vm337, %v507
        %510 = vrot.lane.b32.xlu0 %v320, 48
        %v511 = vpop.permute.xlu0 %510
        %v512 = vrot.slane %v511, 1
        %v513 = vlaneseq
        %v514 = vshrl.u32 %v513, 7
        %v515 = vsub.s32 0, %v514
        %v516 = vrot.slane %v512, %v515
        %517 = vrot.lane.b32.xlu0 %v516, 3
        %v518 = vpop.permute.xlu0 %517
        %520 = vst.msk [vmem:[#allocation2 + $0x10] sm:$0x1] %vm337, %v518
        %521 = vrot.lane.b32.xlu0 %v319, 48
        %v522 = vpop.permute.xlu0 %521
        %v523 = vrot.slane %v522, 1
        %v524 = vlaneseq
        %v525 = vshrl.u32 %v524, 7
        %v526 = vsub.s32 0, %v525
        %v527 = vrot.slane %v523, %v526
        %528 = vrot.lane.b32.xlu0 %v527, 3
        %v529 = vpop.permute.xlu0 %528
        %531 = vst.msk [vmem:[#allocation3 + $0x10] sm:$0x1] %vm337, %v529
        %532 = vrot.lane.b32.xlu0 %v320, 32
        %v533 = vpop.permute.xlu0 %532
        %v534 = vrot.slane %v533, 1
        %v535 = vlaneseq
        %v536 = vshrl.u32 %v535, 7
        %v537 = vsub.s32 0, %v536
        %v538 = vrot.slane %v534, %v537
        %539 = vrot.lane.b32.xlu0 %v538, 3
        %v540 = vpop.permute.xlu0 %539
        %542 = vst.msk [vmem:[#allocation2 + $0x11] sm:$0x1] %vm337, %v540
        %543 = vrot.lane.b32.xlu0 %v319, 32
        %v544 = vpop.permute.xlu0 %543
        %v545 = vrot.slane %v544, 1
        %v546 = vlaneseq
        %v547 = vshrl.u32 %v546, 7
        %v548 = vsub.s32 0, %v547
        %v549 = vrot.slane %v545, %v548
        %550 = vrot.lane.b32.xlu0 %v549, 3
        %v551 = vpop.permute.xlu0 %550
        %553 = vst.msk [vmem:[#allocation3 + $0x11] sm:$0x1] %vm337, %v551
        %554 = vrot.lane.b32.xlu0 %v320, 16
        %v555 = vpop.permute.xlu0 %554
        %v556 = vrot.slane %v555, 1
        %v557 = vlaneseq
        %v558 = vshrl.u32 %v557, 7
        %v559 = vsub.s32 0, %v558
        %v560 = vrot.slane %v556, %v559
        %561 = vrot.lane.b32.xlu0 %v560, 3
        %v562 = vpop.permute.xlu0 %561
        %564 = vst.msk [vmem:[#allocation2 + $0x12] sm:$0x1] %vm337, %v562
        %565 = vrot.lane.b32.xlu0 %v319, 16
        %v566 = vpop.permute.xlu0 %565
        %v567 = vrot.slane %v566, 1
        %v568 = vlaneseq
        %v569 = vshrl.u32 %v568, 7
        %v570 = vsub.s32 0, %v569
        %v571 = vrot.slane %v567, %v570
        %572 = vrot.lane.b32.xlu0 %v571, 3
        %v573 = vpop.permute.xlu0 %572
        %575 = vst.msk [vmem:[#allocation3 + $0x12] sm:$0x1] %vm337, %v573
        %s576 = sld [smem:[#allocation11]]
        %s577 = sld [smem:[#allocation11 + $0x31]]
        %v578 = vld [vmem:[#allocation2] sm:$0xff]
        %v579 = vld [vmem:[#allocation2 + $0x8] sm:$0xff]
        %v580 = vstv %s576
        %v581 = vmul.f32 %v580, %v578
        %v582 = vmul.f32 %v580, %v579
        %v583 = vadd.f32 %v581, 0.0
        %v584 = vadd.f32 %v582, 0.0
        %v585 = vld [vmem:[#allocation3] sm:$0xff]
        %v586 = vld [vmem:[#allocation3 + $0x8] sm:$0xff]
        %v587 = vstv %s577
        %v588 = vmul.f32 %v587, %v585
        %v589 = vmul.f32 %v587, %v586
        %v590 = vadd.f32 %v583, %v588
        %v591 = vadd.f32 %v584, %v589
        %s592 = sld [smem:[#allocation11 + $0x1]]
        %s593 = sld [smem:[#allocation11 + $0x32]]
        %v594 = vstv %s592
        %v595 = vmul.f32 %v594, %v578
        %v596 = vmul.f32 %v594, %v579
        %599 = vrot.lane.b32.xlu0 %v595, 127
        %v600 = vpop.permute.xlu0 %599
        %601 = vrot.lane.b32.xlu0 %v596, 127
        %v602 = vpop.permute.xlu0 %601
        %v605 = vadd.f32 %v590, %v600
        %v606 = vadd.f32 %v591, %v602
        %v607 = vstv %s593
        %v608 = vmul.f32 %v607, %v585
        %v609 = vmul.f32 %v607, %v586
        %612 = vrot.lane.b32.xlu0 %v608, 127
        %v613 = vpop.permute.xlu0 %612
        %614 = vrot.lane.b32.xlu0 %v609, 127
        %v615 = vpop.permute.xlu0 %614
        %v618 = vadd.f32 %v605, %v613
        %v619 = vadd.f32 %v606, %v615
        %s620 = sld [smem:[#allocation11 + $0x2]]
        %s621 = sld [smem:[#allocation11 + $0x33]]
        %v622 = vstv %s620
        %v623 = vmul.f32 %v622, %v578
        %v624 = vmul.f32 %v622, %v579
        %627 = vrot.lane.b32.xlu0 %v623, 126
        %v628 = vpop.permute.xlu0 %627
        %629 = vrot.lane.b32.xlu0 %v624, 126
        %v630 = vpop.permute.xlu0 %629
        %v633 = vadd.f32 %v618, %v628
        %v634 = vadd.f32 %v619, %v630
        %v635 = vstv %s621
        %v636 = vmul.f32 %v635, %v585
        %v637 = vmul.f32 %v635, %v586
        %640 = vrot.lane.b32.xlu0 %v636, 126
        %v641 = vpop.permute.xlu0 %640
        %642 = vrot.lane.b32.xlu0 %v637, 126
        %v643 = vpop.permute.xlu0 %642
        %v646 = vadd.f32 %v633, %v641
        %v647 = vadd.f32 %v634, %v643
        %s648 = sld [smem:[#allocation11 + $0x3]]
        %s649 = sld [smem:[#allocation11 + $0x34]]
        %v650 = vstv %s648
        %v651 = vmul.f32 %v650, %v578
        %v652 = vmul.f32 %v650, %v579
        %655 = vrot.lane.b32.xlu0 %v651, 125
        %v656 = vpop.permute.xlu0 %655
        %657 = vrot.lane.b32.xlu0 %v652, 125
        %v658 = vpop.permute.xlu0 %657
        %v661 = vadd.f32 %v646, %v656
        %v662 = vadd.f32 %v647, %v658
        %v663 = vstv %s649
        %v664 = vmul.f32 %v663, %v585
        %v665 = vmul.f32 %v663, %v586
        %668 = vrot.lane.b32.xlu0 %v664, 125
        %v669 = vpop.permute.xlu0 %668
        %670 = vrot.lane.b32.xlu0 %v665, 125
        %v671 = vpop.permute.xlu0 %670
        %v674 = vadd.f32 %v661, %v669
        %v675 = vadd.f32 %v662, %v671
        %s676 = sld [smem:[#allocation11 + $0x4]]
        %s677 = sld [smem:[#allocation11 + $0x35]]
        %v678 = vstv %s676
        %v679 = vmul.f32 %v678, %v578
        %v680 = vmul.f32 %v678, %v579
        %683 = vrot.lane.b32.xlu0 %v679, 124
        %v684 = vpop.permute.xlu0 %683
        %685 = vrot.lane.b32.xlu0 %v680, 124
        %v686 = vpop.permute.xlu0 %685
        %v689 = vadd.f32 %v674, %v684
        %v690 = vadd.f32 %v675, %v686
        %v691 = vstv %s677
        %v692 = vmul.f32 %v691, %v585
        %v693 = vmul.f32 %v691, %v586
        %696 = vrot.lane.b32.xlu0 %v692, 124
        %v697 = vpop.permute.xlu0 %696
        %698 = vrot.lane.b32.xlu0 %v693, 124
        %v699 = vpop.permute.xlu0 %698
        %v702 = vadd.f32 %v689, %v697
        %v703 = vadd.f32 %v690, %v699
        %s704 = sld [smem:[#allocation11 + $0x5]]
        %s705 = sld [smem:[#allocation11 + $0x36]]
        %v706 = vstv %s704
        %v707 = vmul.f32 %v706, %v578
        %v708 = vmul.f32 %v706, %v579
        %711 = vrot.lane.b32.xlu0 %v707, 123
        %v712 = vpop.permute.xlu0 %711
        %713 = vrot.lane.b32.xlu0 %v708, 123
        %v714 = vpop.permute.xlu0 %713
        %v717 = vadd.f32 %v702, %v712
        %v718 = vadd.f32 %v703, %v714
        %v719 = vstv %s705
        %v720 = vmul.f32 %v719, %v585
        %v721 = vmul.f32 %v719, %v586
        %724 = vrot.lane.b32.xlu0 %v720, 123
        %v725 = vpop.permute.xlu0 %724
        %726 = vrot.lane.b32.xlu0 %v721, 123
        %v727 = vpop.permute.xlu0 %726
        %v730 = vadd.f32 %v717, %v725
        %v731 = vadd.f32 %v718, %v727
        %s732 = sld [smem:[#allocation11 + $0x6]]
        %s733 = sld [smem:[#allocation11 + $0x37]]
        %v734 = vstv %s732
        %v735 = vmul.f32 %v734, %v578
        %v736 = vmul.f32 %v734, %v579
        %739 = vrot.lane.b32.xlu0 %v735, 122
        %v740 = vpop.permute.xlu0 %739
        %741 = vrot.lane.b32.xlu0 %v736, 122
        %v742 = vpop.permute.xlu0 %741
        %v745 = vadd.f32 %v730, %v740
        %v746 = vadd.f32 %v731, %v742
        %v747 = vstv %s733
        %v748 = vmul.f32 %v747, %v585
        %v749 = vmul.f32 %v747, %v586
        %752 = vrot.lane.b32.xlu0 %v748, 122
        %v753 = vpop.permute.xlu0 %752
        %754 = vrot.lane.b32.xlu0 %v749, 122
        %v755 = vpop.permute.xlu0 %754
        %v758 = vadd.f32 %v745, %v753
        %v759 = vadd.f32 %v746, %v755
        %s760 = sld [smem:[#allocation11 + $0x7]]
        %s761 = sld [smem:[#allocation11 + $0x38]]
        %v762 = vld [vmem:[#allocation2 + $0x1] sm:$0xff]
        %v763 = vld [vmem:[#allocation2 + $0x9] sm:$0xff]
        %v764 = vstv %s760
        %v765 = vmul.f32 %v764, %v762
        %v766 = vmul.f32 %v764, %v763
        %v767 = vadd.f32 %v758, %v765
        %v768 = vadd.f32 %v759, %v766
        %v769 = vld [vmem:[#allocation3 + $0x1] sm:$0xff]
        %v770 = vld [vmem:[#allocation3 + $0x9] sm:$0xff]
        %v771 = vstv %s761
        %v772 = vmul.f32 %v771, %v769
        %v773 = vmul.f32 %v771, %v770
        %v774 = vadd.f32 %v767, %v772
        %v775 = vadd.f32 %v768, %v773
        %s776 = sld [smem:[#allocation11 + $0x8]]
        %s777 = sld [smem:[#allocation11 + $0x39]]
        %v778 = vstv %s776
        %v779 = vmul.f32 %v778, %v762
        %v780 = vmul.f32 %v778, %v763
        %783 = vrot.lane.b32.xlu0 %v779, 127
        %v784 = vpop.permute.xlu0 %783
        %785 = vrot.lane.b32.xlu0 %v780, 127
        %v786 = vpop.permute.xlu0 %785
        %v789 = vadd.f32 %v774, %v784
        %v790 = vadd.f32 %v775, %v786
        %v791 = vstv %s777
        %v792 = vmul.f32 %v791, %v769
        %v793 = vmul.f32 %v791, %v770
        %796 = vrot.lane.b32.xlu0 %v792, 127
        %v797 = vpop.permute.xlu0 %796
        %798 = vrot.lane.b32.xlu0 %v793, 127
        %v799 = vpop.permute.xlu0 %798
        %v802 = vadd.f32 %v789, %v797
        %v803 = vadd.f32 %v790, %v799
        %s804 = sld [smem:[#allocation11 + $0x9]]
        %s805 = sld [smem:[#allocation11 + $0x3a]]
        %v806 = vstv %s804
        %v807 = vmul.f32 %v806, %v762
        %v808 = vmul.f32 %v806, %v763
        %811 = vrot.lane.b32.xlu0 %v807, 126
        %v812 = vpop.permute.xlu0 %811
        %813 = vrot.lane.b32.xlu0 %v808, 126
        %v814 = vpop.permute.xlu0 %813
        %v817 = vadd.f32 %v802, %v812
        %v818 = vadd.f32 %v803, %v814
        %v819 = vstv %s805
        %v820 = vmul.f32 %v819, %v769
        %v821 = vmul.f32 %v819, %v770
        %824 = vrot.lane.b32.xlu0 %v820, 126
        %v825 = vpop.permute.xlu0 %824
        %826 = vrot.lane.b32.xlu0 %v821, 126
        %v827 = vpop.permute.xlu0 %826
        %v830 = vadd.f32 %v817, %v825
        %v831 = vadd.f32 %v818, %v827
        %s832 = sld [smem:[#allocation11 + $0xa]]
        %s833 = sld [smem:[#allocation11 + $0x3b]]
        %v834 = vstv %s832
        %v835 = vmul.f32 %v834, %v762
        %v836 = vmul.f32 %v834, %v763
        %839 = vrot.lane.b32.xlu0 %v835, 125
        %v840 = vpop.permute.xlu0 %839
        %841 = vrot.lane.b32.xlu0 %v836, 125
        %v842 = vpop.permute.xlu0 %841
        %v845 = vadd.f32 %v830, %v840
        %v846 = vadd.f32 %v831, %v842
        %v847 = vstv %s833
        %v848 = vmul.f32 %v847, %v769
        %v849 = vmul.f32 %v847, %v770
        %852 = vrot.lane.b32.xlu0 %v848, 125
        %v853 = vpop.permute.xlu0 %852
        %854 = vrot.lane.b32.xlu0 %v849, 125
        %v855 = vpop.permute.xlu0 %854
        %v858 = vadd.f32 %v845, %v853
        %v859 = vadd.f32 %v846, %v855
        %s860 = sld [smem:[#allocation11 + $0xb]]
        %s861 = sld [smem:[#allocation11 + $0x3c]]
        %v862 = vstv %s860
        %v863 = vmul.f32 %v862, %v762
        %v864 = vmul.f32 %v862, %v763
        %867 = vrot.lane.b32.xlu0 %v863, 124
        %v868 = vpop.permute.xlu0 %867
        %869 = vrot.lane.b32.xlu0 %v864, 124
        %v870 = vpop.permute.xlu0 %869
        %v873 = vadd.f32 %v858, %v868
        %v874 = vadd.f32 %v859, %v870
        %v875 = vstv %s861
        %v876 = vmul.f32 %v875, %v769
        %v877 = vmul.f32 %v875, %v770
        %880 = vrot.lane.b32.xlu0 %v876, 124
        %v881 = vpop.permute.xlu0 %880
        %882 = vrot.lane.b32.xlu0 %v877, 124
        %v883 = vpop.permute.xlu0 %882
        %v886 = vadd.f32 %v873, %v881
        %v887 = vadd.f32 %v874, %v883
        %s888 = sld [smem:[#allocation11 + $0xc]]
        %s889 = sld [smem:[#allocation11 + $0x3d]]
        %v890 = vstv %s888
        %v891 = vmul.f32 %v890, %v762
        %v892 = vmul.f32 %v890, %v763
        %895 = vrot.lane.b32.xlu0 %v891, 123
        %v896 = vpop.permute.xlu0 %895
        %897 = vrot.lane.b32.xlu0 %v892, 123
        %v898 = vpop.permute.xlu0 %897
        %v901 = vadd.f32 %v886, %v896
        %v902 = vadd.f32 %v887, %v898
        %v903 = vstv %s889
        %v904 = vmul.f32 %v903, %v769
        %v905 = vmul.f32 %v903, %v770
        %908 = vrot.lane.b32.xlu0 %v904, 123
        %v909 = vpop.permute.xlu0 %908
        %910 = vrot.lane.b32.xlu0 %v905, 123
        %v911 = vpop.permute.xlu0 %910
        %v914 = vadd.f32 %v901, %v909
        %v915 = vadd.f32 %v902, %v911
        %s916 = sld [smem:[#allocation11 + $0xd]]
        %s917 = sld [smem:[#allocation11 + $0x3e]]
        %v918 = vstv %s916
        %v919 = vmul.f32 %v918, %v762
        %v920 = vmul.f32 %v918, %v763
        %923 = vrot.lane.b32.xlu0 %v919, 122
        %v924 = vpop.permute.xlu0 %923
        %925 = vrot.lane.b32.xlu0 %v920, 122
        %v926 = vpop.permute.xlu0 %925
        %v929 = vadd.f32 %v914, %v924
        %v930 = vadd.f32 %v915, %v926
        %v931 = vstv %s917
        %v932 = vmul.f32 %v931, %v769
        %v933 = vmul.f32 %v931, %v770
        %936 = vrot.lane.b32.xlu0 %v932, 122
        %v937 = vpop.permute.xlu0 %936
        %938 = vrot.lane.b32.xlu0 %v933, 122
        %v939 = vpop.permute.xlu0 %938
        %v942 = vadd.f32 %v929, %v937
        %v943 = vadd.f32 %v930, %v939
        %s944 = sld [smem:[#allocation11 + $0xe]]
        %s945 = sld [smem:[#allocation11 + $0x3f]]
        %v946 = vld [vmem:[#allocation2 + $0x2] sm:$0xff]
        %v947 = vld [vmem:[#allocation2 + $0xa] sm:$0xff]
        %v948 = vstv %s944
        %v949 = vmul.f32 %v948, %v946
        %v950 = vmul.f32 %v948, %v947
        %v951 = vadd.f32 %v942, %v949
        %v952 = vadd.f32 %v943, %v950
        %v953 = vld [vmem:[#allocation3 + $0x2] sm:$0xff]
        %v954 = vld [vmem:[#allocation3 + $0xa] sm:$0xff]
        %v955 = vstv %s945
        %v956 = vmul.f32 %v955, %v953
        %v957 = vmul.f32 %v955, %v954
        %v958 = vadd.f32 %v951, %v956
        %v959 = vadd.f32 %v952, %v957
        %s960 = sld [smem:[#allocation11 + $0xf]]
        %s961 = sld [smem:[#allocation11 + $0x40]]
        %v962 = vstv %s960
        %v963 = vmul.f32 %v962, %v946
        %v964 = vmul.f32 %v962, %v947
        %967 = vrot.lane.b32.xlu0 %v963, 127
        %v968 = vpop.permute.xlu0 %967
        %969 = vrot.lane.b32.xlu0 %v964, 127
        %v970 = vpop.permute.xlu0 %969
        %v973 = vadd.f32 %v958, %v968
        %v974 = vadd.f32 %v959, %v970
        %v975 = vstv %s961
        %v976 = vmul.f32 %v975, %v953
        %v977 = vmul.f32 %v975, %v954
        %980 = vrot.lane.b32.xlu0 %v976, 127
        %v981 = vpop.permute.xlu0 %980
        %982 = vrot.lane.b32.xlu0 %v977, 127
        %v983 = vpop.permute.xlu0 %982
        %v986 = vadd.f32 %v973, %v981
        %v987 = vadd.f32 %v974, %v983
        %s988 = sld [smem:[#allocation11 + $0x10]]
        %s989 = sld [smem:[#allocation11 + $0x41]]
        %v990 = vstv %s988
        %v991 = vmul.f32 %v990, %v946
        %v992 = vmul.f32 %v990, %v947
        %995 = vrot.lane.b32.xlu0 %v991, 126
        %v996 = vpop.permute.xlu0 %995
        %997 = vrot.lane.b32.xlu0 %v992, 126
        %v998 = vpop.permute.xlu0 %997
        %v1001 = vadd.f32 %v986, %v996
        %v1002 = vadd.f32 %v987, %v998
        %v1003 = vstv %s989
        %v1004 = vmul.f32 %v1003, %v953
        %v1005 = vmul.f32 %v1003, %v954
        %1008 = vrot.lane.b32.xlu0 %v1004, 126
        %v1009 = vpop.permute.xlu0 %1008
        %1010 = vrot.lane.b32.xlu0 %v1005, 126
        %v1011 = vpop.permute.xlu0 %1010
        %v1014 = vadd.f32 %v1001, %v1009
        %v1015 = vadd.f32 %v1002, %v1011
        %s1016 = sld [smem:[#allocation11 + $0x11]]
        %s1017 = sld [smem:[#allocation11 + $0x42]]
        %v1018 = vstv %s1016
        %v1019 = vmul.f32 %v1018, %v946
        %v1020 = vmul.f32 %v1018, %v947
        %1023 = vrot.lane.b32.xlu0 %v1019, 125
        %v1024 = vpop.permute.xlu0 %1023
        %1025 = vrot.lane.b32.xlu0 %v1020, 125
        %v1026 = vpop.permute.xlu0 %1025
        %v1029 = vadd.f32 %v1014, %v1024
        %v1030 = vadd.f32 %v1015, %v1026
        %v1031 = vstv %s1017
        %v1032 = vmul.f32 %v1031, %v953
        %v1033 = vmul.f32 %v1031, %v954
        %1036 = vrot.lane.b32.xlu0 %v1032, 125
        %v1037 = vpop.permute.xlu0 %1036
        %1038 = vrot.lane.b32.xlu0 %v1033, 125
        %v1039 = vpop.permute.xlu0 %1038
        %v1042 = vadd.f32 %v1029, %v1037
        %v1043 = vadd.f32 %v1030, %v1039
        %s1044 = sld [smem:[#allocation11 + $0x12]]
        %s1045 = sld [smem:[#allocation11 + $0x43]]
        %v1046 = vstv %s1044
        %v1047 = vmul.f32 %v1046, %v946
        %v1048 = vmul.f32 %v1046, %v947
        %1051 = vrot.lane.b32.xlu0 %v1047, 124
        %v1052 = vpop.permute.xlu0 %1051
        %1053 = vrot.lane.b32.xlu0 %v1048, 124
        %v1054 = vpop.permute.xlu0 %1053
        %v1057 = vadd.f32 %v1042, %v1052
        %v1058 = vadd.f32 %v1043, %v1054
        %v1059 = vstv %s1045
        %v1060 = vmul.f32 %v1059, %v953
        %v1061 = vmul.f32 %v1059, %v954
        %1064 = vrot.lane.b32.xlu0 %v1060, 124
        %v1065 = vpop.permute.xlu0 %1064
        %1066 = vrot.lane.b32.xlu0 %v1061, 124
        %v1067 = vpop.permute.xlu0 %1066
        %v1070 = vadd.f32 %v1057, %v1065
        %v1071 = vadd.f32 %v1058, %v1067
        %s1072 = sld [smem:[#allocation11 + $0x13]]
        %s1073 = sld [smem:[#allocation11 + $0x44]]
        %v1074 = vstv %s1072
        %v1075 = vmul.f32 %v1074, %v946
        %v1076 = vmul.f32 %v1074, %v947
        %1079 = vrot.lane.b32.xlu0 %v1075, 123
        %v1080 = vpop.permute.xlu0 %1079
        %1081 = vrot.lane.b32.xlu0 %v1076, 123
        %v1082 = vpop.permute.xlu0 %1081
        %v1085 = vadd.f32 %v1070, %v1080
        %v1086 = vadd.f32 %v1071, %v1082
        %v1087 = vstv %s1073
        %v1088 = vmul.f32 %v1087, %v953
        %v1089 = vmul.f32 %v1087, %v954
        %1092 = vrot.lane.b32.xlu0 %v1088, 123
        %v1093 = vpop.permute.xlu0 %1092
        %1094 = vrot.lane.b32.xlu0 %v1089, 123
        %v1095 = vpop.permute.xlu0 %1094
        %v1098 = vadd.f32 %v1085, %v1093
        %v1099 = vadd.f32 %v1086, %v1095
        %s1100 = sld [smem:[#allocation11 + $0x14]]
        %s1101 = sld [smem:[#allocation11 + $0x45]]
        %v1102 = vstv %s1100
        %v1103 = vmul.f32 %v1102, %v946
        %v1104 = vmul.f32 %v1102, %v947
        %1107 = vrot.lane.b32.xlu0 %v1103, 122
        %v1108 = vpop.permute.xlu0 %1107
        %1109 = vrot.lane.b32.xlu0 %v1104, 122
        %v1110 = vpop.permute.xlu0 %1109
        %v1113 = vadd.f32 %v1098, %v1108
        %v1114 = vadd.f32 %v1099, %v1110
        %v1115 = vstv %s1101
        %v1116 = vmul.f32 %v1115, %v953
        %v1117 = vmul.f32 %v1115, %v954
        %1120 = vrot.lane.b32.xlu0 %v1116, 122
        %v1121 = vpop.permute.xlu0 %1120
        %1122 = vrot.lane.b32.xlu0 %v1117, 122
        %v1123 = vpop.permute.xlu0 %1122
        %v1126 = vadd.f32 %v1113, %v1121
        %v1127 = vadd.f32 %v1114, %v1123
        %s1128 = sld [smem:[#allocation11 + $0x15]]
        %s1129 = sld [smem:[#allocation11 + $0x46]]
        %v1130 = vld [vmem:[#allocation2 + $0x3] sm:$0xff]
        %v1131 = vld [vmem:[#allocation2 + $0xb] sm:$0xff]
        %v1132 = vstv %s1128
        %v1133 = vmul.f32 %v1132, %v1130
        %v1134 = vmul.f32 %v1132, %v1131
        %v1135 = vadd.f32 %v1126, %v1133
        %v1136 = vadd.f32 %v1127, %v1134
        %v1137 = vld [vmem:[#allocation3 + $0x3] sm:$0xff]
        %v1138 = vld [vmem:[#allocation3 + $0xb] sm:$0xff]
        %v1139 = vstv %s1129
        %v1140 = vmul.f32 %v1139, %v1137
        %v1141 = vmul.f32 %v1139, %v1138
        %v1142 = vadd.f32 %v1135, %v1140
        %v1143 = vadd.f32 %v1136, %v1141
        %s1144 = sld [smem:[#allocation11 + $0x16]]
        %s1145 = sld [smem:[#allocation11 + $0x47]]
        %v1146 = vstv %s1144
        %v1147 = vmul.f32 %v1146, %v1130
        %v1148 = vmul.f32 %v1146, %v1131
        %1151 = vrot.lane.b32.xlu0 %v1147, 127
        %v1152 = vpop.permute.xlu0 %1151
        %1153 = vrot.lane.b32.xlu0 %v1148, 127
        %v1154 = vpop.permute.xlu0 %1153
        %v1157 = vadd.f32 %v1142, %v1152
        %v1158 = vadd.f32 %v1143, %v1154
        %v1159 = vstv %s1145
        %v1160 = vmul.f32 %v1159, %v1137
        %v1161 = vmul.f32 %v1159, %v1138
        %1164 = vrot.lane.b32.xlu0 %v1160, 127
        %v1165 = vpop.permute.xlu0 %1164
        %1166 = vrot.lane.b32.xlu0 %v1161, 127
        %v1167 = vpop.permute.xlu0 %1166
        %v1170 = vadd.f32 %v1157, %v1165
        %v1171 = vadd.f32 %v1158, %v1167
        %s1172 = sld [smem:[#allocation11 + $0x17]]
        %s1173 = sld [smem:[#allocation11 + $0x48]]
        %v1174 = vstv %s1172
        %v1175 = vmul.f32 %v1174, %v1130
        %v1176 = vmul.f32 %v1174, %v1131
        %1179 = vrot.lane.b32.xlu0 %v1175, 126
        %v1180 = vpop.permute.xlu0 %1179
        %1181 = vrot.lane.b32.xlu0 %v1176, 126
        %v1182 = vpop.permute.xlu0 %1181
        %v1185 = vadd.f32 %v1170, %v1180
        %v1186 = vadd.f32 %v1171, %v1182
        %v1187 = vstv %s1173
        %v1188 = vmul.f32 %v1187, %v1137
        %v1189 = vmul.f32 %v1187, %v1138
        %1192 = vrot.lane.b32.xlu0 %v1188, 126
        %v1193 = vpop.permute.xlu0 %1192
        %1194 = vrot.lane.b32.xlu0 %v1189, 126
        %v1195 = vpop.permute.xlu0 %1194
        %v1198 = vadd.f32 %v1185, %v1193
        %v1199 = vadd.f32 %v1186, %v1195
        %s1200 = sld [smem:[#allocation11 + $0x18]]
        %s1201 = sld [smem:[#allocation11 + $0x49]]
        %v1202 = vstv %s1200
        %v1203 = vmul.f32 %v1202, %v1130
        %v1204 = vmul.f32 %v1202, %v1131
        %1207 = vrot.lane.b32.xlu0 %v1203, 125
        %v1208 = vpop.permute.xlu0 %1207
        %1209 = vrot.lane.b32.xlu0 %v1204, 125
        %v1210 = vpop.permute.xlu0 %1209
        %v1213 = vadd.f32 %v1198, %v1208
        %v1214 = vadd.f32 %v1199, %v1210
        %v1215 = vstv %s1201
        %v1216 = vmul.f32 %v1215, %v1137
        %v1217 = vmul.f32 %v1215, %v1138
        %1220 = vrot.lane.b32.xlu0 %v1216, 125
        %v1221 = vpop.permute.xlu0 %1220
        %1222 = vrot.lane.b32.xlu0 %v1217, 125
        %v1223 = vpop.permute.xlu0 %1222
        %v1226 = vadd.f32 %v1213, %v1221
        %v1227 = vadd.f32 %v1214, %v1223
        %s1228 = sld [smem:[#allocation11 + $0x19]]
        %s1229 = sld [smem:[#allocation11 + $0x4a]]
        %v1230 = vstv %s1228
        %v1231 = vmul.f32 %v1230, %v1130
        %v1232 = vmul.f32 %v1230, %v1131
        %1235 = vrot.lane.b32.xlu0 %v1231, 124
        %v1236 = vpop.permute.xlu0 %1235
        %1237 = vrot.lane.b32.xlu0 %v1232, 124
        %v1238 = vpop.permute.xlu0 %1237
        %v1241 = vadd.f32 %v1226, %v1236
        %v1242 = vadd.f32 %v1227, %v1238
        %v1243 = vstv %s1229
        %v1244 = vmul.f32 %v1243, %v1137
        %v1245 = vmul.f32 %v1243, %v1138
        %1248 = vrot.lane.b32.xlu0 %v1244, 124
        %v1249 = vpop.permute.xlu0 %1248
        %1250 = vrot.lane.b32.xlu0 %v1245, 124
        %v1251 = vpop.permute.xlu0 %1250
        %v1254 = vadd.f32 %v1241, %v1249
        %v1255 = vadd.f32 %v1242, %v1251
        %s1256 = sld [smem:[#allocation11 + $0x1a]]
        %s1257 = sld [smem:[#allocation11 + $0x4b]]
        %v1258 = vstv %s1256
        %v1259 = vmul.f32 %v1258, %v1130
        %v1260 = vmul.f32 %v1258, %v1131
        %1263 = vrot.lane.b32.xlu0 %v1259, 123
        %v1264 = vpop.permute.xlu0 %1263
        %1265 = vrot.lane.b32.xlu0 %v1260, 123
        %v1266 = vpop.permute.xlu0 %1265
        %v1269 = vadd.f32 %v1254, %v1264
        %v1270 = vadd.f32 %v1255, %v1266
        %v1271 = vstv %s1257
        %v1272 = vmul.f32 %v1271, %v1137
        %v1273 = vmul.f32 %v1271, %v1138
        %1276 = vrot.lane.b32.xlu0 %v1272, 123
        %v1277 = vpop.permute.xlu0 %1276
        %1278 = vrot.lane.b32.xlu0 %v1273, 123
        %v1279 = vpop.permute.xlu0 %1278
        %v1282 = vadd.f32 %v1269, %v1277
        %v1283 = vadd.f32 %v1270, %v1279
        %s1284 = sld [smem:[#allocation11 + $0x1b]]
        %s1285 = sld [smem:[#allocation11 + $0x4c]]
        %v1286 = vstv %s1284
        %v1287 = vmul.f32 %v1286, %v1130
        %v1288 = vmul.f32 %v1286, %v1131
        %1291 = vrot.lane.b32.xlu0 %v1287, 122
        %v1292 = vpop.permute.xlu0 %1291
        %1293 = vrot.lane.b32.xlu0 %v1288, 122
        %v1294 = vpop.permute.xlu0 %1293
        %v1297 = vadd.f32 %v1282, %v1292
        %v1298 = vadd.f32 %v1283, %v1294
        %v1299 = vstv %s1285
        %v1300 = vmul.f32 %v1299, %v1137
        %v1301 = vmul.f32 %v1299, %v1138
        %1304 = vrot.lane.b32.xlu0 %v1300, 122
        %v1305 = vpop.permute.xlu0 %1304
        %1306 = vrot.lane.b32.xlu0 %v1301, 122
        %v1307 = vpop.permute.xlu0 %1306
        %v1310 = vadd.f32 %v1297, %v1305
        %v1311 = vadd.f32 %v1298, %v1307
        %s1312 = sld [smem:[#allocation11 + $0x1c]]
        %s1313 = sld [smem:[#allocation11 + $0x4d]]
        %v1314 = vld [vmem:[#allocation2 + $0x4] sm:$0xff]
        %v1315 = vld [vmem:[#allocation2 + $0xc] sm:$0xff]
        %v1316 = vstv %s1312
        %v1317 = vmul.f32 %v1316, %v1314
        %v1318 = vmul.f32 %v1316, %v1315
        %v1319 = vadd.f32 %v1310, %v1317
        %v1320 = vadd.f32 %v1311, %v1318
        %v1321 = vld [vmem:[#allocation3 + $0x4] sm:$0xff]
        %v1322 = vld [vmem:[#allocation3 + $0xc] sm:$0xff]
        %v1323 = vstv %s1313
        %v1324 = vmul.f32 %v1323, %v1321
        %v1325 = vmul.f32 %v1323, %v1322
        %v1326 = vadd.f32 %v1319, %v1324
        %v1327 = vadd.f32 %v1320, %v1325
        %s1328 = sld [smem:[#allocation11 + $0x1d]]
        %s1329 = sld [smem:[#allocation11 + $0x4e]]
        %v1330 = vstv %s1328
        %v1331 = vmul.f32 %v1330, %v1314
        %v1332 = vmul.f32 %v1330, %v1315
        %1335 = vrot.lane.b32.xlu0 %v1331, 127
        %v1336 = vpop.permute.xlu0 %1335
        %1337 = vrot.lane.b32.xlu0 %v1332, 127
        %v1338 = vpop.permute.xlu0 %1337
        %v1341 = vadd.f32 %v1326, %v1336
        %v1342 = vadd.f32 %v1327, %v1338
        %v1343 = vstv %s1329
        %v1344 = vmul.f32 %v1343, %v1321
        %v1345 = vmul.f32 %v1343, %v1322
        %1348 = vrot.lane.b32.xlu0 %v1344, 127
        %v1349 = vpop.permute.xlu0 %1348
        %1350 = vrot.lane.b32.xlu0 %v1345, 127
        %v1351 = vpop.permute.xlu0 %1350
        %v1354 = vadd.f32 %v1341, %v1349
        %v1355 = vadd.f32 %v1342, %v1351
        %s1356 = sld [smem:[#allocation11 + $0x1e]]
        %s1357 = sld [smem:[#allocation11 + $0x4f]]
        %v1358 = vstv %s1356
        %v1359 = vmul.f32 %v1358, %v1314
        %v1360 = vmul.f32 %v1358, %v1315
        %1363 = vrot.lane.b32.xlu0 %v1359, 126
        %v1364 = vpop.permute.xlu0 %1363
        %1365 = vrot.lane.b32.xlu0 %v1360, 126
        %v1366 = vpop.permute.xlu0 %1365
        %v1369 = vadd.f32 %v1354, %v1364
        %v1370 = vadd.f32 %v1355, %v1366
        %v1371 = vstv %s1357
        %v1372 = vmul.f32 %v1371, %v1321
        %v1373 = vmul.f32 %v1371, %v1322
        %1376 = vrot.lane.b32.xlu0 %v1372, 126
        %v1377 = vpop.permute.xlu0 %1376
        %1378 = vrot.lane.b32.xlu0 %v1373, 126
        %v1379 = vpop.permute.xlu0 %1378
        %v1382 = vadd.f32 %v1369, %v1377
        %v1383 = vadd.f32 %v1370, %v1379
        %s1384 = sld [smem:[#allocation11 + $0x1f]]
        %s1385 = sld [smem:[#allocation11 + $0x50]]
        %v1386 = vstv %s1384
        %v1387 = vmul.f32 %v1386, %v1314
        %v1388 = vmul.f32 %v1386, %v1315
        %1391 = vrot.lane.b32.xlu0 %v1387, 125
        %v1392 = vpop.permute.xlu0 %1391
        %1393 = vrot.lane.b32.xlu0 %v1388, 125
        %v1394 = vpop.permute.xlu0 %1393
        %v1397 = vadd.f32 %v1382, %v1392
        %v1398 = vadd.f32 %v1383, %v1394
        %v1399 = vstv %s1385
        %v1400 = vmul.f32 %v1399, %v1321
        %v1401 = vmul.f32 %v1399, %v1322
        %1404 = vrot.lane.b32.xlu0 %v1400, 125
        %v1405 = vpop.permute.xlu0 %1404
        %1406 = vrot.lane.b32.xlu0 %v1401, 125
        %v1407 = vpop.permute.xlu0 %1406
        %v1410 = vadd.f32 %v1397, %v1405
        %v1411 = vadd.f32 %v1398, %v1407
        %s1412 = sld [smem:[#allocation11 + $0x20]]
        %s1413 = sld [smem:[#allocation11 + $0x51]]
        %v1414 = vstv %s1412
        %v1415 = vmul.f32 %v1414, %v1314
        %v1416 = vmul.f32 %v1414, %v1315
        %1419 = vrot.lane.b32.xlu0 %v1415, 124
        %v1420 = vpop.permute.xlu0 %1419
        %1421 = vrot.lane.b32.xlu0 %v1416, 124
        %v1422 = vpop.permute.xlu0 %1421
        %v1425 = vadd.f32 %v1410, %v1420
        %v1426 = vadd.f32 %v1411, %v1422
        %v1427 = vstv %s1413
        %v1428 = vmul.f32 %v1427, %v1321
        %v1429 = vmul.f32 %v1427, %v1322
        %1432 = vrot.lane.b32.xlu0 %v1428, 124
        %v1433 = vpop.permute.xlu0 %1432
        %1434 = vrot.lane.b32.xlu0 %v1429, 124
        %v1435 = vpop.permute.xlu0 %1434
        %v1438 = vadd.f32 %v1425, %v1433
        %v1439 = vadd.f32 %v1426, %v1435
        %s1440 = sld [smem:[#allocation11 + $0x21]]
        %s1441 = sld [smem:[#allocation11 + $0x52]]
        %v1442 = vstv %s1440
        %v1443 = vmul.f32 %v1442, %v1314
        %v1444 = vmul.f32 %v1442, %v1315
        %1447 = vrot.lane.b32.xlu0 %v1443, 123
        %v1448 = vpop.permute.xlu0 %1447
        %1449 = vrot.lane.b32.xlu0 %v1444, 123
        %v1450 = vpop.permute.xlu0 %1449
        %v1453 = vadd.f32 %v1438, %v1448
        %v1454 = vadd.f32 %v1439, %v1450
        %v1455 = vstv %s1441
        %v1456 = vmul.f32 %v1455, %v1321
        %v1457 = vmul.f32 %v1455, %v1322
        %1460 = vrot.lane.b32.xlu0 %v1456, 123
        %v1461 = vpop.permute.xlu0 %1460
        %1462 = vrot.lane.b32.xlu0 %v1457, 123
        %v1463 = vpop.permute.xlu0 %1462
        %v1466 = vadd.f32 %v1453, %v1461
        %v1467 = vadd.f32 %v1454, %v1463
        %s1468 = sld [smem:[#allocation11 + $0x22]]
        %s1469 = sld [smem:[#allocation11 + $0x53]]
        %v1470 = vstv %s1468
        %v1471 = vmul.f32 %v1470, %v1314
        %v1472 = vmul.f32 %v1470, %v1315
        %1475 = vrot.lane.b32.xlu0 %v1471, 122
        %v1476 = vpop.permute.xlu0 %1475
        %1477 = vrot.lane.b32.xlu0 %v1472, 122
        %v1478 = vpop.permute.xlu0 %1477
        %v1481 = vadd.f32 %v1466, %v1476
        %v1482 = vadd.f32 %v1467, %v1478
        %v1483 = vstv %s1469
        %v1484 = vmul.f32 %v1483, %v1321
        %v1485 = vmul.f32 %v1483, %v1322
        %1488 = vrot.lane.b32.xlu0 %v1484, 122
        %v1489 = vpop.permute.xlu0 %1488
        %1490 = vrot.lane.b32.xlu0 %v1485, 122
        %v1491 = vpop.permute.xlu0 %1490
        %v1494 = vadd.f32 %v1481, %v1489
        %v1495 = vadd.f32 %v1482, %v1491
        %s1496 = sld [smem:[#allocation11 + $0x23]]
        %s1497 = sld [smem:[#allocation11 + $0x54]]
        %v1498 = vld [vmem:[#allocation2 + $0x5] sm:$0xff]
        %v1499 = vld [vmem:[#allocation2 + $0xd] sm:$0xff]
        %v1500 = vstv %s1496
        %v1501 = vmul.f32 %v1500, %v1498
        %v1502 = vmul.f32 %v1500, %v1499
        %v1503 = vadd.f32 %v1494, %v1501
        %v1504 = vadd.f32 %v1495, %v1502
        %v1505 = vld [vmem:[#allocation3 + $0x5] sm:$0xff]
        %v1506 = vld [vmem:[#allocation3 + $0xd] sm:$0xff]
        %v1507 = vstv %s1497
        %v1508 = vmul.f32 %v1507, %v1505
        %v1509 = vmul.f32 %v1507, %v1506
        %v1510 = vadd.f32 %v1503, %v1508
        %v1511 = vadd.f32 %v1504, %v1509
        %s1512 = sld [smem:[#allocation11 + $0x24]]
        %s1513 = sld [smem:[#allocation11 + $0x55]]
        %v1514 = vstv %s1512
        %v1515 = vmul.f32 %v1514, %v1498
        %v1516 = vmul.f32 %v1514, %v1499
        %1519 = vrot.lane.b32.xlu0 %v1515, 127
        %v1520 = vpop.permute.xlu0 %1519
        %1521 = vrot.lane.b32.xlu0 %v1516, 127
        %v1522 = vpop.permute.xlu0 %1521
        %v1525 = vadd.f32 %v1510, %v1520
        %v1526 = vadd.f32 %v1511, %v1522
        %v1527 = vstv %s1513
        %v1528 = vmul.f32 %v1527, %v1505
        %v1529 = vmul.f32 %v1527, %v1506
        %1532 = vrot.lane.b32.xlu0 %v1528, 127
        %v1533 = vpop.permute.xlu0 %1532
        %1534 = vrot.lane.b32.xlu0 %v1529, 127
        %v1535 = vpop.permute.xlu0 %1534
        %v1538 = vadd.f32 %v1525, %v1533
        %v1539 = vadd.f32 %v1526, %v1535
        %s1540 = sld [smem:[#allocation11 + $0x25]]
        %s1541 = sld [smem:[#allocation11 + $0x56]]
        %v1542 = vstv %s1540
        %v1543 = vmul.f32 %v1542, %v1498
        %v1544 = vmul.f32 %v1542, %v1499
        %1547 = vrot.lane.b32.xlu0 %v1543, 126
        %v1548 = vpop.permute.xlu0 %1547
        %1549 = vrot.lane.b32.xlu0 %v1544, 126
        %v1550 = vpop.permute.xlu0 %1549
        %v1553 = vadd.f32 %v1538, %v1548
        %v1554 = vadd.f32 %v1539, %v1550
        %v1555 = vstv %s1541
        %v1556 = vmul.f32 %v1555, %v1505
        %v1557 = vmul.f32 %v1555, %v1506
        %1560 = vrot.lane.b32.xlu0 %v1556, 126
        %v1561 = vpop.permute.xlu0 %1560
        %1562 = vrot.lane.b32.xlu0 %v1557, 126
        %v1563 = vpop.permute.xlu0 %1562
        %v1566 = vadd.f32 %v1553, %v1561
        %v1567 = vadd.f32 %v1554, %v1563
        %s1568 = sld [smem:[#allocation11 + $0x26]]
        %s1569 = sld [smem:[#allocation11 + $0x57]]
        %v1570 = vstv %s1568
        %v1571 = vmul.f32 %v1570, %v1498
        %v1572 = vmul.f32 %v1570, %v1499
        %1575 = vrot.lane.b32.xlu0 %v1571, 125
        %v1576 = vpop.permute.xlu0 %1575
        %1577 = vrot.lane.b32.xlu0 %v1572, 125
        %v1578 = vpop.permute.xlu0 %1577
        %v1581 = vadd.f32 %v1566, %v1576
        %v1582 = vadd.f32 %v1567, %v1578
        %v1583 = vstv %s1569
        %v1584 = vmul.f32 %v1583, %v1505
        %v1585 = vmul.f32 %v1583, %v1506
        %1588 = vrot.lane.b32.xlu0 %v1584, 125
        %v1589 = vpop.permute.xlu0 %1588
        %1590 = vrot.lane.b32.xlu0 %v1585, 125
        %v1591 = vpop.permute.xlu0 %1590
        %v1594 = vadd.f32 %v1581, %v1589
        %v1595 = vadd.f32 %v1582, %v1591
        %s1596 = sld [smem:[#allocation11 + $0x27]]
        %s1597 = sld [smem:[#allocation11 + $0x58]]
        %v1598 = vstv %s1596
        %v1599 = vmul.f32 %v1598, %v1498
        %v1600 = vmul.f32 %v1598, %v1499
        %1603 = vrot.lane.b32.xlu0 %v1599, 124
        %v1604 = vpop.permute.xlu0 %1603
        %1605 = vrot.lane.b32.xlu0 %v1600, 124
        %v1606 = vpop.permute.xlu0 %1605
        %v1609 = vadd.f32 %v1594, %v1604
        %v1610 = vadd.f32 %v1595, %v1606
        %v1611 = vstv %s1597
        %v1612 = vmul.f32 %v1611, %v1505
        %v1613 = vmul.f32 %v1611, %v1506
        %1616 = vrot.lane.b32.xlu0 %v1612, 124
        %v1617 = vpop.permute.xlu0 %1616
        %1618 = vrot.lane.b32.xlu0 %v1613, 124
        %v1619 = vpop.permute.xlu0 %1618
        %v1622 = vadd.f32 %v1609, %v1617
        %v1623 = vadd.f32 %v1610, %v1619
        %s1624 = sld [smem:[#allocation11 + $0x28]]
        %s1625 = sld [smem:[#allocation11 + $0x59]]
        %v1626 = vstv %s1624
        %v1627 = vmul.f32 %v1626, %v1498
        %v1628 = vmul.f32 %v1626, %v1499
        %1631 = vrot.lane.b32.xlu0 %v1627, 123
        %v1632 = vpop.permute.xlu0 %1631
        %1633 = vrot.lane.b32.xlu0 %v1628, 123
        %v1634 = vpop.permute.xlu0 %1633
        %v1637 = vadd.f32 %v1622, %v1632
        %v1638 = vadd.f32 %v1623, %v1634
        %v1639 = vstv %s1625
        %v1640 = vmul.f32 %v1639, %v1505
        %v1641 = vmul.f32 %v1639, %v1506
        %1644 = vrot.lane.b32.xlu0 %v1640, 123
        %v1645 = vpop.permute.xlu0 %1644
        %1646 = vrot.lane.b32.xlu0 %v1641, 123
        %v1647 = vpop.permute.xlu0 %1646
        %v1650 = vadd.f32 %v1637, %v1645
        %v1651 = vadd.f32 %v1638, %v1647
        %s1652 = sld [smem:[#allocation11 + $0x29]]
        %s1653 = sld [smem:[#allocation11 + $0x5a]]
        %v1654 = vstv %s1652
        %v1655 = vmul.f32 %v1654, %v1498
        %v1656 = vmul.f32 %v1654, %v1499
        %1659 = vrot.lane.b32.xlu0 %v1655, 122
        %v1660 = vpop.permute.xlu0 %1659
        %1661 = vrot.lane.b32.xlu0 %v1656, 122
        %v1662 = vpop.permute.xlu0 %1661
        %v1665 = vadd.f32 %v1650, %v1660
        %v1666 = vadd.f32 %v1651, %v1662
        %v1667 = vstv %s1653
        %v1668 = vmul.f32 %v1667, %v1505
        %v1669 = vmul.f32 %v1667, %v1506
        %1672 = vrot.lane.b32.xlu0 %v1668, 122
        %v1673 = vpop.permute.xlu0 %1672
        %1674 = vrot.lane.b32.xlu0 %v1669, 122
        %v1675 = vpop.permute.xlu0 %1674
        %v1678 = vadd.f32 %v1665, %v1673
        %v1679 = vadd.f32 %v1666, %v1675
        %s1680 = sld [smem:[#allocation11 + $0x2a]]
        %s1681 = sld [smem:[#allocation11 + $0x5b]]
        %v1682 = vld [vmem:[#allocation2 + $0x6] sm:$0xff]
        %v1683 = vld [vmem:[#allocation2 + $0xe] sm:$0xff]
        %v1684 = vstv %s1680
        %v1685 = vmul.f32 %v1684, %v1682
        %v1686 = vmul.f32 %v1684, %v1683
        %v1687 = vadd.f32 %v1678, %v1685
        %v1688 = vadd.f32 %v1679, %v1686
        %v1689 = vld [vmem:[#allocation3 + $0x6] sm:$0xff]
        %v1690 = vld [vmem:[#allocation3 + $0xe] sm:$0xff]
        %v1691 = vstv %s1681
        %v1692 = vmul.f32 %v1691, %v1689
        %v1693 = vmul.f32 %v1691, %v1690
        %v1694 = vadd.f32 %v1687, %v1692
        %v1695 = vadd.f32 %v1688, %v1693
        %s1696 = sld [smem:[#allocation11 + $0x2b]]
        %s1697 = sld [smem:[#allocation11 + $0x5c]]
        %v1698 = vstv %s1696
        %v1699 = vmul.f32 %v1698, %v1682
        %v1700 = vmul.f32 %v1698, %v1683
        %1703 = vrot.lane.b32.xlu0 %v1699, 127
        %v1704 = vpop.permute.xlu0 %1703
        %1705 = vrot.lane.b32.xlu0 %v1700, 127
        %v1706 = vpop.permute.xlu0 %1705
        %v1709 = vadd.f32 %v1694, %v1704
        %v1710 = vadd.f32 %v1695, %v1706
        %v1711 = vstv %s1697
        %v1712 = vmul.f32 %v1711, %v1689
        %v1713 = vmul.f32 %v1711, %v1690
        %1716 = vrot.lane.b32.xlu0 %v1712, 127
        %v1717 = vpop.permute.xlu0 %1716
        %1718 = vrot.lane.b32.xlu0 %v1713, 127
        %v1719 = vpop.permute.xlu0 %1718
        %v1722 = vadd.f32 %v1709, %v1717
        %v1723 = vadd.f32 %v1710, %v1719
        %s1724 = sld [smem:[#allocation11 + $0x2c]]
        %s1725 = sld [smem:[#allocation11 + $0x5d]]
        %v1726 = vstv %s1724
        %v1727 = vmul.f32 %v1726, %v1682
        %v1728 = vmul.f32 %v1726, %v1683
        %1731 = vrot.lane.b32.xlu0 %v1727, 126
        %v1732 = vpop.permute.xlu0 %1731
        %1733 = vrot.lane.b32.xlu0 %v1728, 126
        %v1734 = vpop.permute.xlu0 %1733
        %v1737 = vadd.f32 %v1722, %v1732
        %v1738 = vadd.f32 %v1723, %v1734
        %v1739 = vstv %s1725
        %v1740 = vmul.f32 %v1739, %v1689
        %v1741 = vmul.f32 %v1739, %v1690
        %1744 = vrot.lane.b32.xlu0 %v1740, 126
        %v1745 = vpop.permute.xlu0 %1744
        %1746 = vrot.lane.b32.xlu0 %v1741, 126
        %v1747 = vpop.permute.xlu0 %1746
        %v1750 = vadd.f32 %v1737, %v1745
        %v1751 = vadd.f32 %v1738, %v1747
        %s1752 = sld [smem:[#allocation11 + $0x2d]]
        %s1753 = sld [smem:[#allocation11 + $0x5e]]
        %v1754 = vstv %s1752
        %v1755 = vmul.f32 %v1754, %v1682
        %v1756 = vmul.f32 %v1754, %v1683
        %1759 = vrot.lane.b32.xlu0 %v1755, 125
        %v1760 = vpop.permute.xlu0 %1759
        %1761 = vrot.lane.b32.xlu0 %v1756, 125
        %v1762 = vpop.permute.xlu0 %1761
        %v1765 = vadd.f32 %v1750, %v1760
        %v1766 = vadd.f32 %v1751, %v1762
        %v1767 = vstv %s1753
        %v1768 = vmul.f32 %v1767, %v1689
        %v1769 = vmul.f32 %v1767, %v1690
        %1772 = vrot.lane.b32.xlu0 %v1768, 125
        %v1773 = vpop.permute.xlu0 %1772
        %1774 = vrot.lane.b32.xlu0 %v1769, 125
        %v1775 = vpop.permute.xlu0 %1774
        %v1778 = vadd.f32 %v1765, %v1773
        %v1779 = vadd.f32 %v1766, %v1775
        %s1780 = sld [smem:[#allocation11 + $0x2e]]
        %s1781 = sld [smem:[#allocation11 + $0x5f]]
        %v1782 = vstv %s1780
        %v1783 = vmul.f32 %v1782, %v1682
        %v1784 = vmul.f32 %v1782, %v1683
        %1787 = vrot.lane.b32.xlu0 %v1783, 124
        %v1788 = vpop.permute.xlu0 %1787
        %1789 = vrot.lane.b32.xlu0 %v1784, 124
        %v1790 = vpop.permute.xlu0 %1789
        %v1793 = vadd.f32 %v1778, %v1788
        %v1794 = vadd.f32 %v1779, %v1790
        %v1795 = vstv %s1781
        %v1796 = vmul.f32 %v1795, %v1689
        %v1797 = vmul.f32 %v1795, %v1690
        %1800 = vrot.lane.b32.xlu0 %v1796, 124
        %v1801 = vpop.permute.xlu0 %1800
        %1802 = vrot.lane.b32.xlu0 %v1797, 124
        %v1803 = vpop.permute.xlu0 %1802
        %v1806 = vadd.f32 %v1793, %v1801
        %v1807 = vadd.f32 %v1794, %v1803
        %s1808 = sld [smem:[#allocation11 + $0x2f]]
        %s1809 = sld [smem:[#allocation11 + $0x60]]
        %v1810 = vstv %s1808
        %v1811 = vmul.f32 %v1810, %v1682
        %v1812 = vmul.f32 %v1810, %v1683
        %1815 = vrot.lane.b32.xlu0 %v1811, 123
        %v1816 = vpop.permute.xlu0 %1815
        %1817 = vrot.lane.b32.xlu0 %v1812, 123
        %v1818 = vpop.permute.xlu0 %1817
        %v1821 = vadd.f32 %v1806, %v1816
        %v1822 = vadd.f32 %v1807, %v1818
        %v1823 = vstv %s1809
        %v1824 = vmul.f32 %v1823, %v1689
        %v1825 = vmul.f32 %v1823, %v1690
        %1828 = vrot.lane.b32.xlu0 %v1824, 123
        %v1829 = vpop.permute.xlu0 %1828
        %1830 = vrot.lane.b32.xlu0 %v1825, 123
        %v1831 = vpop.permute.xlu0 %1830
        %v1834 = vadd.f32 %v1821, %v1829
        %v1835 = vadd.f32 %v1822, %v1831
        %s1836 = sld [smem:[#allocation11 + $0x30]]
        %s1837 = sld [smem:[#allocation11 + $0x61]]
        %v1838 = vstv %s1836
        %v1839 = vmul.f32 %v1838, %v1682
        %v1840 = vmul.f32 %v1838, %v1683
        %1843 = vrot.lane.b32.xlu0 %v1839, 122
        %v1844 = vpop.permute.xlu0 %1843
        %1845 = vrot.lane.b32.xlu0 %v1840, 122
        %v1846 = vpop.permute.xlu0 %1845
        %v1849 = vadd.f32 %v1834, %v1844
        %v1850 = vadd.f32 %v1835, %v1846
        %v1851 = vstv %s1837
        %v1852 = vmul.f32 %v1851, %v1689
        %v1853 = vmul.f32 %v1851, %v1690
        %1856 = vrot.lane.b32.xlu0 %v1852, 122
        %v1857 = vpop.permute.xlu0 %1856
        %1858 = vrot.lane.b32.xlu0 %v1853, 122
        %v1859 = vpop.permute.xlu0 %1858
        %v1862 = vadd.f32 %v1849, %v1857
        %v1863 = vadd.f32 %v1850, %v1859
        %v1864 = vlaneseq
        %vm1865 = vcmp.ge.s32.totalorder %v1864, 0
        %vm1866 = vcmp.lt.s32.totalorder %v1864, 16
        %vm1867 = vmand %vm1865, %vm1866
        %1868 = vst.msk [vmem:[#allocation4] sm:$0x1] %vm1867, %v1862
        %v1871 = vunpack.c.l.s4 1966171168
        %v1872 = vunpack.c.0.s8 %v1871
        %v1873 = vlaneseq
        %v1874 = vshrl.u32 %v1873, 7
        %v1875 = vsub.s32 %v1872, %v1874
        %v1876 = vrot.slane %v1862, %v1875
        %v1877 = vcombine.high %v1876, %v1876
        %v1879 = vunpack.c.l.s4 1966171168
        %v1880 = vunpack.c.0.s8 %v1879
        %v1881 = vlaneseq
        %v1882 = vshrl.u32 %v1881, 7
        %v1883 = vsub.s32 %v1880, %v1882
        %v1884 = vrot.slane %v1876, %v1883
        %v1886 = vunpack.c.l.s4 1966171168
        %v1887 = vunpack.c.0.s8 %v1886
        %v1888 = vlaneseq
        %v1889 = vshrl.u32 %v1888, 7
        %v1890 = vsub.s32 %v1887, %v1889
        %v1891 = vrot.slane %v1877, %v1890
        %1892 = vrot.lane.b32.xlu0 %v1891, 16
        %v1893 = vpop.permute.xlu0 %1892
        %vm1895 = vcmp.ge.s32.totalorder %v1864, 16
        %vm1896 = vcmp.lt.s32.totalorder %v1864, 32
        %vm1897 = vmand %vm1895, %vm1896
        %1898 = vst.msk [vmem:[#allocation4] sm:$0x1] %vm1897, %v1893
        %v1899 = vcombine.high %v1884, %v1884
        %1900 = vrot.lane.b32.xlu0 %v1899, 32
        %v1901 = vpop.permute.xlu0 %1900
        %vm1903 = vcmp.ge.s32.totalorder %v1864, 32
        %vm1904 = vcmp.lt.s32.totalorder %v1864, 48
        %vm1905 = vmand %vm1903, %vm1904
        %1906 = vst.msk [vmem:[#allocation4] sm:$0x1] %vm1905, %v1901
        %v1907 = vcombine.high %v1891, %v1891
        %1908 = vrot.lane.b32.xlu0 %v1907, 48
        %v1909 = vpop.permute.xlu0 %1908
        %vm1911 = vcmp.ge.s32.totalorder %v1864, 48
        %vm1912 = vcmp.lt.s32.totalorder %v1864, 64
        %vm1913 = vmand %vm1911, %vm1912
        %1914 = vst.msk [vmem:[#allocation4] sm:$0x1] %vm1913, %v1909
        %v1915 = vcombine.high %v1862, %v1862
        %v1917 = vunpack.c.l.s4 1966171168
        %v1918 = vunpack.c.0.s8 %v1917
        %v1919 = vlaneseq
        %v1920 = vshrl.u32 %v1919, 7
        %v1921 = vsub.s32 %v1918, %v1920
        %v1922 = vrot.slane %v1915, %v1921
        %v1924 = vunpack.c.l.s4 1966171168
        %v1925 = vunpack.c.0.s8 %v1924
        %v1926 = vlaneseq
        %v1927 = vshrl.u32 %v1926, 7
        %v1928 = vsub.s32 %v1925, %v1927
        %v1929 = vrot.slane %v1922, %v1928
        %1930 = vrot.lane.b32.xlu0 %v1929, 64
        %v1931 = vpop.permute.xlu0 %1930
        %vm1933 = vcmp.ge.s32.totalorder %v1864, 64
        %vm1934 = vcmp.lt.s32.totalorder %v1864, 80
        %vm1935 = vmand %vm1933, %vm1934
        %1936 = vst.msk [vmem:[#allocation4] sm:$0x1] %vm1935, %v1931
        %v1937 = vcombine.high %v1922, %v1922
        %v1939 = vunpack.c.l.s4 1966171168
        %v1940 = vunpack.c.0.s8 %v1939
        %v1941 = vlaneseq
        %v1942 = vshrl.u32 %v1941, 7
        %v1943 = vsub.s32 %v1940, %v1942
        %v1944 = vrot.slane %v1937, %v1943
        %1945 = vrot.lane.b32.xlu0 %v1944, 80
        %v1946 = vpop.permute.xlu0 %1945
        %vm1948 = vcmp.ge.s32.totalorder %v1864, 80
        %vm1949 = vcmp.lt.s32.totalorder %v1864, 96
        %vm1950 = vmand %vm1948, %vm1949
        %1951 = vst.msk [vmem:[#allocation4] sm:$0x1] %vm1950, %v1946
        %v1952 = vcombine.high %v1929, %v1929
        %1953 = vrot.lane.b32.xlu0 %v1952, 96
        %v1954 = vpop.permute.xlu0 %1953
        %vm1956 = vcmp.ge.s32.totalorder %v1864, 96
        %vm1957 = vcmp.lt.s32.totalorder %v1864, 112
        %vm1958 = vmand %vm1956, %vm1957
        %1959 = vst.msk [vmem:[#allocation4] sm:$0x1] %vm1958, %v1954
        %v1960 = vcombine.high %v1944, %v1944
        %1961 = vrot.lane.b32.xlu0 %v1960, 112
        %v1962 = vpop.permute.xlu0 %1961
        %vm1964 = vcmp.ge.s32.totalorder %v1864, 112
        %vm1965 = vcmp.lt.s32.totalorder %v1864, 128
        %vm1966 = vmand %vm1964, %vm1965
        %1967 = vst.msk [vmem:[#allocation4] sm:$0x1] %vm1966, %v1962
        %1968 = vst.msk [vmem:[#allocation4 + $0x1] sm:$0x1] %vm1867, %v1863
        %v1971 = vunpack.c.l.s4 1966171168
        %v1972 = vunpack.c.0.s8 %v1971
        %v1973 = vlaneseq
        %v1974 = vshrl.u32 %v1973, 7
        %v1975 = vsub.s32 %v1972, %v1974
        %v1976 = vrot.slane %v1863, %v1975
        %v1977 = vcombine.high %v1976, %v1976
        %v1979 = vunpack.c.l.s4 1966171168
        %v1980 = vunpack.c.0.s8 %v1979
        %v1981 = vlaneseq
        %v1982 = vshrl.u32 %v1981, 7
        %v1983 = vsub.s32 %v1980, %v1982
        %v1984 = vrot.slane %v1976, %v1983
        %v1986 = vunpack.c.l.s4 1966171168
        %v1987 = vunpack.c.0.s8 %v1986
        %v1988 = vlaneseq
        %v1989 = vshrl.u32 %v1988, 7
        %v1990 = vsub.s32 %v1987, %v1989
        %v1991 = vrot.slane %v1977, %v1990
        %1992 = vrot.lane.b32.xlu0 %v1991, 16
        %v1993 = vpop.permute.xlu0 %1992
        %1995 = vst.msk [vmem:[#allocation4 + $0x1] sm:$0x1] %vm1897, %v1993
        %v1996 = vcombine.high %v1984, %v1984
        %1997 = vrot.lane.b32.xlu0 %v1996, 32
        %v1998 = vpop.permute.xlu0 %1997
        %2000 = vst.msk [vmem:[#allocation4 + $0x1] sm:$0x1] %vm1905, %v1998
        %v2001 = vcombine.high %v1991, %v1991
        %2002 = vrot.lane.b32.xlu0 %v2001, 48
        %v2003 = vpop.permute.xlu0 %2002
        %2005 = vst.msk [vmem:[#allocation4 + $0x1] sm:$0x1] %vm1913, %v2003
        %v2006 = vcombine.high %v1863, %v1863
        %v2008 = vunpack.c.l.s4 1966171168
        %v2009 = vunpack.c.0.s8 %v2008
        %v2010 = vlaneseq
        %v2011 = vshrl.u32 %v2010, 7
        %v2012 = vsub.s32 %v2009, %v2011
        %v2013 = vrot.slane %v2006, %v2012
        %v2015 = vunpack.c.l.s4 1966171168
        %v2016 = vunpack.c.0.s8 %v2015
        %v2017 = vlaneseq
        %v2018 = vshrl.u32 %v2017, 7
        %v2019 = vsub.s32 %v2016, %v2018
        %v2020 = vrot.slane %v2013, %v2019
        %2021 = vrot.lane.b32.xlu0 %v2020, 64
        %v2022 = vpop.permute.xlu0 %2021
        %2024 = vst.msk [vmem:[#allocation4 + $0x1] sm:$0x1] %vm1935, %v2022
        %v2025 = vcombine.high %v2013, %v2013
        %v2027 = vunpack.c.l.s4 1966171168
        %v2028 = vunpack.c.0.s8 %v2027
        %v2029 = vlaneseq
        %v2030 = vshrl.u32 %v2029, 7
        %v2031 = vsub.s32 %v2028, %v2030
        %v2032 = vrot.slane %v2025, %v2031
        %2033 = vrot.lane.b32.xlu0 %v2032, 80
        %v2034 = vpop.permute.xlu0 %2033
        %2036 = vst.msk [vmem:[#allocation4 + $0x1] sm:$0x1] %vm1950, %v2034
        %v2037 = vcombine.high %v2020, %v2020
        %2038 = vrot.lane.b32.xlu0 %v2037, 96
        %v2039 = vpop.permute.xlu0 %2038
        %2041 = vst.msk [vmem:[#allocation4 + $0x1] sm:$0x1] %vm1958, %v2039
        %v2042 = vcombine.high %v2032, %v2032
        %2043 = vrot.lane.b32.xlu0 %v2042, 112
        %v2044 = vpop.permute.xlu0 %2043
        %2046 = vst.msk [vmem:[#allocation4 + $0x1] sm:$0x1] %vm1966, %v2044
        %v2047 = vld [vmem:[#allocation4] sm:$0x3]
        %v2048 = vxor.u32 %v2047, 2147483648
        %v2049 = vmul.f32 %v2048, 1.442695
        %v2050 = vpow.pop %v2049
        %v2051 = vadd.f32 %v2050, 1.0
        %v2052 = vrcp.pop %v2051
        %v2053 = vmul.f32 1.0, %v2052
        %v2054 = vld [vmem:[%s207] sm:$0xff]
        %v2055 = vlaneseq
        %v2056 = vshrl.u32 %v2055, 7
        %v2057 = vsub.s32 0, %v2056
        %v2058 = vrot.slane %v269, %v2057
        %2060 = vbcast.lane.b32.xlu0 %v2058, 256
        %v2061 = vpop.permute.xlu0 %2060
        %v2064 = vunpack.c.l.s4 839922192
        %v2065 = vunpack.c.0.s8 %v2064
        %v2066 = vlaneseq
        %v2067 = vshrl.u32 %v2066, 7
        %v2068 = vsub.s32 %v2065, %v2067
        %v2069 = vrot.slane %v2061, %v2068
        %v2071 = vmul.f32 %v2054, %v2069
        %v2073 = vlaneseq
        %v2074 = vshrl.u32 %v2073, 7
        %v2075 = vsub.s32 0, %v2074
        %v2076 = vrot.slane %v2053, %v2075
        %v2077 = vlaneseq
        %v2078 = vshrl.u32 %v2077, 7
        %v2079 = vsub.s32 1, %v2078
        %v2080 = vrot.slane %v2053, %v2079
        %v2081 = vcombine.low %v2076, %v2080
        %v2083 = vmul.f32 %v2071, %v2081
        %2084 = vst [vmem:[%s240] sm:$0xff] %v2083
        %s2085 = sand.u32 %s120, 1
        %s2086 = scalar_lea.sflag [#allocation7], %s2085
        %s2087 = sand.u32 %s120, 1
        %s2088 = smul.addr %s2087, 8
        %s2089 = scalar_lea.vmem [#allocation12], %s2088
        // Predicated region
        $region49: #{tpu_custom_call.1} parent=35 // pred_check
          %p2090 = pneg %p130
        $region50: #{tpu_custom_call.1} parent=35 // pred_check_branch
          %2092 = sbr.rel (%p2090) target = $region52
        $region51: #{tpu_custom_call.1} parent=35 // pred_region
          %s2094 = ssub.s32 128, 128
          %2095 = vsyncadd %s2086, %s2094
          %s2096 = smul.addr %s23, 2
          %s2097 = smul.addr %s2096, 64
          %s2098 = scalar_lea.hbm %s4, %s2097
          %s2100 = sshll.u32 %s2089, 4
          %s2101 = int_to_ptr.vmem [resolvable:$true] %s2100
          %2103 = dma.vmem_to_hbm [thread:$0]  %s2101, 128, %s2098, %s2086
        $region52: #{tpu_custom_call.1} parent=35 // pred_fallthru
          _
      $region36: #{tpu_custom_call.1} parent=5 // pred_fallthru
        _
      %p2104 = scmp.le.s32.totalorder 2, %s18
      // Predicated region
      $region53: #{tpu_custom_call.1} parent=5 // pred_check
        %p2105 = pneg %p2104
      $region54: #{tpu_custom_call.1} parent=5 // pred_check_branch
        %2107 = sbr.rel (%p2105) target = $region56
      $region55: #{tpu_custom_call.1} parent=5 // pred_region
        %s2108 = ssub.s32 %s18, 2
        // Predicated region
        $region57: #{tpu_custom_call.1} parent=55 // pred_check
          %p2109 = pneg %p136
        $region58: #{tpu_custom_call.1} parent=55 // pred_check_branch
          %2111 = sbr.rel (%p2109) target = $region60
        $region59: #{tpu_custom_call.1} parent=55 // pred_region
          %s2112 = sand.u32 %s121, 1
          %s2113 = scalar_lea.sflag [#allocation7], %s2112
          %s2114 = sand.u32 %s121, 1
          %s2115 = smul.addr %s2114, 8
          %s2116 = scalar_lea.vmem [#allocation12], %s2115
          %2117 = dma.done %s2113, 128
        $region60: #{tpu_custom_call.1} parent=55 // pred_fallthru
          _
      $region56: #{tpu_custom_call.1} parent=5 // pred_fallthru
        _
    $region6: #{tpu_custom_call.1} parent=1 // loop_footer
      %s22 = sadd.s32 1, %s18
    $region7: #{tpu_custom_call.1} parent=1 // loop_footer_branch
      %17 = sbr.rel target = $region3
    $region8: #{tpu_custom_call.1} parent=1 // loop_exit
      _
    %2118 = vsyncpa [#allocation6], 1
    %s2119 = scalar_lea.sflag [#allocation6], 1
    %2120 = vsyncpa %s2119, 1
    %2121 = vsyncpa [#allocation10], 1
    %2122 = vsyncpa [#allocation7], 1
    %s2123 = scalar_lea.sflag [#allocation7], 1
    %2124 = vsyncpa %s2123, 1
    %2125 = vsyncpa [#allocation8], 1
    %s2126 = scalar_lea.sflag [#allocation8], 1
    %2127 = vsyncpa %s2126, 1

</llo_original>
